<compile_context>
chip_gen: v7x
topology: tpu7x:2x2x1
jax: 0.10.0
libtpu: 0.0.40
codegen_flags: <defaults>
</compile_context>

<pallas_src>
import math
import jax
import jax.numpy as jnp
from jax import lax
from jax.experimental import pallas as pl
from jax.experimental.pallas import tpu as pltpu

# Problem sizes (small, consistent with the module).
B = 2          # batch
S = 8          # sequence length
D = 32         # d_model
H = 4          # heads
DK = D // H    # d_k
DFF = 64       # d_ff
L = 2          # number of decoder layers ("for layer in self.layers")
EPS = 1e-6
BS = B * S     # batch folded into the sublane axis


def _ln_kernel(t):
    # LayerNormalization: mean / unbiased std (ddof=1) over last dim,
    # alpha=1, bias=0, eps added to std.  One-pass statistics.
    d = t.shape[-1]
    s1 = jnp.sum(t, axis=-1, keepdims=True)
    s2 = jnp.sum(t * t, axis=-1, keepdims=True)
    mean = s1 * (1.0 / d)
    var = jnp.maximum((s2 - d * mean * mean) * (1.0 / (d - 1)), 0.0)
    inv = pl.reciprocal(jnp.sqrt(var) + EPS)   # exact reciprocal (EUP path)
    return (t - mean) * inv


def decoder_kernel(x_ref, wqkv_ref, bqkv_ref, wo_ref, bo_ref,
                   w1_ref, b1_ref, w2_ref, b2_ref,
                   o_ref, attn_acc):
    x = x_ref[...]                               # (BS, D)
    scale = 1.0 / math.sqrt(DK)

    for l in range(L):                           # static layer loop (unrolled)
        # ---- residual connection 0: self-attention on LN(x) ----
        n1 = _ln_kernel(x)
        qkv = jnp.dot(n1, wqkv_ref[l],
                      preferred_element_type=jnp.float32) + bqkv_ref[l]   # (BS, 3D)
        q = qkv[:, 0:D] * scale                  # fold softmax scale into q once
        k = qkv[:, D:2 * D]
        v = qkv[:, 2 * D:3 * D]

        for b in range(B):                       # static loops, B and H are tiny
            r0, r1 = b * S, (b + 1) * S          # sublane-aligned batch slice
            for h in range(H):
                c0, c1 = h * DK, (h + 1) * DK
                qh = q[r0:r1, c0:c1]             # (S, DK)
                kh = k[r0:r1, c0:c1]
                vh = v[r0:r1, c0:c1]
                # q @ k^T via contraction of the last dims (no explicit transpose)
                s = lax.dot_general(qh, kh, (((1,), (1,)), ((), ())),
                                    preferred_element_type=jnp.float32)
                m = jnp.max(s, axis=-1, keepdims=True)
                e = jnp.exp(s - m)
                p = e * pl.reciprocal(jnp.sum(e, axis=-1, keepdims=True))
                # write head output directly at its (sublane, lane) offset
                attn_acc[r0:r1, c0:c1] = jnp.dot(p, vh,
                                                 preferred_element_type=jnp.float32)

        proj = jnp.dot(attn_acc[...], wo_ref[l],
                       preferred_element_type=jnp.float32) + bo_ref[l]
        x = x + proj                             # dropout = identity (eval mode)

        # ---- residual connection 1: FFN on LN(x) ----
        n2 = _ln_kernel(x)
        h1 = jnp.maximum(
            jnp.dot(n2, w1_ref[l], preferred_element_type=jnp.float32) + b1_ref[l],
            0.0)
        x = x + jnp.dot(h1, w2_ref[l],
                        preferred_element_type=jnp.float32) + b2_ref[l]

    # ---- Decoder.norm: final LayerNormalization ----
    o_ref[...] = _ln_kernel(x)


@jax.jit
def decoder_forward(x, params):
    """x: (B, S, D); params: stacked per-layer weights (see init_params)."""
    wqkv, bqkv, wo, bo, w1, b1, w2, b2 = params
    x2 = x.reshape(BS, D)                        # fold batch into sublanes

    vmem = pl.BlockSpec(memory_space=pltpu.MemorySpace.VMEM)
    out = pl.pallas_call(
        decoder_kernel,
        out_shape=jax.ShapeDtypeStruct((BS, D), jnp.float32),
        in_specs=[vmem] * 9,
        out_specs=vmem,
        scratch_shapes=[pltpu.VMEM((BS, D), jnp.float32)],   # attention accumulator
    )(x2, wqkv, bqkv, wo, bo, w1, b1, w2, b2)
    return out.reshape(B, S, D)


# ---------------- pure-JAX reference (mirrors the PyTorch forward) ----------------

def _ln_ref(t):
    mean = jnp.mean(t, axis=-1, keepdims=True)
    var = jnp.sum((t - mean) ** 2, axis=-1, keepdims=True) / (t.shape[-1] - 1)
    return (t - mean) / (jnp.sqrt(var) + EPS)


def reference(x, params):
    wqkv, bqkv, wo, bo, w1, b1, w2, b2 = params
    for l in range(L):
        n1 = _ln_ref(x)
        qkv = n1 @ wqkv[l] + bqkv[l]
        q, k, v = qkv[..., :D], qkv[..., D:2 * D], qkv[..., 2 * D:]
        qh = q.reshape(B, S, H, DK).transpose(0, 2, 1, 3)
        kh = k.reshape(B, S, H, DK).transpose(0, 2, 1, 3)
        vh = v.reshape(B, S, H, DK).transpose(0, 2, 1, 3)
        sc = jnp.einsum("bhqd,bhkd->bhqk", qh, kh) / math.sqrt(DK)
        p = jax.nn.softmax(sc, axis=-1)
        a = jnp.einsum("bhqk,bhkd->bhqd", p, vh).transpose(0, 2, 1, 3).reshape(B, S, D)
        x = x + (a @ wo[l] + bo[l])
        n2 = _ln_ref(x)
        x = x + (jnp.maximum(n2 @ w1[l] + b1[l], 0.0) @ w2[l] + b2[l])
    return _ln_ref(x)


def init_params(key):
    keys = jax.random.split(key, L * 12)

    def lin(kw, kb, din, dout):
        w = jax.random.normal(kw, (din, dout), jnp.float32) * (1.0 / math.sqrt(din))
        b = jax.random.normal(kb, (1, dout), jnp.float32) * 0.02
        return w, b

    wqkv, bqkv, wo, bo, w1, b1, w2, b2 = [], [], [], [], [], [], [], []
    for l in range(L):
        ks = keys[l * 12:(l + 1) * 12]
        wq, bq = lin(ks[0], ks[1], D, D)
        wk, bk = lin(ks[2], ks[3], D, D)
        wv, bv = lin(ks[4], ks[5], D, D)
        _wo, _bo = lin(ks[6], ks[7], D, D)
        _w1, _b1 = lin(ks[8], ks[9], D, DFF)
        _w2, _b2 = lin(ks[10], ks[11], DFF, D)
        wqkv.append(jnp.concatenate([wq, wk, wv], axis=1))   # fused (D, 3D)
        bqkv.append(jnp.concatenate([bq, bk, bv], axis=1))   # fused (1, 3D)
        wo.append(_wo); bo.append(_bo)
        w1.append(_w1); b1.append(_b1)
        w2.append(_w2); b2.append(_b2)

    stack = lambda xs: jnp.stack(xs, axis=0)
    return tuple(map(stack, (wqkv, bqkv, wo, bo, w1, b1, w2, b2)))


if __name__ == "__main__":
    key = jax.random.PRNGKey(0)
    kx, kp = jax.random.split(key)
    x = jax.random.normal(kx, (B, S, D), jnp.float32)
    params = init_params(kp)

    out = jax.block_until_ready(decoder_forward(x, params))
    ref = reference(x, params)

    assert out.shape == (B, S, D)
    assert jnp.allclose(out, ref, atol=1e-4, rtol=1e-4), (
        "mismatch vs reference, max abs err "
        f"{float(jnp.max(jnp.abs(out - ref)))}")
    print("KERNEL_OK")
</pallas_src>

<mosaic_0001>
module attributes {stable_mosaic.version = 11 : i64} {
  func.func @decoder_kernel(%arg0: memref<16x32xf32, #tpu.memory_space<vmem>>, %arg1: memref<2x32x96xf32, #tpu.memory_space<vmem>>, %arg2: memref<2x1x96xf32, #tpu.memory_space<vmem>>, %arg3: memref<2x32x32xf32, #tpu.memory_space<vmem>>, %arg4: memref<2x1x32xf32, #tpu.memory_space<vmem>>, %arg5: memref<2x32x64xf32, #tpu.memory_space<vmem>>, %arg6: memref<2x1x64xf32, #tpu.memory_space<vmem>>, %arg7: memref<2x64x32xf32, #tpu.memory_space<vmem>>, %arg8: memref<2x1x32xf32, #tpu.memory_space<vmem>>, %arg9: memref<16x32xf32, #tpu.memory_space<vmem>>, %arg10: memref<16x32xf32, #tpu.memory_space<vmem>>) attributes {dimension_semantics = [], scalar_prefetch = 0 : i64, scratch_operands = 1 : i64, tpu.core_type = #tpu.core_type<tc>} {
    %c0 = arith.constant 0 : index
    %c0_0 = arith.constant 0 : index
    %0 = vector.load %arg0[%c0, %c0_0] : memref<16x32xf32, #tpu.memory_space<vmem>>, vector<16x32xf32>
    %cst = arith.constant dense<0.000000e+00> : vector<16xf32>
    %1 = vector.multi_reduction <add>, %0, %cst [1] : vector<16x32xf32> to vector<16xf32>
    %2 = vector.shape_cast %1 : vector<16xf32> to vector<16x1xf32>
    %3 = arith.mulf %0, %0 : vector<16x32xf32>
    %cst_1 = arith.constant dense<0.000000e+00> : vector<16xf32>
    %4 = vector.multi_reduction <add>, %3, %cst_1 [1] : vector<16x32xf32> to vector<16xf32>
    %5 = vector.shape_cast %4 : vector<16xf32> to vector<16x1xf32>
    %cst_2 = arith.constant 3.125000e-02 : f32
    %6 = vector.broadcast %cst_2 : f32 to vector<16x1xf32>
    %7 = arith.mulf %2, %6 : vector<16x1xf32>
    %cst_3 = arith.constant 3.200000e+01 : f32
    %8 = vector.broadcast %cst_3 : f32 to vector<16x1xf32>
    %9 = arith.mulf %8, %7 : vector<16x1xf32>
    %10 = arith.mulf %9, %7 : vector<16x1xf32>
    %11 = arith.subf %5, %10 : vector<16x1xf32>
    %cst_4 = arith.constant 0.0322580636 : f32
    %12 = vector.broadcast %cst_4 : f32 to vector<16x1xf32>
    %13 = arith.mulf %11, %12 : vector<16x1xf32>
    %cst_5 = arith.constant 0.000000e+00 : f32
    %14 = vector.broadcast %cst_5 : f32 to vector<16x1xf32>
    %15 = arith.maximumf %13, %14 : vector<16x1xf32>
    %16 = math.sqrt %15 : vector<16x1xf32>
    %cst_6 = arith.constant 9.99999997E-7 : f32
    %17 = vector.broadcast %cst_6 : f32 to vector<16x1xf32>
    %18 = arith.addf %16, %17 : vector<16x1xf32>
    %19 = tpu.reciprocal %18 : vector<16x1xf32> -> vector<16x1xf32>
    %20 = vector.broadcast %7 : vector<16x1xf32> to vector<16x32xf32>
    %21 = arith.subf %0, %20 : vector<16x32xf32>
    %22 = vector.broadcast %19 : vector<16x1xf32> to vector<16x32xf32>
    %23 = arith.mulf %21, %22 : vector<16x32xf32>
    %c0_7 = arith.constant 0 : index
    %c0_8 = arith.constant 0 : index
    %c0_9 = arith.constant 0 : index
    %24 = vector.load %arg1[%c0_7, %c0_8, %c0_9] : memref<2x32x96xf32, #tpu.memory_space<vmem>>, vector<1x32x96xf32>
    %25 = vector.shape_cast %24 : vector<1x32x96xf32> to vector<32x96xf32>
    %cst_10 = arith.constant dense<0.000000e+00> : vector<16x96xf32>
    %26 = tpu.matmul %23, %25, %cst_10 {dimension_numbers = #tpu.dot_dimension_numbers<[1], [0], [0], [1], [0, 0, 1, 1], [], []>} : vector<16x32xf32>, vector<32x96xf32>, vector<16x96xf32> -> vector<16x96xf32>
    %c0_11 = arith.constant 0 : index
    %c0_12 = arith.constant 0 : index
    %c0_13 = arith.constant 0 : index
    %27 = vector.load %arg2[%c0_11, %c0_12, %c0_13] : memref<2x1x96xf32, #tpu.memory_space<vmem>>, vector<1x1x96xf32>
    %28 = vector.shape_cast %27 : vector<1x1x96xf32> to vector<1x96xf32>
    %29 = vector.broadcast %28 : vector<1x96xf32> to vector<16x96xf32>
    %30 = arith.addf %26, %29 : vector<16x96xf32>
    %31 = vector.extract_strided_slice %30 {offsets = [0, 0], sizes = [16, 32], strides = [1, 1]} : vector<16x96xf32> to vector<16x32xf32>
    %cst_14 = arith.constant 0.353553385 : f32
    %32 = vector.broadcast %cst_14 : f32 to vector<16x32xf32>
    %33 = arith.mulf %31, %32 : vector<16x32xf32>
    %34 = vector.extract_strided_slice %30 {offsets = [0, 32], sizes = [16, 32], strides = [1, 1]} : vector<16x96xf32> to vector<16x32xf32>
    %35 = vector.extract_strided_slice %30 {offsets = [0, 64], sizes = [16, 32], strides = [1, 1]} : vector<16x96xf32> to vector<16x32xf32>
    %36 = vector.extract_strided_slice %33 {offsets = [0, 0], sizes = [8, 8], strides = [1, 1]} : vector<16x32xf32> to vector<8x8xf32>
    %37 = vector.extract_strided_slice %34 {offsets = [0, 0], sizes = [8, 8], strides = [1, 1]} : vector<16x32xf32> to vector<8x8xf32>
    %38 = vector.extract_strided_slice %35 {offsets = [0, 0], sizes = [8, 8], strides = [1, 1]} : vector<16x32xf32> to vector<8x8xf32>
    %cst_15 = arith.constant dense<0.000000e+00> : vector<8x8xf32>
    %39 = tpu.matmul %36, %37, %cst_15 {dimension_numbers = #tpu.dot_dimension_numbers<[1], [1], [0], [0], [0, 0, 1, 0], [], []>} : vector<8x8xf32>, vector<8x8xf32>, vector<8x8xf32> -> vector<8x8xf32>
    %cst_16 = arith.constant dense<0xFF800000> : vector<8xf32>
    %40 = vector.multi_reduction <maximumf>, %39, %cst_16 [1] : vector<8x8xf32> to vector<8xf32>
    %41 = vector.shape_cast %40 : vector<8xf32> to vector<8x1xf32>
    %42 = vector.broadcast %41 : vector<8x1xf32> to vector<8x8xf32>
    %43 = arith.subf %39, %42 : vector<8x8xf32>
    %44 = math.exp %43 : vector<8x8xf32>
    %cst_17 = arith.constant dense<0.000000e+00> : vector<8xf32>
    %45 = vector.multi_reduction <add>, %44, %cst_17 [1] : vector<8x8xf32> to vector<8xf32>
    %46 = vector.shape_cast %45 : vector<8xf32> to vector<8x1xf32>
    %47 = tpu.reciprocal %46 : vector<8x1xf32> -> vector<8x1xf32>
    %48 = vector.broadcast %47 : vector<8x1xf32> to vector<8x8xf32>
    %49 = arith.mulf %44, %48 : vector<8x8xf32>
    %cst_18 = arith.constant dense<0.000000e+00> : vector<8x8xf32>
    %50 = tpu.matmul %49, %38, %cst_18 {dimension_numbers = #tpu.dot_dimension_numbers<[1], [0], [0], [1], [0, 0, 1, 1], [], []>} : vector<8x8xf32>, vector<8x8xf32>, vector<8x8xf32> -> vector<8x8xf32>
    %c0_19 = arith.constant 0 : index
    %c0_20 = arith.constant 0 : index
    %51 = vector.load %arg10[%c0_19, %c0_20] : memref<16x32xf32, #tpu.memory_space<vmem>>, vector<8x8xf32>
    tpu.vector_store %arg10[%c0_19, %c0_20], %50 {strides = array<i32>} : memref<16x32xf32, #tpu.memory_space<vmem>>, vector<8x8xf32>,
    %52 = vector.extract_strided_slice %33 {offsets = [0, 8], sizes = [8, 8], strides = [1, 1]} : vector<16x32xf32> to vector<8x8xf32>
    %53 = vector.extract_strided_slice %34 {offsets = [0, 8], sizes = [8, 8], strides = [1, 1]} : vector<16x32xf32> to vector<8x8xf32>
    %54 = vector.extract_strided_slice %35 {offsets = [0, 8], sizes = [8, 8], strides = [1, 1]} : vector<16x32xf32> to vector<8x8xf32>
    %cst_21 = arith.constant dense<0.000000e+00> : vector<8x8xf32>
    %55 = tpu.matmul %52, %53, %cst_21 {dimension_numbers = #tpu.dot_dimension_numbers<[1], [1], [0], [0], [0, 0, 1, 0], [], []>} : vector<8x8xf32>, vector<8x8xf32>, vector<8x8xf32> -> vector<8x8xf32>
    %cst_22 = arith.constant dense<0xFF800000> : vector<8xf32>
    %56 = vector.multi_reduction <maximumf>, %55, %cst_22 [1] : vector<8x8xf32> to vector<8xf32>
    %57 = vector.shape_cast %56 : vector<8xf32> to vector<8x1xf32>
    %58 = vector.broadcast %57 : vector<8x1xf32> to vector<8x8xf32>
    %59 = arith.subf %55, %58 : vector<8x8xf32>
    %60 = math.exp %59 : vector<8x8xf32>
    %cst_23 = arith.constant dense<0.000000e+00> : vector<8xf32>
    %61 = vector.multi_reduction <add>, %60, %cst_23 [1] : vector<8x8xf32> to vector<8xf32>
    %62 = vector.shape_cast %61 : vector<8xf32> to vector<8x1xf32>
    %63 = tpu.reciprocal %62 : vector<8x1xf32> -> vector<8x1xf32>
    %64 = vector.broadcast %63 : vector<8x1xf32> to vector<8x8xf32>
    %65 = arith.mulf %60, %64 : vector<8x8xf32>
    %cst_24 = arith.constant dense<0.000000e+00> : vector<8x8xf32>
    %66 = tpu.matmul %65, %54, %cst_24 {dimension_numbers = #tpu.dot_dimension_numbers<[1], [0], [0], [1], [0, 0, 1, 1], [], []>} : vector<8x8xf32>, vector<8x8xf32>, vector<8x8xf32> -> vector<8x8xf32>
    %c0_25 = arith.constant 0 : index
    %c8 = arith.constant 8 : index
    %67 = vector.load %arg10[%c0_25, %c8] : memref<16x32xf32, #tpu.memory_space<vmem>>, vector<8x8xf32>
    tpu.vector_store %arg10[%c0_25, %c8], %66 {strides = array<i32>} : memref<16x32xf32, #tpu.memory_space<vmem>>, vector<8x8xf32>,
    %68 = vector.extract_strided_slice %33 {offsets = [0, 16], sizes = [8, 8], strides = [1, 1]} : vector<16x32xf32> to vector<8x8xf32>
    %69 = vector.extract_strided_slice %34 {offsets = [0, 16], sizes = [8, 8], strides = [1, 1]} : vector<16x32xf32> to vector<8x8xf32>
    %70 = vector.extract_strided_slice %35 {offsets = [0, 16], sizes = [8, 8], strides = [1, 1]} : vector<16x32xf32> to vector<8x8xf32>
    %cst_26 = arith.constant dense<0.000000e+00> : vector<8x8xf32>
    %71 = tpu.matmul %68, %69, %cst_26 {dimension_numbers = #tpu.dot_dimension_numbers<[1], [1], [0], [0], [0, 0, 1, 0], [], []>} : vector<8x8xf32>, vector<8x8xf32>, vector<8x8xf32> -> vector<8x8xf32>
    %cst_27 = arith.constant dense<0xFF800000> : vector<8xf32>
    %72 = vector.multi_reduction <maximumf>, %71, %cst_27 [1] : vector<8x8xf32> to vector<8xf32>
    %73 = vector.shape_cast %72 : vector<8xf32> to vector<8x1xf32>
    %74 = vector.broadcast %73 : vector<8x1xf32> to vector<8x8xf32>
    %75 = arith.subf %71, %74 : vector<8x8xf32>
    %76 = math.exp %75 : vector<8x8xf32>
    %cst_28 = arith.constant dense<0.000000e+00> : vector<8xf32>
    %77 = vector.multi_reduction <add>, %76, %cst_28 [1] : vector<8x8xf32> to vector<8xf32>
    %78 = vector.shape_cast %77 : vector<8xf32> to vector<8x1xf32>
    %79 = tpu.reciprocal %78 : vector<8x1xf32> -> vector<8x1xf32>
    %80 = vector.broadcast %79 : vector<8x1xf32> to vector<8x8xf32>
    %81 = arith.mulf %76, %80 : vector<8x8xf32>
    %cst_29 = arith.constant dense<0.000000e+00> : vector<8x8xf32>
    %82 = tpu.matmul %81, %70, %cst_29 {dimension_numbers = #tpu.dot_dimension_numbers<[1], [0], [0], [1], [0, 0, 1, 1], [], []>} : vector<8x8xf32>, vector<8x8xf32>, vector<8x8xf32> -> vector<8x8xf32>
    %c0_30 = arith.constant 0 : index
    %c16 = arith.constant 16 : index
    %83 = vector.load %arg10[%c0_30, %c16] : memref<16x32xf32, #tpu.memory_space<vmem>>, vector<8x8xf32>
    tpu.vector_store %arg10[%c0_30, %c16], %82 {strides = array<i32>} : memref<16x32xf32, #tpu.memory_space<vmem>>, vector<8x8xf32>,
    %84 = vector.extract_strided_slice %33 {offsets = [0, 24], sizes = [8, 8], strides = [1, 1]} : vector<16x32xf32> to vector<8x8xf32>
    %85 = vector.extract_strided_slice %34 {offsets = [0, 24], sizes = [8, 8], strides = [1, 1]} : vector<16x32xf32> to vector<8x8xf32>
    %86 = vector.extract_strided_slice %35 {offsets = [0, 24], sizes = [8, 8], strides = [1, 1]} : vector<16x32xf32> to vector<8x8xf32>
    %cst_31 = arith.constant dense<0.000000e+00> : vector<8x8xf32>
    %87 = tpu.matmul %84, %85, %cst_31 {dimension_numbers = #tpu.dot_dimension_numbers<[1], [1], [0], [0], [0, 0, 1, 0], [], []>} : vector<8x8xf32>, vector<8x8xf32>, vector<8x8xf32> -> vector<8x8xf32>
    %cst_32 = arith.constant dense<0xFF800000> : vector<8xf32>
    %88 = vector.multi_reduction <maximumf>, %87, %cst_32 [1] : vector<8x8xf32> to vector<8xf32>
    %89 = vector.shape_cast %88 : vector<8xf32> to vector<8x1xf32>
    %90 = vector.broadcast %89 : vector<8x1xf32> to vector<8x8xf32>
    %91 = arith.subf %87, %90 : vector<8x8xf32>
    %92 = math.exp %91 : vector<8x8xf32>
    %cst_33 = arith.constant dense<0.000000e+00> : vector<8xf32>
    %93 = vector.multi_reduction <add>, %92, %cst_33 [1] : vector<8x8xf32> to vector<8xf32>
    %94 = vector.shape_cast %93 : vector<8xf32> to vector<8x1xf32>
    %95 = tpu.reciprocal %94 : vector<8x1xf32> -> vector<8x1xf32>
    %96 = vector.broadcast %95 : vector<8x1xf32> to vector<8x8xf32>
    %97 = arith.mulf %92, %96 : vector<8x8xf32>
    %cst_34 = arith.constant dense<0.000000e+00> : vector<8x8xf32>
    %98 = tpu.matmul %97, %86, %cst_34 {dimension_numbers = #tpu.dot_dimension_numbers<[1], [0], [0], [1], [0, 0, 1, 1], [], []>} : vector<8x8xf32>, vector<8x8xf32>, vector<8x8xf32> -> vector<8x8xf32>
    %c0_35 = arith.constant 0 : index
    %c24 = arith.constant 24 : index
    %99 = vector.load %arg10[%c0_35, %c24] : memref<16x32xf32, #tpu.memory_space<vmem>>, vector<8x8xf32>
    tpu.vector_store %arg10[%c0_35, %c24], %98 {strides = array<i32>} : memref<16x32xf32, #tpu.memory_space<vmem>>, vector<8x8xf32>,
    %100 = vector.extract_strided_slice %33 {offsets = [8, 0], sizes = [8, 8], strides = [1, 1]} : vector<16x32xf32> to vector<8x8xf32>
    %101 = vector.extract_strided_slice %34 {offsets = [8, 0], sizes = [8, 8], strides = [1, 1]} : vector<16x32xf32> to vector<8x8xf32>
    %102 = vector.extract_strided_slice %35 {offsets = [8, 0], sizes = [8, 8], strides = [1, 1]} : vector<16x32xf32> to vector<8x8xf32>
    %cst_36 = arith.constant dense<0.000000e+00> : vector<8x8xf32>
    %103 = tpu.matmul %100, %101, %cst_36 {dimension_numbers = #tpu.dot_dimension_numbers<[1], [1], [0], [0], [0, 0, 1, 0], [], []>} : vector<8x8xf32>, vector<8x8xf32>, vector<8x8xf32> -> vector<8x8xf32>
    %cst_37 = arith.constant dense<0xFF800000> : vector<8xf32>
    %104 = vector.multi_reduction <maximumf>, %103, %cst_37 [1] : vector<8x8xf32> to vector<8xf32>
    %105 = vector.shape_cast %104 : vector<8xf32> to vector<8x1xf32>
    %106 = vector.broadcast %105 : vector<8x1xf32> to vector<8x8xf32>
    %107 = arith.subf %103, %106 : vector<8x8xf32>
    %108 = math.exp %107 : vector<8x8xf32>
    %cst_38 = arith.constant dense<0.000000e+00> : vector<8xf32>
    %109 = vector.multi_reduction <add>, %108, %cst_38 [1] : vector<8x8xf32> to vector<8xf32>
    %110 = vector.shape_cast %109 : vector<8xf32> to vector<8x1xf32>
    %111 = tpu.reciprocal %110 : vector<8x1xf32> -> vector<8x1xf32>
    %112 = vector.broadcast %111 : vector<8x1xf32> to vector<8x8xf32>
    %113 = arith.mulf %108, %112 : vector<8x8xf32>
    %cst_39 = arith.constant dense<0.000000e+00> : vector<8x8xf32>
    %114 = tpu.matmul %113, %102, %cst_39 {dimension_numbers = #tpu.dot_dimension_numbers<[1], [0], [0], [1], [0, 0, 1, 1], [], []>} : vector<8x8xf32>, vector<8x8xf32>, vector<8x8xf32> -> vector<8x8xf32>
    %c8_40 = arith.constant 8 : index
    %c0_41 = arith.constant 0 : index
    %115 = vector.load %arg10[%c8_40, %c0_41] : memref<16x32xf32, #tpu.memory_space<vmem>>, vector<8x8xf32>
    tpu.vector_store %arg10[%c8_40, %c0_41], %114 {strides = array<i32>} : memref<16x32xf32, #tpu.memory_space<vmem>>, vector<8x8xf32>,
    %116 = vector.extract_strided_slice %33 {offsets = [8, 8], sizes = [8, 8], strides = [1, 1]} : vector<16x32xf32> to vector<8x8xf32>
    %117 = vector.extract_strided_slice %34 {offsets = [8, 8], sizes = [8, 8], strides = [1, 1]} : vector<16x32xf32> to vector<8x8xf32>
    %118 = vector.extract_strided_slice %35 {offsets = [8, 8], sizes = [8, 8], strides = [1, 1]} : vector<16x32xf32> to vector<8x8xf32>
    %cst_42 = arith.constant dense<0.000000e+00> : vector<8x8xf32>
    %119 = tpu.matmul %116, %117, %cst_42 {dimension_numbers = #tpu.dot_dimension_numbers<[1], [1], [0], [0], [0, 0, 1, 0], [], []>} : vector<8x8xf32>, vector<8x8xf32>, vector<8x8xf32> -> vector<8x8xf32>
    %cst_43 = arith.constant dense<0xFF800000> : vector<8xf32>
    %120 = vector.multi_reduction <maximumf>, %119, %cst_43 [1] : vector<8x8xf32> to vector<8xf32>
    %121 = vector.shape_cast %120 : vector<8xf32> to vector<8x1xf32>
    %122 = vector.broadcast %121 : vector<8x1xf32> to vector<8x8xf32>
    %123 = arith.subf %119, %122 : vector<8x8xf32>
    %124 = math.exp %123 : vector<8x8xf32>
    %cst_44 = arith.constant dense<0.000000e+00> : vector<8xf32>
    %125 = vector.multi_reduction <add>, %124, %cst_44 [1] : vector<8x8xf32> to vector<8xf32>
    %126 = vector.shape_cast %125 : vector<8xf32> to vector<8x1xf32>
    %127 = tpu.reciprocal %126 : vector<8x1xf32> -> vector<8x1xf32>
    %128 = vector.broadcast %127 : vector<8x1xf32> to vector<8x8xf32>
    %129 = arith.mulf %124, %128 : vector<8x8xf32>
    %cst_45 = arith.constant dense<0.000000e+00> : vector<8x8xf32>
    %130 = tpu.matmul %129, %118, %cst_45 {dimension_numbers = #tpu.dot_dimension_numbers<[1], [0], [0], [1], [0, 0, 1, 1], [], []>} : vector<8x8xf32>, vector<8x8xf32>, vector<8x8xf32> -> vector<8x8xf32>
    %c8_46 = arith.constant 8 : index
    %c8_47 = arith.constant 8 : index
    %131 = vector.load %arg10[%c8_46, %c8_47] : memref<16x32xf32, #tpu.memory_space<vmem>>, vector<8x8xf32>
    tpu.vector_store %arg10[%c8_46, %c8_47], %130 {strides = array<i32>} : memref<16x32xf32, #tpu.memory_space<vmem>>, vector<8x8xf32>,
    %132 = vector.extract_strided_slice %33 {offsets = [8, 16], sizes = [8, 8], strides = [1, 1]} : vector<16x32xf32> to vector<8x8xf32>
    %133 = vector.extract_strided_slice %34 {offsets = [8, 16], sizes = [8, 8], strides = [1, 1]} : vector<16x32xf32> to vector<8x8xf32>
    %134 = vector.extract_strided_slice %35 {offsets = [8, 16], sizes = [8, 8], strides = [1, 1]} : vector<16x32xf32> to vector<8x8xf32>
    %cst_48 = arith.constant dense<0.000000e+00> : vector<8x8xf32>
    %135 = tpu.matmul %132, %133, %cst_48 {dimension_numbers = #tpu.dot_dimension_numbers<[1], [1], [0], [0], [0, 0, 1, 0], [], []>} : vector<8x8xf32>, vector<8x8xf32>, vector<8x8xf32> -> vector<8x8xf32>
    %cst_49 = arith.constant dense<0xFF800000> : vector<8xf32>
    %136 = vector.multi_reduction <maximumf>, %135, %cst_49 [1] : vector<8x8xf32> to vector<8xf32>
    %137 = vector.shape_cast %136 : vector<8xf32> to vector<8x1xf32>
    %138 = vector.broadcast %137 : vector<8x1xf32> to vector<8x8xf32>
    %139 = arith.subf %135, %138 : vector<8x8xf32>
    %140 = math.exp %139 : vector<8x8xf32>
    %cst_50 = arith.constant dense<0.000000e+00> : vector<8xf32>
    %141 = vector.multi_reduction <add>, %140, %cst_50 [1] : vector<8x8xf32> to vector<8xf32>
    %142 = vector.shape_cast %141 : vector<8xf32> to vector<8x1xf32>
    %143 = tpu.reciprocal %142 : vector<8x1xf32> -> vector<8x1xf32>
    %144 = vector.broadcast %143 : vector<8x1xf32> to vector<8x8xf32>
    %145 = arith.mulf %140, %144 : vector<8x8xf32>
    %cst_51 = arith.constant dense<0.000000e+00> : vector<8x8xf32>
    %146 = tpu.matmul %145, %134, %cst_51 {dimension_numbers = #tpu.dot_dimension_numbers<[1], [0], [0], [1], [0, 0, 1, 1], [], []>} : vector<8x8xf32>, vector<8x8xf32>, vector<8x8xf32> -> vector<8x8xf32>
    %c8_52 = arith.constant 8 : index
    %c16_53 = arith.constant 16 : index
    %147 = vector.load %arg10[%c8_52, %c16_53] : memref<16x32xf32, #tpu.memory_space<vmem>>, vector<8x8xf32>
    tpu.vector_store %arg10[%c8_52, %c16_53], %146 {strides = array<i32>} : memref<16x32xf32, #tpu.memory_space<vmem>>, vector<8x8xf32>,
    %148 = vector.extract_strided_slice %33 {offsets = [8, 24], sizes = [8, 8], strides = [1, 1]} : vector<16x32xf32> to vector<8x8xf32>
    %149 = vector.extract_strided_slice %34 {offsets = [8, 24], sizes = [8, 8], strides = [1, 1]} : vector<16x32xf32> to vector<8x8xf32>
    %150 = vector.extract_strided_slice %35 {offsets = [8, 24], sizes = [8, 8], strides = [1, 1]} : vector<16x32xf32> to vector<8x8xf32>
    %cst_54 = arith.constant dense<0.000000e+00> : vector<8x8xf32>
    %151 = tpu.matmul %148, %149, %cst_54 {dimension_numbers = #tpu.dot_dimension_numbers<[1], [1], [0], [0], [0, 0, 1, 0], [], []>} : vector<8x8xf32>, vector<8x8xf32>, vector<8x8xf32> -> vector<8x8xf32>
    %cst_55 = arith.constant dense<0xFF800000> : vector<8xf32>
    %152 = vector.multi_reduction <maximumf>, %151, %cst_55 [1] : vector<8x8xf32> to vector<8xf32>
    %153 = vector.shape_cast %152 : vector<8xf32> to vector<8x1xf32>
    %154 = vector.broadcast %153 : vector<8x1xf32> to vector<8x8xf32>
    %155 = arith.subf %151, %154 : vector<8x8xf32>
    %156 = math.exp %155 : vector<8x8xf32>
    %cst_56 = arith.constant dense<0.000000e+00> : vector<8xf32>
    %157 = vector.multi_reduction <add>, %156, %cst_56 [1] : vector<8x8xf32> to vector<8xf32>
    %158 = vector.shape_cast %157 : vector<8xf32> to vector<8x1xf32>
    %159 = tpu.reciprocal %158 : vector<8x1xf32> -> vector<8x1xf32>
    %160 = vector.broadcast %159 : vector<8x1xf32> to vector<8x8xf32>
    %161 = arith.mulf %156, %160 : vector<8x8xf32>
    %cst_57 = arith.constant dense<0.000000e+00> : vector<8x8xf32>
    %162 = tpu.matmul %161, %150, %cst_57 {dimension_numbers = #tpu.dot_dimension_numbers<[1], [0], [0], [1], [0, 0, 1, 1], [], []>} : vector<8x8xf32>, vector<8x8xf32>, vector<8x8xf32> -> vector<8x8xf32>
    %c8_58 = arith.constant 8 : index
    %c24_59 = arith.constant 24 : index
    %163 = vector.load %arg10[%c8_58, %c24_59] : memref<16x32xf32, #tpu.memory_space<vmem>>, vector<8x8xf32>
    tpu.vector_store %arg10[%c8_58, %c24_59], %162 {strides = array<i32>} : memref<16x32xf32, #tpu.memory_space<vmem>>, vector<8x8xf32>,
    %c0_60 = arith.constant 0 : index
    %c0_61 = arith.constant 0 : index
    %164 = vector.load %arg10[%c0_60, %c0_61] : memref<16x32xf32, #tpu.memory_space<vmem>>, vector<16x32xf32>
    %c0_62 = arith.constant 0 : index
    %c0_63 = arith.constant 0 : index
    %c0_64 = arith.constant 0 : index
    %165 = vector.load %arg3[%c0_62, %c0_63, %c0_64] : memref<2x32x32xf32, #tpu.memory_space<vmem>>, vector<1x32x32xf32>
    %166 = vector.shape_cast %165 : vector<1x32x32xf32> to vector<32x32xf32>
    %cst_65 = arith.constant dense<0.000000e+00> : vector<16x32xf32>
    %167 = tpu.matmul %164, %166, %cst_65 {dimension_numbers = #tpu.dot_dimension_numbers<[1], [0], [0], [1], [0, 0, 1, 1], [], []>} : vector<16x32xf32>, vector<32x32xf32>, vector<16x32xf32> -> vector<16x32xf32>
    %c0_66 = arith.constant 0 : index
    %c0_67 = arith.constant 0 : index
    %c0_68 = arith.constant 0 : index
    %168 = vector.load %arg4[%c0_66, %c0_67, %c0_68] : memref<2x1x32xf32, #tpu.memory_space<vmem>>, vector<1x1x32xf32>
    %169 = vector.shape_cast %168 : vector<1x1x32xf32> to vector<1x32xf32>
    %170 = vector.broadcast %169 : vector<1x32xf32> to vector<16x32xf32>
    %171 = arith.addf %167, %170 : vector<16x32xf32>
    %172 = arith.addf %0, %171 : vector<16x32xf32>
    %cst_69 = arith.constant dense<0.000000e+00> : vector<16xf32>
    %173 = vector.multi_reduction <add>, %172, %cst_69 [1] : vector<16x32xf32> to vector<16xf32>
    %174 = vector.shape_cast %173 : vector<16xf32> to vector<16x1xf32>
    %175 = arith.mulf %172, %172 : vector<16x32xf32>
    %cst_70 = arith.constant dense<0.000000e+00> : vector<16xf32>
    %176 = vector.multi_reduction <add>, %175, %cst_70 [1] : vector<16x32xf32> to vector<16xf32>
    %177 = vector.shape_cast %176 : vector<16xf32> to vector<16x1xf32>
    %cst_71 = arith.constant 3.125000e-02 : f32
    %178 = vector.broadcast %cst_71 : f32 to vector<16x1xf32>
    %179 = arith.mulf %174, %178 : vector<16x1xf32>
    %cst_72 = arith.constant 3.200000e+01 : f32
    %180 = vector.broadcast %cst_72 : f32 to vector<16x1xf32>
    %181 = arith.mulf %180, %179 : vector<16x1xf32>
    %182 = arith.mulf %181, %179 : vector<16x1xf32>
    %183 = arith.subf %177, %182 : vector<16x1xf32>
    %cst_73 = arith.constant 0.0322580636 : f32
    %184 = vector.broadcast %cst_73 : f32 to vector<16x1xf32>
    %185 = arith.mulf %183, %184 : vector<16x1xf32>
    %cst_74 = arith.constant 0.000000e+00 : f32
    %186 = vector.broadcast %cst_74 : f32 to vector<16x1xf32>
    %187 = arith.maximumf %185, %186 : vector<16x1xf32>
    %188 = math.sqrt %187 : vector<16x1xf32>
    %cst_75 = arith.constant 9.99999997E-7 : f32
    %189 = vector.broadcast %cst_75 : f32 to vector<16x1xf32>
    %190 = arith.addf %188, %189 : vector<16x1xf32>
    %191 = tpu.reciprocal %190 : vector<16x1xf32> -> vector<16x1xf32>
    %192 = vector.broadcast %179 : vector<16x1xf32> to vector<16x32xf32>
    %193 = arith.subf %172, %192 : vector<16x32xf32>
    %194 = vector.broadcast %191 : vector<16x1xf32> to vector<16x32xf32>
    %195 = arith.mulf %193, %194 : vector<16x32xf32>
    %c0_76 = arith.constant 0 : index
    %c0_77 = arith.constant 0 : index
    %c0_78 = arith.constant 0 : index
    %196 = vector.load %arg5[%c0_76, %c0_77, %c0_78] : memref<2x32x64xf32, #tpu.memory_space<vmem>>, vector<1x32x64xf32>
    %197 = vector.shape_cast %196 : vector<1x32x64xf32> to vector<32x64xf32>
    %cst_79 = arith.constant dense<0.000000e+00> : vector<16x64xf32>
    %198 = tpu.matmul %195, %197, %cst_79 {dimension_numbers = #tpu.dot_dimension_numbers<[1], [0], [0], [1], [0, 0, 1, 1], [], []>} : vector<16x32xf32>, vector<32x64xf32>, vector<16x64xf32> -> vector<16x64xf32>
    %c0_80 = arith.constant 0 : index
    %c0_81 = arith.constant 0 : index
    %c0_82 = arith.constant 0 : index
    %199 = vector.load %arg6[%c0_80, %c0_81, %c0_82] : memref<2x1x64xf32, #tpu.memory_space<vmem>>, vector<1x1x64xf32>
    %200 = vector.shape_cast %199 : vector<1x1x64xf32> to vector<1x64xf32>
    %201 = vector.broadcast %200 : vector<1x64xf32> to vector<16x64xf32>
    %202 = arith.addf %198, %201 : vector<16x64xf32>
    %cst_83 = arith.constant 0.000000e+00 : f32
    %203 = vector.broadcast %cst_83 : f32 to vector<16x64xf32>
    %204 = arith.maximumf %202, %203 : vector<16x64xf32>
    %c0_84 = arith.constant 0 : index
    %c0_85 = arith.constant 0 : index
    %c0_86 = arith.constant 0 : index
    %205 = vector.load %arg7[%c0_84, %c0_85, %c0_86] : memref<2x64x32xf32, #tpu.memory_space<vmem>>, vector<1x64x32xf32>
    %206 = vector.shape_cast %205 : vector<1x64x32xf32> to vector<64x32xf32>
    %cst_87 = arith.constant dense<0.000000e+00> : vector<16x32xf32>
    %207 = tpu.matmul %204, %206, %cst_87 {dimension_numbers = #tpu.dot_dimension_numbers<[1], [0], [0], [1], [0, 0, 1, 1], [], []>} : vector<16x64xf32>, vector<64x32xf32>, vector<16x32xf32> -> vector<16x32xf32>
    %208 = arith.addf %172, %207 : vector<16x32xf32>
    %c0_88 = arith.constant 0 : index
    %c0_89 = arith.constant 0 : index
    %c0_90 = arith.constant 0 : index
    %209 = vector.load %arg8[%c0_88, %c0_89, %c0_90] : memref<2x1x32xf32, #tpu.memory_space<vmem>>, vector<1x1x32xf32>
    %210 = vector.shape_cast %209 : vector<1x1x32xf32> to vector<1x32xf32>
    %211 = vector.broadcast %210 : vector<1x32xf32> to vector<16x32xf32>
    %212 = arith.addf %208, %211 : vector<16x32xf32>
    %cst_91 = arith.constant dense<0.000000e+00> : vector<16xf32>
    %213 = vector.multi_reduction <add>, %212, %cst_91 [1] : vector<16x32xf32> to vector<16xf32>
    %214 = vector.shape_cast %213 : vector<16xf32> to vector<16x1xf32>
    %215 = arith.mulf %212, %212 : vector<16x32xf32>
    %cst_92 = arith.constant dense<0.000000e+00> : vector<16xf32>
    %216 = vector.multi_reduction <add>, %215, %cst_92 [1] : vector<16x32xf32> to vector<16xf32>
    %217 = vector.shape_cast %216 : vector<16xf32> to vector<16x1xf32>
    %cst_93 = arith.constant 3.125000e-02 : f32
    %218 = vector.broadcast %cst_93 : f32 to vector<16x1xf32>
    %219 = arith.mulf %214, %218 : vector<16x1xf32>
    %cst_94 = arith.constant 3.200000e+01 : f32
    %220 = vector.broadcast %cst_94 : f32 to vector<16x1xf32>
    %221 = arith.mulf %220, %219 : vector<16x1xf32>
    %222 = arith.mulf %221, %219 : vector<16x1xf32>
    %223 = arith.subf %217, %222 : vector<16x1xf32>
    %cst_95 = arith.constant 0.0322580636 : f32
    %224 = vector.broadcast %cst_95 : f32 to vector<16x1xf32>
    %225 = arith.mulf %223, %224 : vector<16x1xf32>
    %cst_96 = arith.constant 0.000000e+00 : f32
    %226 = vector.broadcast %cst_96 : f32 to vector<16x1xf32>
    %227 = arith.maximumf %225, %226 : vector<16x1xf32>
    %228 = math.sqrt %227 : vector<16x1xf32>
    %cst_97 = arith.constant 9.99999997E-7 : f32
    %229 = vector.broadcast %cst_97 : f32 to vector<16x1xf32>
    %230 = arith.addf %228, %229 : vector<16x1xf32>
    %231 = tpu.reciprocal %230 : vector<16x1xf32> -> vector<16x1xf32>
    %232 = vector.broadcast %219 : vector<16x1xf32> to vector<16x32xf32>
    %233 = arith.subf %212, %232 : vector<16x32xf32>
    %234 = vector.broadcast %231 : vector<16x1xf32> to vector<16x32xf32>
    %235 = arith.mulf %233, %234 : vector<16x32xf32>
    %c1 = arith.constant 1 : index
    %c0_98 = arith.constant 0 : index
    %c0_99 = arith.constant 0 : index
    %236 = vector.load %arg1[%c1, %c0_98, %c0_99] : memref<2x32x96xf32, #tpu.memory_space<vmem>>, vector<1x32x96xf32>
    %237 = vector.shape_cast %236 : vector<1x32x96xf32> to vector<32x96xf32>
    %cst_100 = arith.constant dense<0.000000e+00> : vector<16x96xf32>
    %238 = tpu.matmul %235, %237, %cst_100 {dimension_numbers = #tpu.dot_dimension_numbers<[1], [0], [0], [1], [0, 0, 1, 1], [], []>} : vector<16x32xf32>, vector<32x96xf32>, vector<16x96xf32> -> vector<16x96xf32>
    %c1_101 = arith.constant 1 : index
    %c0_102 = arith.constant 0 : index
    %c0_103 = arith.constant 0 : index
    %239 = vector.load %arg2[%c1_101, %c0_102, %c0_103] : memref<2x1x96xf32, #tpu.memory_space<vmem>>, vector<1x1x96xf32>
    %240 = vector.shape_cast %239 : vector<1x1x96xf32> to vector<1x96xf32>
    %241 = vector.broadcast %240 : vector<1x96xf32> to vector<16x96xf32>
    %242 = arith.addf %238, %241 : vector<16x96xf32>
    %243 = vector.extract_strided_slice %242 {offsets = [0, 0], sizes = [16, 32], strides = [1, 1]} : vector<16x96xf32> to vector<16x32xf32>
    %cst_104 = arith.constant 0.353553385 : f32
    %244 = vector.broadcast %cst_104 : f32 to vector<16x32xf32>
    %245 = arith.mulf %243, %244 : vector<16x32xf32>
    %246 = vector.extract_strided_slice %242 {offsets = [0, 32], sizes = [16, 32], strides = [1, 1]} : vector<16x96xf32> to vector<16x32xf32>
    %247 = vector.extract_strided_slice %242 {offsets = [0, 64], sizes = [16, 32], strides = [1, 1]} : vector<16x96xf32> to vector<16x32xf32>
    %248 = vector.extract_strided_slice %245 {offsets = [0, 0], sizes = [8, 8], strides = [1, 1]} : vector<16x32xf32> to vector<8x8xf32>
    %249 = vector.extract_strided_slice %246 {offsets = [0, 0], sizes = [8, 8], strides = [1, 1]} : vector<16x32xf32> to vector<8x8xf32>
    %250 = vector.extract_strided_slice %247 {offsets = [0, 0], sizes = [8, 8], strides = [1, 1]} : vector<16x32xf32> to vector<8x8xf32>
    %cst_105 = arith.constant dense<0.000000e+00> : vector<8x8xf32>
    %251 = tpu.matmul %248, %249, %cst_105 {dimension_numbers = #tpu.dot_dimension_numbers<[1], [1], [0], [0], [0, 0, 1, 0], [], []>} : vector<8x8xf32>, vector<8x8xf32>, vector<8x8xf32> -> vector<8x8xf32>
    %cst_106 = arith.constant dense<0xFF800000> : vector<8xf32>
    %252 = vector.multi_reduction <maximumf>, %251, %cst_106 [1] : vector<8x8xf32> to vector<8xf32>
    %253 = vector.shape_cast %252 : vector<8xf32> to vector<8x1xf32>
    %254 = vector.broadcast %253 : vector<8x1xf32> to vector<8x8xf32>
    %255 = arith.subf %251, %254 : vector<8x8xf32>
    %256 = math.exp %255 : vector<8x8xf32>
    %cst_107 = arith.constant dense<0.000000e+00> : vector<8xf32>
    %257 = vector.multi_reduction <add>, %256, %cst_107 [1] : vector<8x8xf32> to vector<8xf32>
    %258 = vector.shape_cast %257 : vector<8xf32> to vector<8x1xf32>
    %259 = tpu.reciprocal %258 : vector<8x1xf32> -> vector<8x1xf32>
    %260 = vector.broadcast %259 : vector<8x1xf32> to vector<8x8xf32>
    %261 = arith.mulf %256, %260 : vector<8x8xf32>
    %cst_108 = arith.constant dense<0.000000e+00> : vector<8x8xf32>
    %262 = tpu.matmul %261, %250, %cst_108 {dimension_numbers = #tpu.dot_dimension_numbers<[1], [0], [0], [1], [0, 0, 1, 1], [], []>} : vector<8x8xf32>, vector<8x8xf32>, vector<8x8xf32> -> vector<8x8xf32>
    %c0_109 = arith.constant 0 : index
    %c0_110 = arith.constant 0 : index
    %263 = vector.load %arg10[%c0_109, %c0_110] : memref<16x32xf32, #tpu.memory_space<vmem>>, vector<8x8xf32>
    tpu.vector_store %arg10[%c0_109, %c0_110], %262 {strides = array<i32>} : memref<16x32xf32, #tpu.memory_space<vmem>>, vector<8x8xf32>,
    %264 = vector.extract_strided_slice %245 {offsets = [0, 8], sizes = [8, 8], strides = [1, 1]} : vector<16x32xf32> to vector<8x8xf32>
    %265 = vector.extract_strided_slice %246 {offsets = [0, 8], sizes = [8, 8], strides = [1, 1]} : vector<16x32xf32> to vector<8x8xf32>
    %266 = vector.extract_strided_slice %247 {offsets = [0, 8], sizes = [8, 8], strides = [1, 1]} : vector<16x32xf32> to vector<8x8xf32>
    %cst_111 = arith.constant dense<0.000000e+00> : vector<8x8xf32>
    %267 = tpu.matmul %264, %265, %cst_111 {dimension_numbers = #tpu.dot_dimension_numbers<[1], [1], [0], [0], [0, 0, 1, 0], [], []>} : vector<8x8xf32>, vector<8x8xf32>, vector<8x8xf32> -> vector<8x8xf32>
    %cst_112 = arith.constant dense<0xFF800000> : vector<8xf32>
    %268 = vector.multi_reduction <maximumf>, %267, %cst_112 [1] : vector<8x8xf32> to vector<8xf32>
    %269 = vector.shape_cast %268 : vector<8xf32> to vector<8x1xf32>
    %270 = vector.broadcast %269 : vector<8x1xf32> to vector<8x8xf32>
    %271 = arith.subf %267, %270 : vector<8x8xf32>
    %272 = math.exp %271 : vector<8x8xf32>
    %cst_113 = arith.constant dense<0.000000e+00> : vector<8xf32>
    %273 = vector.multi_reduction <add>, %272, %cst_113 [1] : vector<8x8xf32> to vector<8xf32>
    %274 = vector.shape_cast %273 : vector<8xf32> to vector<8x1xf32>
    %275 = tpu.reciprocal %274 : vector<8x1xf32> -> vector<8x1xf32>
    %276 = vector.broadcast %275 : vector<8x1xf32> to vector<8x8xf32>
    %277 = arith.mulf %272, %276 : vector<8x8xf32>
    %cst_114 = arith.constant dense<0.000000e+00> : vector<8x8xf32>
    %278 = tpu.matmul %277, %266, %cst_114 {dimension_numbers = #tpu.dot_dimension_numbers<[1], [0], [0], [1], [0, 0, 1, 1], [], []>} : vector<8x8xf32>, vector<8x8xf32>, vector<8x8xf32> -> vector<8x8xf32>
    %c0_115 = arith.constant 0 : index
    %c8_116 = arith.constant 8 : index
    %279 = vector.load %arg10[%c0_115, %c8_116] : memref<16x32xf32, #tpu.memory_space<vmem>>, vector<8x8xf32>
    tpu.vector_store %arg10[%c0_115, %c8_116], %278 {strides = array<i32>} : memref<16x32xf32, #tpu.memory_space<vmem>>, vector<8x8xf32>,
    %280 = vector.extract_strided_slice %245 {offsets = [0, 16], sizes = [8, 8], strides = [1, 1]} : vector<16x32xf32> to vector<8x8xf32>
    %281 = vector.extract_strided_slice %246 {offsets = [0, 16], sizes = [8, 8], strides = [1, 1]} : vector<16x32xf32> to vector<8x8xf32>
    %282 = vector.extract_strided_slice %247 {offsets = [0, 16], sizes = [8, 8], strides = [1, 1]} : vector<16x32xf32> to vector<8x8xf32>
    %cst_117 = arith.constant dense<0.000000e+00> : vector<8x8xf32>
    %283 = tpu.matmul %280, %281, %cst_117 {dimension_numbers = #tpu.dot_dimension_numbers<[1], [1], [0], [0], [0, 0, 1, 0], [], []>} : vector<8x8xf32>, vector<8x8xf32>, vector<8x8xf32> -> vector<8x8xf32>
    %cst_118 = arith.constant dense<0xFF800000> : vector<8xf32>
    %284 = vector.multi_reduction <maximumf>, %283, %cst_118 [1] : vector<8x8xf32> to vector<8xf32>
    %285 = vector.shape_cast %284 : vector<8xf32> to vector<8x1xf32>
    %286 = vector.broadcast %285 : vector<8x1xf32> to vector<8x8xf32>
    %287 = arith.subf %283, %286 : vector<8x8xf32>
    %288 = math.exp %287 : vector<8x8xf32>
    %cst_119 = arith.constant dense<0.000000e+00> : vector<8xf32>
    %289 = vector.multi_reduction <add>, %288, %cst_119 [1] : vector<8x8xf32> to vector<8xf32>
    %290 = vector.shape_cast %289 : vector<8xf32> to vector<8x1xf32>
    %291 = tpu.reciprocal %290 : vector<8x1xf32> -> vector<8x1xf32>
    %292 = vector.broadcast %291 : vector<8x1xf32> to vector<8x8xf32>
    %293 = arith.mulf %288, %292 : vector<8x8xf32>
    %cst_120 = arith.constant dense<0.000000e+00> : vector<8x8xf32>
    %294 = tpu.matmul %293, %282, %cst_120 {dimension_numbers = #tpu.dot_dimension_numbers<[1], [0], [0], [1], [0, 0, 1, 1], [], []>} : vector<8x8xf32>, vector<8x8xf32>, vector<8x8xf32> -> vector<8x8xf32>
    %c0_121 = arith.constant 0 : index
    %c16_122 = arith.constant 16 : index
    %295 = vector.load %arg10[%c0_121, %c16_122] : memref<16x32xf32, #tpu.memory_space<vmem>>, vector<8x8xf32>
    tpu.vector_store %arg10[%c0_121, %c16_122], %294 {strides = array<i32>} : memref<16x32xf32, #tpu.memory_space<vmem>>, vector<8x8xf32>,
    %296 = vector.extract_strided_slice %245 {offsets = [0, 24], sizes = [8, 8], strides = [1, 1]} : vector<16x32xf32> to vector<8x8xf32>
    %297 = vector.extract_strided_slice %246 {offsets = [0, 24], sizes = [8, 8], strides = [1, 1]} : vector<16x32xf32> to vector<8x8xf32>
    %298 = vector.extract_strided_slice %247 {offsets = [0, 24], sizes = [8, 8], strides = [1, 1]} : vector<16x32xf32> to vector<8x8xf32>
    %cst_123 = arith.constant dense<0.000000e+00> : vector<8x8xf32>
    %299 = tpu.matmul %296, %297, %cst_123 {dimension_numbers = #tpu.dot_dimension_numbers<[1], [1], [0], [0], [0, 0, 1, 0], [], []>} : vector<8x8xf32>, vector<8x8xf32>, vector<8x8xf32> -> vector<8x8xf32>
    %cst_124 = arith.constant dense<0xFF800000> : vector<8xf32>
    %300 = vector.multi_reduction <maximumf>, %299, %cst_124 [1] : vector<8x8xf32> to vector<8xf32>
    %301 = vector.shape_cast %300 : vector<8xf32> to vector<8x1xf32>
    %302 = vector.broadcast %301 : vector<8x1xf32> to vector<8x8xf32>
    %303 = arith.subf %299, %302 : vector<8x8xf32>
    %304 = math.exp %303 : vector<8x8xf32>
    %cst_125 = arith.constant dense<0.000000e+00> : vector<8xf32>
    %305 = vector.multi_reduction <add>, %304, %cst_125 [1] : vector<8x8xf32> to vector<8xf32>
    %306 = vector.shape_cast %305 : vector<8xf32> to vector<8x1xf32>
    %307 = tpu.reciprocal %306 : vector<8x1xf32> -> vector<8x1xf32>
    %308 = vector.broadcast %307 : vector<8x1xf32> to vector<8x8xf32>
    %309 = arith.mulf %304, %308 : vector<8x8xf32>
    %cst_126 = arith.constant dense<0.000000e+00> : vector<8x8xf32>
    %310 = tpu.matmul %309, %298, %cst_126 {dimension_numbers = #tpu.dot_dimension_numbers<[1], [0], [0], [1], [0, 0, 1, 1], [], []>} : vector<8x8xf32>, vector<8x8xf32>, vector<8x8xf32> -> vector<8x8xf32>
    %c0_127 = arith.constant 0 : index
    %c24_128 = arith.constant 24 : index
    %311 = vector.load %arg10[%c0_127, %c24_128] : memref<16x32xf32, #tpu.memory_space<vmem>>, vector<8x8xf32>
    tpu.vector_store %arg10[%c0_127, %c24_128], %310 {strides = array<i32>} : memref<16x32xf32, #tpu.memory_space<vmem>>, vector<8x8xf32>,
    %312 = vector.extract_strided_slice %245 {offsets = [8, 0], sizes = [8, 8], strides = [1, 1]} : vector<16x32xf32> to vector<8x8xf32>
    %313 = vector.extract_strided_slice %246 {offsets = [8, 0], sizes = [8, 8], strides = [1, 1]} : vector<16x32xf32> to vector<8x8xf32>
    %314 = vector.extract_strided_slice %247 {offsets = [8, 0], sizes = [8, 8], strides = [1, 1]} : vector<16x32xf32> to vector<8x8xf32>
    %cst_129 = arith.constant dense<0.000000e+00> : vector<8x8xf32>
    %315 = tpu.matmul %312, %313, %cst_129 {dimension_numbers = #tpu.dot_dimension_numbers<[1], [1], [0], [0], [0, 0, 1, 0], [], []>} : vector<8x8xf32>, vector<8x8xf32>, vector<8x8xf32> -> vector<8x8xf32>
    %cst_130 = arith.constant dense<0xFF800000> : vector<8xf32>
    %316 = vector.multi_reduction <maximumf>, %315, %cst_130 [1] : vector<8x8xf32> to vector<8xf32>
    %317 = vector.shape_cast %316 : vector<8xf32> to vector<8x1xf32>
    %318 = vector.broadcast %317 : vector<8x1xf32> to vector<8x8xf32>
    %319 = arith.subf %315, %318 : vector<8x8xf32>
    %320 = math.exp %319 : vector<8x8xf32>
    %cst_131 = arith.constant dense<0.000000e+00> : vector<8xf32>
    %321 = vector.multi_reduction <add>, %320, %cst_131 [1] : vector<8x8xf32> to vector<8xf32>
    %322 = vector.shape_cast %321 : vector<8xf32> to vector<8x1xf32>
    %323 = tpu.reciprocal %322 : vector<8x1xf32> -> vector<8x1xf32>
    %324 = vector.broadcast %323 : vector<8x1xf32> to vector<8x8xf32>
    %325 = arith.mulf %320, %324 : vector<8x8xf32>
    %cst_132 = arith.constant dense<0.000000e+00> : vector<8x8xf32>
    %326 = tpu.matmul %325, %314, %cst_132 {dimension_numbers = #tpu.dot_dimension_numbers<[1], [0], [0], [1], [0, 0, 1, 1], [], []>} : vector<8x8xf32>, vector<8x8xf32>, vector<8x8xf32> -> vector<8x8xf32>
    %c8_133 = arith.constant 8 : index
    %c0_134 = arith.constant 0 : index
    %327 = vector.load %arg10[%c8_133, %c0_134] : memref<16x32xf32, #tpu.memory_space<vmem>>, vector<8x8xf32>
    tpu.vector_store %arg10[%c8_133, %c0_134], %326 {strides = array<i32>} : memref<16x32xf32, #tpu.memory_space<vmem>>, vector<8x8xf32>,
    %328 = vector.extract_strided_slice %245 {offsets = [8, 8], sizes = [8, 8], strides = [1, 1]} : vector<16x32xf32> to vector<8x8xf32>
    %329 = vector.extract_strided_slice %246 {offsets = [8, 8], sizes = [8, 8], strides = [1, 1]} : vector<16x32xf32> to vector<8x8xf32>
    %330 = vector.extract_strided_slice %247 {offsets = [8, 8], sizes = [8, 8], strides = [1, 1]} : vector<16x32xf32> to vector<8x8xf32>
    %cst_135 = arith.constant dense<0.000000e+00> : vector<8x8xf32>
    %331 = tpu.matmul %328, %329, %cst_135 {dimension_numbers = #tpu.dot_dimension_numbers<[1], [1], [0], [0], [0, 0, 1, 0], [], []>} : vector<8x8xf32>, vector<8x8xf32>, vector<8x8xf32> -> vector<8x8xf32>
    %cst_136 = arith.constant dense<0xFF800000> : vector<8xf32>
    %332 = vector.multi_reduction <maximumf>, %331, %cst_136 [1] : vector<8x8xf32> to vector<8xf32>
    %333 = vector.shape_cast %332 : vector<8xf32> to vector<8x1xf32>
    %334 = vector.broadcast %333 : vector<8x1xf32> to vector<8x8xf32>
    %335 = arith.subf %331, %334 : vector<8x8xf32>
    %336 = math.exp %335 : vector<8x8xf32>
    %cst_137 = arith.constant dense<0.000000e+00> : vector<8xf32>
    %337 = vector.multi_reduction <add>, %336, %cst_137 [1] : vector<8x8xf32> to vector<8xf32>
    %338 = vector.shape_cast %337 : vector<8xf32> to vector<8x1xf32>
    %339 = tpu.reciprocal %338 : vector<8x1xf32> -> vector<8x1xf32>
    %340 = vector.broadcast %339 : vector<8x1xf32> to vector<8x8xf32>
    %341 = arith.mulf %336, %340 : vector<8x8xf32>
    %cst_138 = arith.constant dense<0.000000e+00> : vector<8x8xf32>
    %342 = tpu.matmul %341, %330, %cst_138 {dimension_numbers = #tpu.dot_dimension_numbers<[1], [0], [0], [1], [0, 0, 1, 1], [], []>} : vector<8x8xf32>, vector<8x8xf32>, vector<8x8xf32> -> vector<8x8xf32>
    %c8_139 = arith.constant 8 : index
    %c8_140 = arith.constant 8 : index
    %343 = vector.load %arg10[%c8_139, %c8_140] : memref<16x32xf32, #tpu.memory_space<vmem>>, vector<8x8xf32>
    tpu.vector_store %arg10[%c8_139, %c8_140], %342 {strides = array<i32>} : memref<16x32xf32, #tpu.memory_space<vmem>>, vector<8x8xf32>,
    %344 = vector.extract_strided_slice %245 {offsets = [8, 16], sizes = [8, 8], strides = [1, 1]} : vector<16x32xf32> to vector<8x8xf32>
    %345 = vector.extract_strided_slice %246 {offsets = [8, 16], sizes = [8, 8], strides = [1, 1]} : vector<16x32xf32> to vector<8x8xf32>
    %346 = vector.extract_strided_slice %247 {offsets = [8, 16], sizes = [8, 8], strides = [1, 1]} : vector<16x32xf32> to vector<8x8xf32>
    %cst_141 = arith.constant dense<0.000000e+00> : vector<8x8xf32>
    %347 = tpu.matmul %344, %345, %cst_141 {dimension_numbers = #tpu.dot_dimension_numbers<[1], [1], [0], [0], [0, 0, 1, 0], [], []>} : vector<8x8xf32>, vector<8x8xf32>, vector<8x8xf32> -> vector<8x8xf32>
    %cst_142 = arith.constant dense<0xFF800000> : vector<8xf32>
    %348 = vector.multi_reduction <maximumf>, %347, %cst_142 [1] : vector<8x8xf32> to vector<8xf32>
    %349 = vector.shape_cast %348 : vector<8xf32> to vector<8x1xf32>
    %350 = vector.broadcast %349 : vector<8x1xf32> to vector<8x8xf32>
    %351 = arith.subf %347, %350 : vector<8x8xf32>
    %352 = math.exp %351 : vector<8x8xf32>
    %cst_143 = arith.constant dense<0.000000e+00> : vector<8xf32>
    %353 = vector.multi_reduction <add>, %352, %cst_143 [1] : vector<8x8xf32> to vector<8xf32>
    %354 = vector.shape_cast %353 : vector<8xf32> to vector<8x1xf32>
    %355 = tpu.reciprocal %354 : vector<8x1xf32> -> vector<8x1xf32>
    %356 = vector.broadcast %355 : vector<8x1xf32> to vector<8x8xf32>
    %357 = arith.mulf %352, %356 : vector<8x8xf32>
    %cst_144 = arith.constant dense<0.000000e+00> : vector<8x8xf32>
    %358 = tpu.matmul %357, %346, %cst_144 {dimension_numbers = #tpu.dot_dimension_numbers<[1], [0], [0], [1], [0, 0, 1, 1], [], []>} : vector<8x8xf32>, vector<8x8xf32>, vector<8x8xf32> -> vector<8x8xf32>
    %c8_145 = arith.constant 8 : index
    %c16_146 = arith.constant 16 : index
    %359 = vector.load %arg10[%c8_145, %c16_146] : memref<16x32xf32, #tpu.memory_space<vmem>>, vector<8x8xf32>
    tpu.vector_store %arg10[%c8_145, %c16_146], %358 {strides = array<i32>} : memref<16x32xf32, #tpu.memory_space<vmem>>, vector<8x8xf32>,
    %360 = vector.extract_strided_slice %245 {offsets = [8, 24], sizes = [8, 8], strides = [1, 1]} : vector<16x32xf32> to vector<8x8xf32>
    %361 = vector.extract_strided_slice %246 {offsets = [8, 24], sizes = [8, 8], strides = [1, 1]} : vector<16x32xf32> to vector<8x8xf32>
    %362 = vector.extract_strided_slice %247 {offsets = [8, 24], sizes = [8, 8], strides = [1, 1]} : vector<16x32xf32> to vector<8x8xf32>
    %cst_147 = arith.constant dense<0.000000e+00> : vector<8x8xf32>
    %363 = tpu.matmul %360, %361, %cst_147 {dimension_numbers = #tpu.dot_dimension_numbers<[1], [1], [0], [0], [0, 0, 1, 0], [], []>} : vector<8x8xf32>, vector<8x8xf32>, vector<8x8xf32> -> vector<8x8xf32>
    %cst_148 = arith.constant dense<0xFF800000> : vector<8xf32>
    %364 = vector.multi_reduction <maximumf>, %363, %cst_148 [1] : vector<8x8xf32> to vector<8xf32>
    %365 = vector.shape_cast %364 : vector<8xf32> to vector<8x1xf32>
    %366 = vector.broadcast %365 : vector<8x1xf32> to vector<8x8xf32>
    %367 = arith.subf %363, %366 : vector<8x8xf32>
    %368 = math.exp %367 : vector<8x8xf32>
    %cst_149 = arith.constant dense<0.000000e+00> : vector<8xf32>
    %369 = vector.multi_reduction <add>, %368, %cst_149 [1] : vector<8x8xf32> to vector<8xf32>
    %370 = vector.shape_cast %369 : vector<8xf32> to vector<8x1xf32>
    %371 = tpu.reciprocal %370 : vector<8x1xf32> -> vector<8x1xf32>
    %372 = vector.broadcast %371 : vector<8x1xf32> to vector<8x8xf32>
    %373 = arith.mulf %368, %372 : vector<8x8xf32>
    %cst_150 = arith.constant dense<0.000000e+00> : vector<8x8xf32>
    %374 = tpu.matmul %373, %362, %cst_150 {dimension_numbers = #tpu.dot_dimension_numbers<[1], [0], [0], [1], [0, 0, 1, 1], [], []>} : vector<8x8xf32>, vector<8x8xf32>, vector<8x8xf32> -> vector<8x8xf32>
    %c8_151 = arith.constant 8 : index
    %c24_152 = arith.constant 24 : index
    %375 = vector.load %arg10[%c8_151, %c24_152] : memref<16x32xf32, #tpu.memory_space<vmem>>, vector<8x8xf32>
    tpu.vector_store %arg10[%c8_151, %c24_152], %374 {strides = array<i32>} : memref<16x32xf32, #tpu.memory_space<vmem>>, vector<8x8xf32>,
    %c0_153 = arith.constant 0 : index
    %c0_154 = arith.constant 0 : index
    %376 = vector.load %arg10[%c0_153, %c0_154] : memref<16x32xf32, #tpu.memory_space<vmem>>, vector<16x32xf32>
    %c1_155 = arith.constant 1 : index
    %c0_156 = arith.constant 0 : index
    %c0_157 = arith.constant 0 : index
    %377 = vector.load %arg3[%c1_155, %c0_156, %c0_157] : memref<2x32x32xf32, #tpu.memory_space<vmem>>, vector<1x32x32xf32>
    %378 = vector.shape_cast %377 : vector<1x32x32xf32> to vector<32x32xf32>
    %cst_158 = arith.constant dense<0.000000e+00> : vector<16x32xf32>
    %379 = tpu.matmul %376, %378, %cst_158 {dimension_numbers = #tpu.dot_dimension_numbers<[1], [0], [0], [1], [0, 0, 1, 1], [], []>} : vector<16x32xf32>, vector<32x32xf32>, vector<16x32xf32> -> vector<16x32xf32>
    %c1_159 = arith.constant 1 : index
    %c0_160 = arith.constant 0 : index
    %c0_161 = arith.constant 0 : index
    %380 = vector.load %arg4[%c1_159, %c0_160, %c0_161] : memref<2x1x32xf32, #tpu.memory_space<vmem>>, vector<1x1x32xf32>
    %381 = vector.shape_cast %380 : vector<1x1x32xf32> to vector<1x32xf32>
    %382 = vector.broadcast %381 : vector<1x32xf32> to vector<16x32xf32>
    %383 = arith.addf %379, %382 : vector<16x32xf32>
    %384 = arith.addf %212, %383 : vector<16x32xf32>
    %cst_162 = arith.constant dense<0.000000e+00> : vector<16xf32>
    %385 = vector.multi_reduction <add>, %384, %cst_162 [1] : vector<16x32xf32> to vector<16xf32>
    %386 = vector.shape_cast %385 : vector<16xf32> to vector<16x1xf32>
    %387 = arith.mulf %384, %384 : vector<16x32xf32>
    %cst_163 = arith.constant dense<0.000000e+00> : vector<16xf32>
    %388 = vector.multi_reduction <add>, %387, %cst_163 [1] : vector<16x32xf32> to vector<16xf32>
    %389 = vector.shape_cast %388 : vector<16xf32> to vector<16x1xf32>
    %cst_164 = arith.constant 3.125000e-02 : f32
    %390 = vector.broadcast %cst_164 : f32 to vector<16x1xf32>
    %391 = arith.mulf %386, %390 : vector<16x1xf32>
    %cst_165 = arith.constant 3.200000e+01 : f32
    %392 = vector.broadcast %cst_165 : f32 to vector<16x1xf32>
    %393 = arith.mulf %392, %391 : vector<16x1xf32>
    %394 = arith.mulf %393, %391 : vector<16x1xf32>
    %395 = arith.subf %389, %394 : vector<16x1xf32>
    %cst_166 = arith.constant 0.0322580636 : f32
    %396 = vector.broadcast %cst_166 : f32 to vector<16x1xf32>
    %397 = arith.mulf %395, %396 : vector<16x1xf32>
    %cst_167 = arith.constant 0.000000e+00 : f32
    %398 = vector.broadcast %cst_167 : f32 to vector<16x1xf32>
    %399 = arith.maximumf %397, %398 : vector<16x1xf32>
    %400 = math.sqrt %399 : vector<16x1xf32>
    %cst_168 = arith.constant 9.99999997E-7 : f32
    %401 = vector.broadcast %cst_168 : f32 to vector<16x1xf32>
    %402 = arith.addf %400, %401 : vector<16x1xf32>
    %403 = tpu.reciprocal %402 : vector<16x1xf32> -> vector<16x1xf32>
    %404 = vector.broadcast %391 : vector<16x1xf32> to vector<16x32xf32>
    %405 = arith.subf %384, %404 : vector<16x32xf32>
    %406 = vector.broadcast %403 : vector<16x1xf32> to vector<16x32xf32>
    %407 = arith.mulf %405, %406 : vector<16x32xf32>
    %c1_169 = arith.constant 1 : index
    %c0_170 = arith.constant 0 : index
    %c0_171 = arith.constant 0 : index
    %408 = vector.load %arg5[%c1_169, %c0_170, %c0_171] : memref<2x32x64xf32, #tpu.memory_space<vmem>>, vector<1x32x64xf32>
    %409 = vector.shape_cast %408 : vector<1x32x64xf32> to vector<32x64xf32>
    %cst_172 = arith.constant dense<0.000000e+00> : vector<16x64xf32>
    %410 = tpu.matmul %407, %409, %cst_172 {dimension_numbers = #tpu.dot_dimension_numbers<[1], [0], [0], [1], [0, 0, 1, 1], [], []>} : vector<16x32xf32>, vector<32x64xf32>, vector<16x64xf32> -> vector<16x64xf32>
    %c1_173 = arith.constant 1 : index
    %c0_174 = arith.constant 0 : index
    %c0_175 = arith.constant 0 : index
    %411 = vector.load %arg6[%c1_173, %c0_174, %c0_175] : memref<2x1x64xf32, #tpu.memory_space<vmem>>, vector<1x1x64xf32>
    %412 = vector.shape_cast %411 : vector<1x1x64xf32> to vector<1x64xf32>
    %413 = vector.broadcast %412 : vector<1x64xf32> to vector<16x64xf32>
    %414 = arith.addf %410, %413 : vector<16x64xf32>
    %cst_176 = arith.constant 0.000000e+00 : f32
    %415 = vector.broadcast %cst_176 : f32 to vector<16x64xf32>
    %416 = arith.maximumf %414, %415 : vector<16x64xf32>
    %c1_177 = arith.constant 1 : index
    %c0_178 = arith.constant 0 : index
    %c0_179 = arith.constant 0 : index
    %417 = vector.load %arg7[%c1_177, %c0_178, %c0_179] : memref<2x64x32xf32, #tpu.memory_space<vmem>>, vector<1x64x32xf32>
    %418 = vector.shape_cast %417 : vector<1x64x32xf32> to vector<64x32xf32>
    %cst_180 = arith.constant dense<0.000000e+00> : vector<16x32xf32>
    %419 = tpu.matmul %416, %418, %cst_180 {dimension_numbers = #tpu.dot_dimension_numbers<[1], [0], [0], [1], [0, 0, 1, 1], [], []>} : vector<16x64xf32>, vector<64x32xf32>, vector<16x32xf32> -> vector<16x32xf32>
    %420 = arith.addf %384, %419 : vector<16x32xf32>
    %c1_181 = arith.constant 1 : index
    %c0_182 = arith.constant 0 : index
    %c0_183 = arith.constant 0 : index
    %421 = vector.load %arg8[%c1_181, %c0_182, %c0_183] : memref<2x1x32xf32, #tpu.memory_space<vmem>>, vector<1x1x32xf32>
    %422 = vector.shape_cast %421 : vector<1x1x32xf32> to vector<1x32xf32>
    %423 = vector.broadcast %422 : vector<1x32xf32> to vector<16x32xf32>
    %424 = arith.addf %420, %423 : vector<16x32xf32>
    %cst_184 = arith.constant dense<0.000000e+00> : vector<16xf32>
    %425 = vector.multi_reduction <add>, %424, %cst_184 [1] : vector<16x32xf32> to vector<16xf32>
    %426 = vector.shape_cast %425 : vector<16xf32> to vector<16x1xf32>
    %427 = arith.mulf %424, %424 : vector<16x32xf32>
    %cst_185 = arith.constant dense<0.000000e+00> : vector<16xf32>
    %428 = vector.multi_reduction <add>, %427, %cst_185 [1] : vector<16x32xf32> to vector<16xf32>
    %429 = vector.shape_cast %428 : vector<16xf32> to vector<16x1xf32>
    %cst_186 = arith.constant 3.125000e-02 : f32
    %430 = vector.broadcast %cst_186 : f32 to vector<16x1xf32>
    %431 = arith.mulf %426, %430 : vector<16x1xf32>
    %cst_187 = arith.constant 3.200000e+01 : f32
    %432 = vector.broadcast %cst_187 : f32 to vector<16x1xf32>
    %433 = arith.mulf %432, %431 : vector<16x1xf32>
    %434 = arith.mulf %433, %431 : vector<16x1xf32>
    %435 = arith.subf %429, %434 : vector<16x1xf32>
    %cst_188 = arith.constant 0.0322580636 : f32
    %436 = vector.broadcast %cst_188 : f32 to vector<16x1xf32>
    %437 = arith.mulf %435, %436 : vector<16x1xf32>
    %cst_189 = arith.constant 0.000000e+00 : f32
    %438 = vector.broadcast %cst_189 : f32 to vector<16x1xf32>
    %439 = arith.maximumf %437, %438 : vector<16x1xf32>
    %440 = math.sqrt %439 : vector<16x1xf32>
    %cst_190 = arith.constant 9.99999997E-7 : f32
    %441 = vector.broadcast %cst_190 : f32 to vector<16x1xf32>
    %442 = arith.addf %440, %441 : vector<16x1xf32>
    %443 = tpu.reciprocal %442 : vector<16x1xf32> -> vector<16x1xf32>
    %444 = vector.broadcast %431 : vector<16x1xf32> to vector<16x32xf32>
    %445 = arith.subf %424, %444 : vector<16x32xf32>
    %446 = vector.broadcast %443 : vector<16x1xf32> to vector<16x32xf32>
    %447 = arith.mulf %445, %446 : vector<16x32xf32>
    %c0_191 = arith.constant 0 : index
    %c0_192 = arith.constant 0 : index
    %448 = vector.load %arg9[%c0_191, %c0_192] : memref<16x32xf32, #tpu.memory_space<vmem>>, vector<16x32xf32>
    tpu.vector_store %arg9[%c0_191, %c0_192], %447 {strides = array<i32>} : memref<16x32xf32, #tpu.memory_space<vmem>>, vector<16x32xf32>,
    return
  }
}

</mosaic_0001>

<llo_original>
// kernel: decoder_forward.1
$region0: #{decoder_forward.1}
  #allocation0 [shape = 'u32[]', space=smem, size = 0x4, offset = 0x4, fixed_abs, tag = 'smem constant byte address 0x4 - core index']
  #allocation1 [shape = 'u32[144,128]{1,0:T(1,128)}', space=vmem, size = 0x12000, scoped, tag = 'internal scratch']
  #allocation2 [shape = 'f32[16,32]{1,0:T(8,128)}', space=vmem, size = 0x2000, scoped, tag = 'scratch operand']
  %s0 = inlined_call_operand.hbm [shape: f32[16,32], index: 0, kind: input, shape index: {}]
  %s1 = inlined_call_operand.vmem [shape: f32[2,32,96], index: 1, kind: input, shape index: {}]
  %s2 = inlined_call_operand.vmem [shape: f32[2,1,96], index: 2, kind: input, shape index: {}]
  %s3 = inlined_call_operand.vmem [shape: f32[2,32,32], index: 3, kind: input, shape index: {}]
  %s4 = inlined_call_operand.vmem [shape: f32[2,1,32], index: 4, kind: input, shape index: {}]
  %s5 = inlined_call_operand.vmem [shape: f32[2,32,64], index: 5, kind: input, shape index: {}]
  %s6 = inlined_call_operand.vmem [shape: f32[2,1,64], index: 6, kind: input, shape index: {}]
  %s7 = inlined_call_operand.vmem [shape: f32[2,64,32], index: 7, kind: input, shape index: {}]
  %s8 = inlined_call_operand.vmem [shape: f32[2,1,32], index: 8, kind: input, shape index: {}]
  %s9 = inlined_call_operand.hbm [shape: f32[16,32], index: 9, kind: output, shape index: {}]
  %s10 = sld [smem:[#allocation0]]
  $region50: #{decoder_forward.1} parent=0
    _
  %s12 = ssub.s32 1, %s10
  %s13 = scalar_select 0, %s12, %s10
  $region1: #{decoder_forward.1} parent=0
    #allocation3 [shape = 'u8[8192]{0}', space=vmem, size = 0x2000, scoped, tag = 'input window, operand 0, single buffered']
    #allocation4 [shape = 's32[1]{0}', space=sflag, size = 0x4, scoped, tag = 'scoped memory for decoder_forward.1']
    #allocation5 [shape = 's32[1]{0}', space=sflag, size = 0x4, scoped, tag = 'scoped memory for decoder_forward.1']
    #allocation6 [shape = 'u8[8192]{0}', space=vmem, size = 0x2000, scoped, tag = 'output window, operand 0, single buffered']
    %14 = vsyncpa [#allocation4], 0
    %15 = vsyncpa [#allocation5], 0
    // Predicated region
    $region2: #{decoder_forward.1} parent=1 // pred_check
      _
    $region3: #{decoder_forward.1} parent=1 // pred_check_branch
      %17 = sbr.rel (0) target = $region5
    $region4: #{decoder_forward.1} parent=1 // pred_region
      %s19 = ssub.s32 256, 256
      %20 = vsyncadd [#allocation4], %s19
      %s21 = sshll.u32 [#allocation3], 4
      %s22 = int_to_ptr.vmem [resolvable:$true] %s21
      %27 = dma.hbm_to_vmem [thread:$0]  %s0, 256, %s22, [#allocation4], 128, 128, 8
    $region5: #{decoder_forward.1} parent=1 // pred_fallthru
      _
    // Predicated region
    $region6: #{decoder_forward.1} parent=1 // pred_check
      _
    $region7: #{decoder_forward.1} parent=1 // pred_check_branch
      %29 = sbr.rel (0) target = $region9
    $region8: #{decoder_forward.1} parent=1 // pred_region
      _
    $region9: #{decoder_forward.1} parent=1 // pred_fallthru
      _
    // Predicated region
    $region10: #{decoder_forward.1} parent=1 // pred_check
      _
    $region11: #{decoder_forward.1} parent=1 // pred_check_branch
      %31 = sbr.rel (0) target = $region13
    $region12: #{decoder_forward.1} parent=1 // pred_region
      _
    $region13: #{decoder_forward.1} parent=1 // pred_fallthru
      _
    // Predicated region
    $region14: #{decoder_forward.1} parent=1 // pred_check
      _
    $region15: #{decoder_forward.1} parent=1 // pred_check_branch
      %33 = sbr.rel (0) target = $region17
    $region16: #{decoder_forward.1} parent=1 // pred_region
      _
    $region17: #{decoder_forward.1} parent=1 // pred_fallthru
      _
    // Predicated region
    $region18: #{decoder_forward.1} parent=1 // pred_check
      _
    $region19: #{decoder_forward.1} parent=1 // pred_check_branch
      %35 = sbr.rel (0) target = $region21
    $region20: #{decoder_forward.1} parent=1 // pred_region
      _
    $region21: #{decoder_forward.1} parent=1 // pred_fallthru
      _
    // Predicated region
    $region22: #{decoder_forward.1} parent=1 // pred_check
      _
    $region23: #{decoder_forward.1} parent=1 // pred_check_branch
      %37 = sbr.rel (0) target = $region25
    $region24: #{decoder_forward.1} parent=1 // pred_region
      _
    $region25: #{decoder_forward.1} parent=1 // pred_fallthru
      _
    // Predicated region
    $region26: #{decoder_forward.1} parent=1 // pred_check
      _
    $region27: #{decoder_forward.1} parent=1 // pred_check_branch
      %39 = sbr.rel (0) target = $region29
    $region28: #{decoder_forward.1} parent=1 // pred_region
      _
    $region29: #{decoder_forward.1} parent=1 // pred_fallthru
      _
    // Predicated region
    $region30: #{decoder_forward.1} parent=1 // pred_check
      _
    $region31: #{decoder_forward.1} parent=1 // pred_check_branch
      %41 = sbr.rel (0) target = $region33
    $region32: #{decoder_forward.1} parent=1 // pred_region
      _
    $region33: #{decoder_forward.1} parent=1 // pred_fallthru
      _
    // Predicated region
    $region34: #{decoder_forward.1} parent=1 // pred_check
      _
    $region35: #{decoder_forward.1} parent=1 // pred_check_branch
      %43 = sbr.rel (0) target = $region37
    $region36: #{decoder_forward.1} parent=1 // pred_region
      _
    $region37: #{decoder_forward.1} parent=1 // pred_fallthru
      _
    // Predicated region
    $region38: #{decoder_forward.1} parent=1 // pred_check
      _
    $region39: #{decoder_forward.1} parent=1 // pred_check_branch
      %45 = sbr.rel (0) target = $region41
    $region40: #{decoder_forward.1} parent=1 // pred_region
      %46 = dma.done [#allocation4], 256
    $region41: #{decoder_forward.1} parent=1 // pred_fallthru
      _
    %v47 = vld [vmem:[#allocation3] sm:$0xff]
    %v48 = vld [vmem:[#allocation3 + $0x8] sm:$0xff]
    %vm49 = vcmask 261120
    %v50 = vsel %vm49, %v47, 0.0
    %51 = vadd.xlane.f32.xlu0 %v50
    %v52 = vpop.xlane.xlu0 %51
    %v53 = vsel %vm49, %v48, 0.0
    %54 = vadd.xlane.f32.xlu0 %v53
    %v55 = vpop.xlane.xlu0 %54
    %v56 = vmul.f32 %v47, %v47
    %v57 = vmul.f32 %v48, %v48
    %v58 = vsel %vm49, %v56, 0.0
    %59 = vadd.xlane.f32.xlu0 %v58
    %v60 = vpop.xlane.xlu0 %59
    %v61 = vsel %vm49, %v57, 0.0
    %62 = vadd.xlane.f32.xlu0 %v61
    %v63 = vpop.xlane.xlu0 %62
    %v64 = vmul.f32 %v52, 0.03125
    %v65 = vmul.f32 %v55, 0.03125
    %v66 = vmul.f32 %v64, 32.0
    %v67 = vmul.f32 %v65, 32.0
    %v68 = vmul.f32 %v66, %v64
    %v69 = vmul.f32 %v67, %v65
    %v70 = vsub.f32 %v60, %v68
    %v71 = vsub.f32 %v63, %v69
    %v72 = vmul.f32 %v70, 0.032258064
    %v73 = vmul.f32 %v71, 0.032258064
    %v74 = vmax.f32 %v72, 0.0
    %v75 = vmax.f32 %v73, 0.0
    %v76 = vrsqrt.pop %v74
    %v77 = vmul.f32 %v74, %v76
    %vm78 = vcmp.eq.f32.partialorder %v74, inf
    %v79 = vsel %vm78, %v74, %v77
    %vm80 = vcmp.eq.f32.partialorder %v74, 0.0
    %v81 = vand.u32 %v74, 2147483648
    %v82 = vsel %vm80, %v81, %v79
    %v83 = vrsqrt.pop %v75
    %v84 = vmul.f32 %v75, %v83
    %vm85 = vcmp.eq.f32.partialorder %v75, inf
    %v86 = vsel %vm85, %v75, %v84
    %vm87 = vcmp.eq.f32.partialorder %v75, 0.0
    %v88 = vand.u32 %v75, 2147483648
    %v89 = vsel %vm87, %v88, %v86
    %v90 = vadd.f32 %v82, 1e-06
    %v91 = vadd.f32 %v89, 1e-06
    %v92 = vrcp.pop %v90
    %v93 = vrcp.pop %v91
    %v94 = vsub.f32 %v47, %v64
    %v95 = vsub.f32 %v48, %v65
    %v96 = vmul.f32 %v94, %v92
    %v97 = vmul.f32 %v95, %v93
    %v98 = vld [vmem:[%s1] sm:$0xff]
    %v99 = vld [vmem:[%s1 + $0x8] sm:$0xff]
    %v100 = vld [vmem:[%s1 + $0x10] sm:$0xff]
    %v101 = vld [vmem:[%s1 + $0x18] sm:$0xff]
    %v102 = vld [vmem:[%s2] sm:$0x1]
    %v104 = vlaneseq
    %v105 = vshrl.u32 %v104, 7
    %v106 = vsub.s32 0, %v105
    %v107 = vrot.slane %v102, %v106
    %v110 = vsel %vm49, %v96, 0
    %v113 = vsel %vm49, %v97, 0
    %115 = vmatprep.subr.mxu0 0.0
    %116 = vmatpush1.msra.mxu0 %v98
    %117 = vmatprep.subr.mxu0 0.0
    %118 = vmatpush1.msra.mxu0 %v99
    %119 = vmatprep.subr.mxu0 0.0
    %120 = vmatpush1.msra.mxu0 %v100
    %121 = vmatprep.subr.mxu0 0.0
    %122 = vmatpush1.msra.mxu0 %v101
    %123 = vmatprep.subr.mxu0 0.0
    %124 = vmatpush1.msra.mxu0 0.0
    %125 = vmatprep.subr.mxu0 0.0
    %126 = vmatpush1.msra.mxu0 0.0
    %127 = vmatprep.subr.mxu0 0.0
    %128 = vmatpush1.msra.mxu0 0.0
    %129 = vmatprep.subr.mxu0 0.0
    %130 = vmatpush1.msra.mxu0 0.0
    %131 = vmatprep.subr.mxu0 0.0
    %132 = vmatpush1.msra.mxu0 0.0
    %133 = vmatprep.subr.mxu0 0.0
    %134 = vmatpush1.msra.mxu0 0.0
    %135 = vmatprep.subr.mxu0 0.0
    %136 = vmatpush1.msra.mxu0 0.0
    %137 = vmatprep.subr.mxu0 0.0
    %138 = vmatpush1.msra.mxu0 0.0
    %139 = vmatprep.subr.mxu0 0.0
    %140 = vmatpush1.msra.mxu0 0.0
    %141 = vmatprep.subr.mxu0 0.0
    %142 = vmatpush1.msra.mxu0 0.0
    %143 = vmatprep.subr.mxu0 0.0
    %144 = vmatpush1.msra.mxu0 0.0
    %145 = vmatprep.subr.mxu0 0.0
    %146 = vmatpush1.msra.mxu0 0.0
    %147 = vmatprep.subr.mxu0 0.0
    %148 = vmatpush1.msra.mxu0 0.0
    %149 = vmatprep.subr.mxu0 0.0
    %150 = vmatpush1.msra.mxu0 0.0
    %151 = vmatprep.subr.mxu0 0.0
    %152 = vmatpush1.msra.mxu0 0.0
    %153 = vmatprep.subr.mxu0 0.0
    %154 = vmatpush1.msra.mxu0 0.0
    %155 = vmatprep.subr.mxu0 0.0
    %156 = vmatpush1.msra.mxu0 0.0
    %157 = vmatprep.subr.mxu0 0.0
    %158 = vmatpush1.msra.mxu0 0.0
    %159 = vmatprep.subr.mxu0 0.0
    %160 = vmatpush1.msra.mxu0 0.0
    %161 = vmatprep.subr.mxu0 0.0
    %162 = vmatpush1.msra.mxu0 0.0
    %163 = vmatprep.subr.mxu0 0.0
    %164 = vmatpush1.msra.mxu0 0.0
    %165 = vmatprep.subr.mxu0 0.0
    %166 = vmatpush1.msra.mxu0 0.0
    %167 = vmatprep.subr.mxu0 0.0
    %168 = vmatpush1.msra.mxu0 0.0
    %169 = vmatprep.subr.mxu0 0.0
    %170 = vmatpush1.msra.mxu0 0.0
    %171 = vmatprep.subr.mxu0 0.0
    %172 = vmatpush1.msra.mxu0 0.0
    %173 = vmatprep.subr.mxu0 0.0
    %174 = vmatpush1.msra.mxu0 0.0
    %175 = vmatprep.subr.mxu0 0.0
    %176 = vmatpush1.msra.mxu0 0.0
    %177 = vmatprep.subr.mxu0 0.0
    %178 = vmatpush1.msra.mxu0 0.0
    %179 = vmatprep.mubr.f32.mxu0 0.0
    %180 = vmatmul.mubr.f32.gmra.mrb[0].mxu0 %v110
    %v181 = vpop.f32.mrb[0].mxu0
    %v182 = vadd.f32 %v107, %v181
    %v183 = vpop.f32.mrb[0].mxu0
    %184 = vmatprep.mubr.f32.mxu0 0.0
    %185 = vmatmul.mubr.f32.gmra.mrb[0].mxu0 %v113
    %v186 = vpop.f32.mrb[0].mxu0
    %v187 = vadd.f32 %v107, %v186
    %v188 = vpop.f32.mrb[0].mxu0
    %189 = vdwg.mxu0
    %v190 = vmul.f32 %v182, 0.35355338
    %v191 = vmul.f32 %v187, 0.35355338
    %193 = vrot.lane.b32.xlu0 %v182, 96
    %v194 = vpop.permute.xlu0 %193
    %vm195 = vcmask 64512
    %v197 = vsel %vm195, %v190, 0
    %v199 = vsel %vm195, %v194, 0
    %201 = vmatprep.subr.mxu0 0.0
    %202 = vmatpush1.xpose.msra.mxu0 %v199
    %203 = vmatprep.subr.mxu0 0.0
    %204 = vmatpush1.xpose.msra.mxu0 0.0
    %205 = vmatprep.subr.mxu0 0.0
    %206 = vmatpush1.xpose.msra.mxu0 0.0
    %207 = vmatprep.subr.mxu0 0.0
    %208 = vmatpush1.xpose.msra.mxu0 0.0
    %209 = vmatprep.subr.mxu0 0.0
    %210 = vmatpush1.xpose.msra.mxu0 0.0
    %211 = vmatprep.subr.mxu0 0.0
    %212 = vmatpush1.xpose.msra.mxu0 0.0
    %213 = vmatprep.subr.mxu0 0.0
    %214 = vmatpush1.xpose.msra.mxu0 0.0
    %215 = vmatprep.subr.mxu0 0.0
    %216 = vmatpush1.xpose.msra.mxu0 0.0
    %217 = vmatprep.subr.mxu0 0.0
    %218 = vmatpush1.xpose.msra.mxu0 0.0
    %219 = vmatprep.subr.mxu0 0.0
    %220 = vmatpush1.xpose.msra.mxu0 0.0
    %221 = vmatprep.subr.mxu0 0.0
    %222 = vmatpush1.xpose.msra.mxu0 0.0
    %223 = vmatprep.subr.mxu0 0.0
    %224 = vmatpush1.xpose.msra.mxu0 0.0
    %225 = vmatprep.subr.mxu0 0.0
    %226 = vmatpush1.xpose.msra.mxu0 0.0
    %227 = vmatprep.subr.mxu0 0.0
    %228 = vmatpush1.xpose.msra.mxu0 0.0
    %229 = vmatprep.subr.mxu0 0.0
    %230 = vmatpush1.xpose.msra.mxu0 0.0
    %231 = vmatprep.subr.mxu0 0.0
    %232 = vmatpush1.xpose.msra.mxu0 0.0
    %233 = vmatprep.subr.mxu0 0.0
    %234 = vmatpush1.xpose.msra.mxu0 0.0
    %235 = vmatprep.subr.mxu0 0.0
    %236 = vmatpush1.xpose.msra.mxu0 0.0
    %237 = vmatprep.subr.mxu0 0.0
    %238 = vmatpush1.xpose.msra.mxu0 0.0
    %239 = vmatprep.subr.mxu0 0.0
    %240 = vmatpush1.xpose.msra.mxu0 0.0
    %241 = vmatprep.subr.mxu0 0.0
    %242 = vmatpush1.xpose.msra.mxu0 0.0
    %243 = vmatprep.subr.mxu0 0.0
    %244 = vmatpush1.xpose.msra.mxu0 0.0
    %245 = vmatprep.subr.mxu0 0.0
    %246 = vmatpush1.xpose.msra.mxu0 0.0
    %247 = vmatprep.subr.mxu0 0.0
    %248 = vmatpush1.xpose.msra.mxu0 0.0
    %249 = vmatprep.subr.mxu0 0.0
    %250 = vmatpush1.xpose.msra.mxu0 0.0
    %251 = vmatprep.subr.mxu0 0.0
    %252 = vmatpush1.xpose.msra.mxu0 0.0
    %253 = vmatprep.subr.mxu0 0.0
    %254 = vmatpush1.xpose.msra.mxu0 0.0
    %255 = vmatprep.subr.mxu0 0.0
    %256 = vmatpush1.xpose.msra.mxu0 0.0
    %257 = vmatprep.subr.mxu0 0.0
    %258 = vmatpush1.xpose.msra.mxu0 0.0
    %259 = vmatprep.subr.mxu0 0.0
    %260 = vmatpush1.xpose.msra.mxu0 0.0
    %261 = vmatprep.subr.mxu0 0.0
    %262 = vmatpush1.xpose.msra.mxu0 0.0
    %263 = vmatprep.subr.mxu0 0.0
    %264 = vmatpush1.xpose.msra.mxu0 0.0
    %265 = vmatprep.mubr.f32.mxu0 0.0
    %266 = vmatmul.mubr.f32.gmra.mrb[0].mxu0 %v197
    %v267 = vpop.f32.mrb[0].mxu0
    %v268 = vadd.f32 0.0, %v267
    %v269 = vpop.f32.mrb[0].mxu0
    %270 = vdwg.mxu0
    %v271 = vsel %vm195, %v268, -inf
    %272 = vmax.xlane.f32.xlu0 %v271
    %v273 = vpop.xlane.xlu0 %272
    %v274 = vsub.f32 %v268, %v273
    %v275 = vmul.f32 %v274, 1.442695
    %v276 = vpow.pop %v275
    %v277 = vsel %vm195, %v276, 0.0
    %278 = vadd.xlane.f32.xlu0 %v277
    %v279 = vpop.xlane.xlu0 %278
    %v280 = vrcp.pop %v279
    %v281 = vmul.f32 %v276, %v280
    %282 = vrot.lane.b32.xlu0 %v182, 64
    %v283 = vpop.permute.xlu0 %282
    %v286 = vsel %vm195, %v281, 0
    %288 = vmatprep.subr.mxu0 0.0
    %289 = vmatpush1.msra.mxu0 %v283
    %290 = vmatprep.subr.mxu0 0.0
    %291 = vmatpush1.msra.mxu0 0.0
    %292 = vmatprep.subr.mxu0 0.0
    %293 = vmatpush1.msra.mxu0 0.0
    %294 = vmatprep.subr.mxu0 0.0
    %295 = vmatpush1.msra.mxu0 0.0
    %296 = vmatprep.subr.mxu0 0.0
    %297 = vmatpush1.msra.mxu0 0.0
    %298 = vmatprep.subr.mxu0 0.0
    %299 = vmatpush1.msra.mxu0 0.0
    %300 = vmatprep.subr.mxu0 0.0
    %301 = vmatpush1.msra.mxu0 0.0
    %302 = vmatprep.subr.mxu0 0.0
    %303 = vmatpush1.msra.mxu0 0.0
    %304 = vmatprep.subr.mxu0 0.0
    %305 = vmatpush1.msra.mxu0 0.0
    %306 = vmatprep.subr.mxu0 0.0
    %307 = vmatpush1.msra.mxu0 0.0
    %308 = vmatprep.subr.mxu0 0.0
    %309 = vmatpush1.msra.mxu0 0.0
    %310 = vmatprep.subr.mxu0 0.0
    %311 = vmatpush1.msra.mxu0 0.0
    %312 = vmatprep.subr.mxu0 0.0
    %313 = vmatpush1.msra.mxu0 0.0
    %314 = vmatprep.subr.mxu0 0.0
    %315 = vmatpush1.msra.mxu0 0.0
    %316 = vmatprep.subr.mxu0 0.0
    %317 = vmatpush1.msra.mxu0 0.0
    %318 = vmatprep.subr.mxu0 0.0
    %319 = vmatpush1.msra.mxu0 0.0
    %320 = vmatprep.subr.mxu0 0.0
    %321 = vmatpush1.msra.mxu0 0.0
    %322 = vmatprep.subr.mxu0 0.0
    %323 = vmatpush1.msra.mxu0 0.0
    %324 = vmatprep.subr.mxu0 0.0
    %325 = vmatpush1.msra.mxu0 0.0
    %326 = vmatprep.subr.mxu0 0.0
    %327 = vmatpush1.msra.mxu0 0.0
    %328 = vmatprep.subr.mxu0 0.0
    %329 = vmatpush1.msra.mxu0 0.0
    %330 = vmatprep.subr.mxu0 0.0
    %331 = vmatpush1.msra.mxu0 0.0
    %332 = vmatprep.subr.mxu0 0.0
    %333 = vmatpush1.msra.mxu0 0.0
    %334 = vmatprep.subr.mxu0 0.0
    %335 = vmatpush1.msra.mxu0 0.0
    %336 = vmatprep.subr.mxu0 0.0
    %337 = vmatpush1.msra.mxu0 0.0
    %338 = vmatprep.subr.mxu0 0.0
    %339 = vmatpush1.msra.mxu0 0.0
    %340 = vmatprep.subr.mxu0 0.0
    %341 = vmatpush1.msra.mxu0 0.0
    %342 = vmatprep.subr.mxu0 0.0
    %343 = vmatpush1.msra.mxu0 0.0
    %344 = vmatprep.subr.mxu0 0.0
    %345 = vmatpush1.msra.mxu0 0.0
    %346 = vmatprep.subr.mxu0 0.0
    %347 = vmatpush1.msra.mxu0 0.0
    %348 = vmatprep.subr.mxu0 0.0
    %349 = vmatpush1.msra.mxu0 0.0
    %350 = vmatprep.subr.mxu0 0.0
    %351 = vmatpush1.msra.mxu0 0.0
    %352 = vmatprep.mubr.f32.mxu0 0.0
    %353 = vmatmul.mubr.f32.gmra.mrb[0].mxu0 %v286
    %v354 = vpop.f32.mrb[0].mxu0
    %v355 = vadd.f32 0.0, %v354
    %v356 = vpop.f32.mrb[0].mxu0
    %357 = vdwg.mxu0
    %358 = vst.msk [vmem:[#allocation2] sm:$0xff] %vm195, %v355
    %359 = vrot.lane.b32.xlu0 %v190, 120
    %v360 = vpop.permute.xlu0 %359
    %361 = vrot.lane.b32.xlu0 %v182, 88
    %v362 = vpop.permute.xlu0 %361
    %v363 = vsel %vm195, %v360, 0
    %v365 = vsel %vm195, %v362, 0
    %367 = vmatprep.subr.mxu0 0.0
    %368 = vmatpush1.xpose.msra.mxu0 %v365
    %369 = vmatprep.subr.mxu0 0.0
    %370 = vmatpush1.xpose.msra.mxu0 0.0
    %371 = vmatprep.subr.mxu0 0.0
    %372 = vmatpush1.xpose.msra.mxu0 0.0
    %373 = vmatprep.subr.mxu0 0.0
    %374 = vmatpush1.xpose.msra.mxu0 0.0
    %375 = vmatprep.subr.mxu0 0.0
    %376 = vmatpush1.xpose.msra.mxu0 0.0
    %377 = vmatprep.subr.mxu0 0.0
    %378 = vmatpush1.xpose.msra.mxu0 0.0
    %379 = vmatprep.subr.mxu0 0.0
    %380 = vmatpush1.xpose.msra.mxu0 0.0
    %381 = vmatprep.subr.mxu0 0.0
    %382 = vmatpush1.xpose.msra.mxu0 0.0
    %383 = vmatprep.subr.mxu0 0.0
    %384 = vmatpush1.xpose.msra.mxu0 0.0
    %385 = vmatprep.subr.mxu0 0.0
    %386 = vmatpush1.xpose.msra.mxu0 0.0
    %387 = vmatprep.subr.mxu0 0.0
    %388 = vmatpush1.xpose.msra.mxu0 0.0
    %389 = vmatprep.subr.mxu0 0.0
    %390 = vmatpush1.xpose.msra.mxu0 0.0
    %391 = vmatprep.subr.mxu0 0.0
    %392 = vmatpush1.xpose.msra.mxu0 0.0
    %393 = vmatprep.subr.mxu0 0.0
    %394 = vmatpush1.xpose.msra.mxu0 0.0
    %395 = vmatprep.subr.mxu0 0.0
    %396 = vmatpush1.xpose.msra.mxu0 0.0
    %397 = vmatprep.subr.mxu0 0.0
    %398 = vmatpush1.xpose.msra.mxu0 0.0
    %399 = vmatprep.subr.mxu0 0.0
    %400 = vmatpush1.xpose.msra.mxu0 0.0
    %401 = vmatprep.subr.mxu0 0.0
    %402 = vmatpush1.xpose.msra.mxu0 0.0
    %403 = vmatprep.subr.mxu0 0.0
    %404 = vmatpush1.xpose.msra.mxu0 0.0
    %405 = vmatprep.subr.mxu0 0.0
    %406 = vmatpush1.xpose.msra.mxu0 0.0
    %407 = vmatprep.subr.mxu0 0.0
    %408 = vmatpush1.xpose.msra.mxu0 0.0
    %409 = vmatprep.subr.mxu0 0.0
    %410 = vmatpush1.xpose.msra.mxu0 0.0
    %411 = vmatprep.subr.mxu0 0.0
    %412 = vmatpush1.xpose.msra.mxu0 0.0
    %413 = vmatprep.subr.mxu0 0.0
    %414 = vmatpush1.xpose.msra.mxu0 0.0
    %415 = vmatprep.subr.mxu0 0.0
    %416 = vmatpush1.xpose.msra.mxu0 0.0
    %417 = vmatprep.subr.mxu0 0.0
    %418 = vmatpush1.xpose.msra.mxu0 0.0
    %419 = vmatprep.subr.mxu0 0.0
    %420 = vmatpush1.xpose.msra.mxu0 0.0
    %421 = vmatprep.subr.mxu0 0.0
    %422 = vmatpush1.xpose.msra.mxu0 0.0
    %423 = vmatprep.subr.mxu0 0.0
    %424 = vmatpush1.xpose.msra.mxu0 0.0
    %425 = vmatprep.subr.mxu0 0.0
    %426 = vmatpush1.xpose.msra.mxu0 0.0
    %427 = vmatprep.subr.mxu0 0.0
    %428 = vmatpush1.xpose.msra.mxu0 0.0
    %429 = vmatprep.subr.mxu0 0.0
    %430 = vmatpush1.xpose.msra.mxu0 0.0
    %431 = vmatprep.mubr.f32.mxu0 0.0
    %432 = vmatmul.mubr.f32.gmra.mrb[0].mxu0 %v363
    %v433 = vpop.f32.mrb[0].mxu0
    %v434 = vadd.f32 0.0, %v433
    %v435 = vpop.f32.mrb[0].mxu0
    %436 = vdwg.mxu0
    %v437 = vsel %vm195, %v434, -inf
    %438 = vmax.xlane.f32.xlu0 %v437
    %v439 = vpop.xlane.xlu0 %438
    %v440 = vsub.f32 %v434, %v439
    %v441 = vmul.f32 %v440, 1.442695
    %v442 = vpow.pop %v441
    %v443 = vsel %vm195, %v442, 0.0
    %444 = vadd.xlane.f32.xlu0 %v443
    %v445 = vpop.xlane.xlu0 %444
    %v446 = vrcp.pop %v445
    %v447 = vmul.f32 %v442, %v446
    %448 = vrot.lane.b32.xlu0 %v182, 56
    %v449 = vpop.permute.xlu0 %448
    %v452 = vsel %vm195, %v447, 0
    %454 = vmatprep.subr.mxu0 0.0
    %455 = vmatpush1.msra.mxu0 %v449
    %456 = vmatprep.subr.mxu0 0.0
    %457 = vmatpush1.msra.mxu0 0.0
    %458 = vmatprep.subr.mxu0 0.0
    %459 = vmatpush1.msra.mxu0 0.0
    %460 = vmatprep.subr.mxu0 0.0
    %461 = vmatpush1.msra.mxu0 0.0
    %462 = vmatprep.subr.mxu0 0.0
    %463 = vmatpush1.msra.mxu0 0.0
    %464 = vmatprep.subr.mxu0 0.0
    %465 = vmatpush1.msra.mxu0 0.0
    %466 = vmatprep.subr.mxu0 0.0
    %467 = vmatpush1.msra.mxu0 0.0
    %468 = vmatprep.subr.mxu0 0.0
    %469 = vmatpush1.msra.mxu0 0.0
    %470 = vmatprep.subr.mxu0 0.0
    %471 = vmatpush1.msra.mxu0 0.0
    %472 = vmatprep.subr.mxu0 0.0
    %473 = vmatpush1.msra.mxu0 0.0
    %474 = vmatprep.subr.mxu0 0.0
    %475 = vmatpush1.msra.mxu0 0.0
    %476 = vmatprep.subr.mxu0 0.0
    %477 = vmatpush1.msra.mxu0 0.0
    %478 = vmatprep.subr.mxu0 0.0
    %479 = vmatpush1.msra.mxu0 0.0
    %480 = vmatprep.subr.mxu0 0.0
    %481 = vmatpush1.msra.mxu0 0.0
    %482 = vmatprep.subr.mxu0 0.0
    %483 = vmatpush1.msra.mxu0 0.0
    %484 = vmatprep.subr.mxu0 0.0
    %485 = vmatpush1.msra.mxu0 0.0
    %486 = vmatprep.subr.mxu0 0.0
    %487 = vmatpush1.msra.mxu0 0.0
    %488 = vmatprep.subr.mxu0 0.0
    %489 = vmatpush1.msra.mxu0 0.0
    %490 = vmatprep.subr.mxu0 0.0
    %491 = vmatpush1.msra.mxu0 0.0
    %492 = vmatprep.subr.mxu0 0.0
    %493 = vmatpush1.msra.mxu0 0.0
    %494 = vmatprep.subr.mxu0 0.0
    %495 = vmatpush1.msra.mxu0 0.0
    %496 = vmatprep.subr.mxu0 0.0
    %497 = vmatpush1.msra.mxu0 0.0
    %498 = vmatprep.subr.mxu0 0.0
    %499 = vmatpush1.msra.mxu0 0.0
    %500 = vmatprep.subr.mxu0 0.0
    %501 = vmatpush1.msra.mxu0 0.0
    %502 = vmatprep.subr.mxu0 0.0
    %503 = vmatpush1.msra.mxu0 0.0
    %504 = vmatprep.subr.mxu0 0.0
    %505 = vmatpush1.msra.mxu0 0.0
    %506 = vmatprep.subr.mxu0 0.0
    %507 = vmatpush1.msra.mxu0 0.0
    %508 = vmatprep.subr.mxu0 0.0
    %509 = vmatpush1.msra.mxu0 0.0
    %510 = vmatprep.subr.mxu0 0.0
    %511 = vmatpush1.msra.mxu0 0.0
    %512 = vmatprep.subr.mxu0 0.0
    %513 = vmatpush1.msra.mxu0 0.0
    %514 = vmatprep.subr.mxu0 0.0
    %515 = vmatpush1.msra.mxu0 0.0
    %516 = vmatprep.subr.mxu0 0.0
    %517 = vmatpush1.msra.mxu0 0.0
    %518 = vmatprep.mubr.f32.mxu0 0.0
    %519 = vmatmul.mubr.f32.gmra.mrb[0].mxu0 %v452
    %v520 = vpop.f32.mrb[0].mxu0
    %v521 = vadd.f32 0.0, %v520
    %v522 = vpop.f32.mrb[0].mxu0
    %523 = vdwg.mxu0
    %525 = vrot.lane.b32.xlu0 %v521, 8
    %v526 = vpop.permute.xlu0 %525
    %vm528 = vcmask 130112
    %529 = vst.msk [vmem:[#allocation2] sm:$0xff] %vm528, %v526
    %530 = vrot.lane.b32.xlu0 %v190, 112
    %v531 = vpop.permute.xlu0 %530
    %532 = vrot.lane.b32.xlu0 %v182, 80
    %v533 = vpop.permute.xlu0 %532
    %v534 = vsel %vm195, %v531, 0
    %v536 = vsel %vm195, %v533, 0
    %538 = vmatprep.subr.mxu0 0.0
    %539 = vmatpush1.xpose.msra.mxu0 %v536
    %540 = vmatprep.subr.mxu0 0.0
    %541 = vmatpush1.xpose.msra.mxu0 0.0
    %542 = vmatprep.subr.mxu0 0.0
    %543 = vmatpush1.xpose.msra.mxu0 0.0
    %544 = vmatprep.subr.mxu0 0.0
    %545 = vmatpush1.xpose.msra.mxu0 0.0
    %546 = vmatprep.subr.mxu0 0.0
    %547 = vmatpush1.xpose.msra.mxu0 0.0
    %548 = vmatprep.subr.mxu0 0.0
    %549 = vmatpush1.xpose.msra.mxu0 0.0
    %550 = vmatprep.subr.mxu0 0.0
    %551 = vmatpush1.xpose.msra.mxu0 0.0
    %552 = vmatprep.subr.mxu0 0.0
    %553 = vmatpush1.xpose.msra.mxu0 0.0
    %554 = vmatprep.subr.mxu0 0.0
    %555 = vmatpush1.xpose.msra.mxu0 0.0
    %556 = vmatprep.subr.mxu0 0.0
    %557 = vmatpush1.xpose.msra.mxu0 0.0
    %558 = vmatprep.subr.mxu0 0.0
    %559 = vmatpush1.xpose.msra.mxu0 0.0
    %560 = vmatprep.subr.mxu0 0.0
    %561 = vmatpush1.xpose.msra.mxu0 0.0
    %562 = vmatprep.subr.mxu0 0.0
    %563 = vmatpush1.xpose.msra.mxu0 0.0
    %564 = vmatprep.subr.mxu0 0.0
    %565 = vmatpush1.xpose.msra.mxu0 0.0
    %566 = vmatprep.subr.mxu0 0.0
    %567 = vmatpush1.xpose.msra.mxu0 0.0
    %568 = vmatprep.subr.mxu0 0.0
    %569 = vmatpush1.xpose.msra.mxu0 0.0
    %570 = vmatprep.subr.mxu0 0.0
    %571 = vmatpush1.xpose.msra.mxu0 0.0
    %572 = vmatprep.subr.mxu0 0.0
    %573 = vmatpush1.xpose.msra.mxu0 0.0
    %574 = vmatprep.subr.mxu0 0.0
    %575 = vmatpush1.xpose.msra.mxu0 0.0
    %576 = vmatprep.subr.mxu0 0.0
    %577 = vmatpush1.xpose.msra.mxu0 0.0
    %578 = vmatprep.subr.mxu0 0.0
    %579 = vmatpush1.xpose.msra.mxu0 0.0
    %580 = vmatprep.subr.mxu0 0.0
    %581 = vmatpush1.xpose.msra.mxu0 0.0
    %582 = vmatprep.subr.mxu0 0.0
    %583 = vmatpush1.xpose.msra.mxu0 0.0
    %584 = vmatprep.subr.mxu0 0.0
    %585 = vmatpush1.xpose.msra.mxu0 0.0
    %586 = vmatprep.subr.mxu0 0.0
    %587 = vmatpush1.xpose.msra.mxu0 0.0
    %588 = vmatprep.subr.mxu0 0.0
    %589 = vmatpush1.xpose.msra.mxu0 0.0
    %590 = vmatprep.subr.mxu0 0.0
    %591 = vmatpush1.xpose.msra.mxu0 0.0
    %592 = vmatprep.subr.mxu0 0.0
    %593 = vmatpush1.xpose.msra.mxu0 0.0
    %594 = vmatprep.subr.mxu0 0.0
    %595 = vmatpush1.xpose.msra.mxu0 0.0
    %596 = vmatprep.subr.mxu0 0.0
    %597 = vmatpush1.xpose.msra.mxu0 0.0
    %598 = vmatprep.subr.mxu0 0.0
    %599 = vmatpush1.xpose.msra.mxu0 0.0
    %600 = vmatprep.subr.mxu0 0.0
    %601 = vmatpush1.xpose.msra.mxu0 0.0
    %602 = vmatprep.mubr.f32.mxu0 0.0
    %603 = vmatmul.mubr.f32.gmra.mrb[0].mxu0 %v534
    %v604 = vpop.f32.mrb[0].mxu0
    %v605 = vadd.f32 0.0, %v604
    %v606 = vpop.f32.mrb[0].mxu0
    %607 = vdwg.mxu0
    %v608 = vsel %vm195, %v605, -inf
    %609 = vmax.xlane.f32.xlu0 %v608
    %v610 = vpop.xlane.xlu0 %609
    %v611 = vsub.f32 %v605, %v610
    %v612 = vmul.f32 %v611, 1.442695
    %v613 = vpow.pop %v612
    %v614 = vsel %vm195, %v613, 0.0
    %615 = vadd.xlane.f32.xlu0 %v614
    %v616 = vpop.xlane.xlu0 %615
    %v617 = vrcp.pop %v616
    %v618 = vmul.f32 %v613, %v617
    %619 = vrot.lane.b32.xlu0 %v182, 48
    %v620 = vpop.permute.xlu0 %619
    %v623 = vsel %vm195, %v618, 0
    %625 = vmatprep.subr.mxu0 0.0
    %626 = vmatpush1.msra.mxu0 %v620
    %627 = vmatprep.subr.mxu0 0.0
    %628 = vmatpush1.msra.mxu0 0.0
    %629 = vmatprep.subr.mxu0 0.0
    %630 = vmatpush1.msra.mxu0 0.0
    %631 = vmatprep.subr.mxu0 0.0
    %632 = vmatpush1.msra.mxu0 0.0
    %633 = vmatprep.subr.mxu0 0.0
    %634 = vmatpush1.msra.mxu0 0.0
    %635 = vmatprep.subr.mxu0 0.0
    %636 = vmatpush1.msra.mxu0 0.0
    %637 = vmatprep.subr.mxu0 0.0
    %638 = vmatpush1.msra.mxu0 0.0
    %639 = vmatprep.subr.mxu0 0.0
    %640 = vmatpush1.msra.mxu0 0.0
    %641 = vmatprep.subr.mxu0 0.0
    %642 = vmatpush1.msra.mxu0 0.0
    %643 = vmatprep.subr.mxu0 0.0
    %644 = vmatpush1.msra.mxu0 0.0
    %645 = vmatprep.subr.mxu0 0.0
    %646 = vmatpush1.msra.mxu0 0.0
    %647 = vmatprep.subr.mxu0 0.0
    %648 = vmatpush1.msra.mxu0 0.0
    %649 = vmatprep.subr.mxu0 0.0
    %650 = vmatpush1.msra.mxu0 0.0
    %651 = vmatprep.subr.mxu0 0.0
    %652 = vmatpush1.msra.mxu0 0.0
    %653 = vmatprep.subr.mxu0 0.0
    %654 = vmatpush1.msra.mxu0 0.0
    %655 = vmatprep.subr.mxu0 0.0
    %656 = vmatpush1.msra.mxu0 0.0
    %657 = vmatprep.subr.mxu0 0.0
    %658 = vmatpush1.msra.mxu0 0.0
    %659 = vmatprep.subr.mxu0 0.0
    %660 = vmatpush1.msra.mxu0 0.0
    %661 = vmatprep.subr.mxu0 0.0
    %662 = vmatpush1.msra.mxu0 0.0
    %663 = vmatprep.subr.mxu0 0.0
    %664 = vmatpush1.msra.mxu0 0.0
    %665 = vmatprep.subr.mxu0 0.0
    %666 = vmatpush1.msra.mxu0 0.0
    %667 = vmatprep.subr.mxu0 0.0
    %668 = vmatpush1.msra.mxu0 0.0
    %669 = vmatprep.subr.mxu0 0.0
    %670 = vmatpush1.msra.mxu0 0.0
    %671 = vmatprep.subr.mxu0 0.0
    %672 = vmatpush1.msra.mxu0 0.0
    %673 = vmatprep.subr.mxu0 0.0
    %674 = vmatpush1.msra.mxu0 0.0
    %675 = vmatprep.subr.mxu0 0.0
    %676 = vmatpush1.msra.mxu0 0.0
    %677 = vmatprep.subr.mxu0 0.0
    %678 = vmatpush1.msra.mxu0 0.0
    %679 = vmatprep.subr.mxu0 0.0
    %680 = vmatpush1.msra.mxu0 0.0
    %681 = vmatprep.subr.mxu0 0.0
    %682 = vmatpush1.msra.mxu0 0.0
    %683 = vmatprep.subr.mxu0 0.0
    %684 = vmatpush1.msra.mxu0 0.0
    %685 = vmatprep.subr.mxu0 0.0
    %686 = vmatpush1.msra.mxu0 0.0
    %687 = vmatprep.subr.mxu0 0.0
    %688 = vmatpush1.msra.mxu0 0.0
    %689 = vmatprep.mubr.f32.mxu0 0.0
    %690 = vmatmul.mubr.f32.gmra.mrb[0].mxu0 %v623
    %v691 = vpop.f32.mrb[0].mxu0
    %v692 = vadd.f32 0.0, %v691
    %v693 = vpop.f32.mrb[0].mxu0
    %694 = vdwg.mxu0
    %696 = vrot.lane.b32.xlu0 %v692, 16
    %v697 = vpop.permute.xlu0 %696
    %vm699 = vcmask 195712
    %700 = vst.msk [vmem:[#allocation2] sm:$0xff] %vm699, %v697
    %701 = vrot.lane.b32.xlu0 %v190, 104
    %v702 = vpop.permute.xlu0 %701
    %703 = vrot.lane.b32.xlu0 %v182, 72
    %v704 = vpop.permute.xlu0 %703
    %v705 = vsel %vm195, %v702, 0
    %v707 = vsel %vm195, %v704, 0
    %709 = vmatprep.subr.mxu0 0.0
    %710 = vmatpush1.xpose.msra.mxu0 %v707
    %711 = vmatprep.subr.mxu0 0.0
    %712 = vmatpush1.xpose.msra.mxu0 0.0
    %713 = vmatprep.subr.mxu0 0.0
    %714 = vmatpush1.xpose.msra.mxu0 0.0
    %715 = vmatprep.subr.mxu0 0.0
    %716 = vmatpush1.xpose.msra.mxu0 0.0
    %717 = vmatprep.subr.mxu0 0.0
    %718 = vmatpush1.xpose.msra.mxu0 0.0
    %719 = vmatprep.subr.mxu0 0.0
    %720 = vmatpush1.xpose.msra.mxu0 0.0
    %721 = vmatprep.subr.mxu0 0.0
    %722 = vmatpush1.xpose.msra.mxu0 0.0
    %723 = vmatprep.subr.mxu0 0.0
    %724 = vmatpush1.xpose.msra.mxu0 0.0
    %725 = vmatprep.subr.mxu0 0.0
    %726 = vmatpush1.xpose.msra.mxu0 0.0
    %727 = vmatprep.subr.mxu0 0.0
    %728 = vmatpush1.xpose.msra.mxu0 0.0
    %729 = vmatprep.subr.mxu0 0.0
    %730 = vmatpush1.xpose.msra.mxu0 0.0
    %731 = vmatprep.subr.mxu0 0.0
    %732 = vmatpush1.xpose.msra.mxu0 0.0
    %733 = vmatprep.subr.mxu0 0.0
    %734 = vmatpush1.xpose.msra.mxu0 0.0
    %735 = vmatprep.subr.mxu0 0.0
    %736 = vmatpush1.xpose.msra.mxu0 0.0
    %737 = vmatprep.subr.mxu0 0.0
    %738 = vmatpush1.xpose.msra.mxu0 0.0
    %739 = vmatprep.subr.mxu0 0.0
    %740 = vmatpush1.xpose.msra.mxu0 0.0
    %741 = vmatprep.subr.mxu0 0.0
    %742 = vmatpush1.xpose.msra.mxu0 0.0
    %743 = vmatprep.subr.mxu0 0.0
    %744 = vmatpush1.xpose.msra.mxu0 0.0
    %745 = vmatprep.subr.mxu0 0.0
    %746 = vmatpush1.xpose.msra.mxu0 0.0
    %747 = vmatprep.subr.mxu0 0.0
    %748 = vmatpush1.xpose.msra.mxu0 0.0
    %749 = vmatprep.subr.mxu0 0.0
    %750 = vmatpush1.xpose.msra.mxu0 0.0
    %751 = vmatprep.subr.mxu0 0.0
    %752 = vmatpush1.xpose.msra.mxu0 0.0
    %753 = vmatprep.subr.mxu0 0.0
    %754 = vmatpush1.xpose.msra.mxu0 0.0
    %755 = vmatprep.subr.mxu0 0.0
    %756 = vmatpush1.xpose.msra.mxu0 0.0
    %757 = vmatprep.subr.mxu0 0.0
    %758 = vmatpush1.xpose.msra.mxu0 0.0
    %759 = vmatprep.subr.mxu0 0.0
    %760 = vmatpush1.xpose.msra.mxu0 0.0
    %761 = vmatprep.subr.mxu0 0.0
    %762 = vmatpush1.xpose.msra.mxu0 0.0
    %763 = vmatprep.subr.mxu0 0.0
    %764 = vmatpush1.xpose.msra.mxu0 0.0
    %765 = vmatprep.subr.mxu0 0.0
    %766 = vmatpush1.xpose.msra.mxu0 0.0
    %767 = vmatprep.subr.mxu0 0.0
    %768 = vmatpush1.xpose.msra.mxu0 0.0
    %769 = vmatprep.subr.mxu0 0.0
    %770 = vmatpush1.xpose.msra.mxu0 0.0
    %771 = vmatprep.subr.mxu0 0.0
    %772 = vmatpush1.xpose.msra.mxu0 0.0
    %773 = vmatprep.mubr.f32.mxu0 0.0
    %774 = vmatmul.mubr.f32.gmra.mrb[0].mxu0 %v705
    %v775 = vpop.f32.mrb[0].mxu0
    %v776 = vadd.f32 0.0, %v775
    %v777 = vpop.f32.mrb[0].mxu0
    %778 = vdwg.mxu0
    %v779 = vsel %vm195, %v776, -inf
    %780 = vmax.xlane.f32.xlu0 %v779
    %v781 = vpop.xlane.xlu0 %780
    %v782 = vsub.f32 %v776, %v781
    %v783 = vmul.f32 %v782, 1.442695
    %v784 = vpow.pop %v783
    %v785 = vsel %vm195, %v784, 0.0
    %786 = vadd.xlane.f32.xlu0 %v785
    %v787 = vpop.xlane.xlu0 %786
    %v788 = vrcp.pop %v787
    %v789 = vmul.f32 %v784, %v788
    %790 = vrot.lane.b32.xlu0 %v182, 40
    %v791 = vpop.permute.xlu0 %790
    %v794 = vsel %vm195, %v789, 0
    %796 = vmatprep.subr.mxu0 0.0
    %797 = vmatpush1.msra.mxu0 %v791
    %798 = vmatprep.subr.mxu0 0.0
    %799 = vmatpush1.msra.mxu0 0.0
    %800 = vmatprep.subr.mxu0 0.0
    %801 = vmatpush1.msra.mxu0 0.0
    %802 = vmatprep.subr.mxu0 0.0
    %803 = vmatpush1.msra.mxu0 0.0
    %804 = vmatprep.subr.mxu0 0.0
    %805 = vmatpush1.msra.mxu0 0.0
    %806 = vmatprep.subr.mxu0 0.0
    %807 = vmatpush1.msra.mxu0 0.0
    %808 = vmatprep.subr.mxu0 0.0
    %809 = vmatpush1.msra.mxu0 0.0
    %810 = vmatprep.subr.mxu0 0.0
    %811 = vmatpush1.msra.mxu0 0.0
    %812 = vmatprep.subr.mxu0 0.0
    %813 = vmatpush1.msra.mxu0 0.0
    %814 = vmatprep.subr.mxu0 0.0
    %815 = vmatpush1.msra.mxu0 0.0
    %816 = vmatprep.subr.mxu0 0.0
    %817 = vmatpush1.msra.mxu0 0.0
    %818 = vmatprep.subr.mxu0 0.0
    %819 = vmatpush1.msra.mxu0 0.0
    %820 = vmatprep.subr.mxu0 0.0
    %821 = vmatpush1.msra.mxu0 0.0
    %822 = vmatprep.subr.mxu0 0.0
    %823 = vmatpush1.msra.mxu0 0.0
    %824 = vmatprep.subr.mxu0 0.0
    %825 = vmatpush1.msra.mxu0 0.0
    %826 = vmatprep.subr.mxu0 0.0
    %827 = vmatpush1.msra.mxu0 0.0
    %828 = vmatprep.subr.mxu0 0.0
    %829 = vmatpush1.msra.mxu0 0.0
    %830 = vmatprep.subr.mxu0 0.0
    %831 = vmatpush1.msra.mxu0 0.0
    %832 = vmatprep.subr.mxu0 0.0
    %833 = vmatpush1.msra.mxu0 0.0
    %834 = vmatprep.subr.mxu0 0.0
    %835 = vmatpush1.msra.mxu0 0.0
    %836 = vmatprep.subr.mxu0 0.0
    %837 = vmatpush1.msra.mxu0 0.0
    %838 = vmatprep.subr.mxu0 0.0
    %839 = vmatpush1.msra.mxu0 0.0
    %840 = vmatprep.subr.mxu0 0.0
    %841 = vmatpush1.msra.mxu0 0.0
    %842 = vmatprep.subr.mxu0 0.0
    %843 = vmatpush1.msra.mxu0 0.0
    %844 = vmatprep.subr.mxu0 0.0
    %845 = vmatpush1.msra.mxu0 0.0
    %846 = vmatprep.subr.mxu0 0.0
    %847 = vmatpush1.msra.mxu0 0.0
    %848 = vmatprep.subr.mxu0 0.0
    %849 = vmatpush1.msra.mxu0 0.0
    %850 = vmatprep.subr.mxu0 0.0
    %851 = vmatpush1.msra.mxu0 0.0
    %852 = vmatprep.subr.mxu0 0.0
    %853 = vmatpush1.msra.mxu0 0.0
    %854 = vmatprep.subr.mxu0 0.0
    %855 = vmatpush1.msra.mxu0 0.0
    %856 = vmatprep.subr.mxu0 0.0
    %857 = vmatpush1.msra.mxu0 0.0
    %858 = vmatprep.subr.mxu0 0.0
    %859 = vmatpush1.msra.mxu0 0.0
    %860 = vmatprep.mubr.f32.mxu0 0.0
    %861 = vmatmul.mubr.f32.gmra.mrb[0].mxu0 %v794
    %v862 = vpop.f32.mrb[0].mxu0
    %v863 = vadd.f32 0.0, %v862
    %v864 = vpop.f32.mrb[0].mxu0
    %865 = vdwg.mxu0
    %867 = vrot.lane.b32.xlu0 %v863, 24
    %v868 = vpop.permute.xlu0 %867
    %vm870 = vcmask 261312
    %871 = vst.msk [vmem:[#allocation2] sm:$0xff] %vm870, %v868
    %873 = vrot.lane.b32.xlu0 %v187, 96
    %v874 = vpop.permute.xlu0 %873
    %v876 = vsel %vm195, %v191, 0
    %v878 = vsel %vm195, %v874, 0
    %880 = vmatprep.subr.mxu0 0.0
    %881 = vmatpush1.xpose.msra.mxu0 %v878
    %882 = vmatprep.subr.mxu0 0.0
    %883 = vmatpush1.xpose.msra.mxu0 0.0
    %884 = vmatprep.subr.mxu0 0.0
    %885 = vmatpush1.xpose.msra.mxu0 0.0
    %886 = vmatprep.subr.mxu0 0.0
    %887 = vmatpush1.xpose.msra.mxu0 0.0
    %888 = vmatprep.subr.mxu0 0.0
    %889 = vmatpush1.xpose.msra.mxu0 0.0
    %890 = vmatprep.subr.mxu0 0.0
    %891 = vmatpush1.xpose.msra.mxu0 0.0
    %892 = vmatprep.subr.mxu0 0.0
    %893 = vmatpush1.xpose.msra.mxu0 0.0
    %894 = vmatprep.subr.mxu0 0.0
    %895 = vmatpush1.xpose.msra.mxu0 0.0
    %896 = vmatprep.subr.mxu0 0.0
    %897 = vmatpush1.xpose.msra.mxu0 0.0
    %898 = vmatprep.subr.mxu0 0.0
    %899 = vmatpush1.xpose.msra.mxu0 0.0
    %900 = vmatprep.subr.mxu0 0.0
    %901 = vmatpush1.xpose.msra.mxu0 0.0
    %902 = vmatprep.subr.mxu0 0.0
    %903 = vmatpush1.xpose.msra.mxu0 0.0
    %904 = vmatprep.subr.mxu0 0.0
    %905 = vmatpush1.xpose.msra.mxu0 0.0
    %906 = vmatprep.subr.mxu0 0.0
    %907 = vmatpush1.xpose.msra.mxu0 0.0
    %908 = vmatprep.subr.mxu0 0.0
    %909 = vmatpush1.xpose.msra.mxu0 0.0
    %910 = vmatprep.subr.mxu0 0.0
    %911 = vmatpush1.xpose.msra.mxu0 0.0
    %912 = vmatprep.subr.mxu0 0.0
    %913 = vmatpush1.xpose.msra.mxu0 0.0
    %914 = vmatprep.subr.mxu0 0.0
    %915 = vmatpush1.xpose.msra.mxu0 0.0
    %916 = vmatprep.subr.mxu0 0.0
    %917 = vmatpush1.xpose.msra.mxu0 0.0
    %918 = vmatprep.subr.mxu0 0.0
    %919 = vmatpush1.xpose.msra.mxu0 0.0
    %920 = vmatprep.subr.mxu0 0.0
    %921 = vmatpush1.xpose.msra.mxu0 0.0
    %922 = vmatprep.subr.mxu0 0.0
    %923 = vmatpush1.xpose.msra.mxu0 0.0
    %924 = vmatprep.subr.mxu0 0.0
    %925 = vmatpush1.xpose.msra.mxu0 0.0
    %926 = vmatprep.subr.mxu0 0.0
    %927 = vmatpush1.xpose.msra.mxu0 0.0
    %928 = vmatprep.subr.mxu0 0.0
    %929 = vmatpush1.xpose.msra.mxu0 0.0
    %930 = vmatprep.subr.mxu0 0.0
    %931 = vmatpush1.xpose.msra.mxu0 0.0
    %932 = vmatprep.subr.mxu0 0.0
    %933 = vmatpush1.xpose.msra.mxu0 0.0
    %934 = vmatprep.subr.mxu0 0.0
    %935 = vmatpush1.xpose.msra.mxu0 0.0
    %936 = vmatprep.subr.mxu0 0.0
    %937 = vmatpush1.xpose.msra.mxu0 0.0
    %938 = vmatprep.subr.mxu0 0.0
    %939 = vmatpush1.xpose.msra.mxu0 0.0
    %940 = vmatprep.subr.mxu0 0.0
    %941 = vmatpush1.xpose.msra.mxu0 0.0
    %942 = vmatprep.subr.mxu0 0.0
    %943 = vmatpush1.xpose.msra.mxu0 0.0
    %944 = vmatprep.mubr.f32.mxu0 0.0
    %945 = vmatmul.mubr.f32.gmra.mrb[0].mxu0 %v876
    %v946 = vpop.f32.mrb[0].mxu0
    %v947 = vadd.f32 0.0, %v946
    %v948 = vpop.f32.mrb[0].mxu0
    %949 = vdwg.mxu0
    %v950 = vsel %vm195, %v947, -inf
    %951 = vmax.xlane.f32.xlu0 %v950
    %v952 = vpop.xlane.xlu0 %951
    %v953 = vsub.f32 %v947, %v952
    %v954 = vmul.f32 %v953, 1.442695
    %v955 = vpow.pop %v954
    %v956 = vsel %vm195, %v955, 0.0
    %957 = vadd.xlane.f32.xlu0 %v956
    %v958 = vpop.xlane.xlu0 %957
    %v959 = vrcp.pop %v958
    %v960 = vmul.f32 %v955, %v959
    %961 = vrot.lane.b32.xlu0 %v187, 64
    %v962 = vpop.permute.xlu0 %961
    %v965 = vsel %vm195, %v960, 0
    %967 = vmatprep.subr.mxu0 0.0
    %968 = vmatpush1.msra.mxu0 %v962
    %969 = vmatprep.subr.mxu0 0.0
    %970 = vmatpush1.msra.mxu0 0.0
    %971 = vmatprep.subr.mxu0 0.0
    %972 = vmatpush1.msra.mxu0 0.0
    %973 = vmatprep.subr.mxu0 0.0
    %974 = vmatpush1.msra.mxu0 0.0
    %975 = vmatprep.subr.mxu0 0.0
    %976 = vmatpush1.msra.mxu0 0.0
    %977 = vmatprep.subr.mxu0 0.0
    %978 = vmatpush1.msra.mxu0 0.0
    %979 = vmatprep.subr.mxu0 0.0
    %980 = vmatpush1.msra.mxu0 0.0
    %981 = vmatprep.subr.mxu0 0.0
    %982 = vmatpush1.msra.mxu0 0.0
    %983 = vmatprep.subr.mxu0 0.0
    %984 = vmatpush1.msra.mxu0 0.0
    %985 = vmatprep.subr.mxu0 0.0
    %986 = vmatpush1.msra.mxu0 0.0
    %987 = vmatprep.subr.mxu0 0.0
    %988 = vmatpush1.msra.mxu0 0.0
    %989 = vmatprep.subr.mxu0 0.0
    %990 = vmatpush1.msra.mxu0 0.0
    %991 = vmatprep.subr.mxu0 0.0
    %992 = vmatpush1.msra.mxu0 0.0
    %993 = vmatprep.subr.mxu0 0.0
    %994 = vmatpush1.msra.mxu0 0.0
    %995 = vmatprep.subr.mxu0 0.0
    %996 = vmatpush1.msra.mxu0 0.0
    %997 = vmatprep.subr.mxu0 0.0
    %998 = vmatpush1.msra.mxu0 0.0
    %999 = vmatprep.subr.mxu0 0.0
    %1000 = vmatpush1.msra.mxu0 0.0
    %1001 = vmatprep.subr.mxu0 0.0
    %1002 = vmatpush1.msra.mxu0 0.0
    %1003 = vmatprep.subr.mxu0 0.0
    %1004 = vmatpush1.msra.mxu0 0.0
    %1005 = vmatprep.subr.mxu0 0.0
    %1006 = vmatpush1.msra.mxu0 0.0
    %1007 = vmatprep.subr.mxu0 0.0
    %1008 = vmatpush1.msra.mxu0 0.0
    %1009 = vmatprep.subr.mxu0 0.0
    %1010 = vmatpush1.msra.mxu0 0.0
    %1011 = vmatprep.subr.mxu0 0.0
    %1012 = vmatpush1.msra.mxu0 0.0
    %1013 = vmatprep.subr.mxu0 0.0
    %1014 = vmatpush1.msra.mxu0 0.0
    %1015 = vmatprep.subr.mxu0 0.0
    %1016 = vmatpush1.msra.mxu0 0.0
    %1017 = vmatprep.subr.mxu0 0.0
    %1018 = vmatpush1.msra.mxu0 0.0
    %1019 = vmatprep.subr.mxu0 0.0
    %1020 = vmatpush1.msra.mxu0 0.0
    %1021 = vmatprep.subr.mxu0 0.0
    %1022 = vmatpush1.msra.mxu0 0.0
    %1023 = vmatprep.subr.mxu0 0.0
    %1024 = vmatpush1.msra.mxu0 0.0
    %1025 = vmatprep.subr.mxu0 0.0
    %1026 = vmatpush1.msra.mxu0 0.0
    %1027 = vmatprep.subr.mxu0 0.0
    %1028 = vmatpush1.msra.mxu0 0.0
    %1029 = vmatprep.subr.mxu0 0.0
    %1030 = vmatpush1.msra.mxu0 0.0
    %1031 = vmatprep.mubr.f32.mxu0 0.0
    %1032 = vmatmul.mubr.f32.gmra.mrb[0].mxu0 %v965
    %v1033 = vpop.f32.mrb[0].mxu0
    %v1034 = vadd.f32 0.0, %v1033
    %v1035 = vpop.f32.mrb[0].mxu0
    %1036 = vdwg.mxu0
    %1037 = vst.msk [vmem:[#allocation2 + $0x8] sm:$0xff] %vm195, %v1034
    %1038 = vrot.lane.b32.xlu0 %v191, 120
    %v1039 = vpop.permute.xlu0 %1038
    %1040 = vrot.lane.b32.xlu0 %v187, 88
    %v1041 = vpop.permute.xlu0 %1040
    %v1042 = vsel %vm195, %v1039, 0
    %v1044 = vsel %vm195, %v1041, 0
    %1046 = vmatprep.subr.mxu0 0.0
    %1047 = vmatpush1.xpose.msra.mxu0 %v1044
    %1048 = vmatprep.subr.mxu0 0.0
    %1049 = vmatpush1.xpose.msra.mxu0 0.0
    %1050 = vmatprep.subr.mxu0 0.0
    %1051 = vmatpush1.xpose.msra.mxu0 0.0
    %1052 = vmatprep.subr.mxu0 0.0
    %1053 = vmatpush1.xpose.msra.mxu0 0.0
    %1054 = vmatprep.subr.mxu0 0.0
    %1055 = vmatpush1.xpose.msra.mxu0 0.0
    %1056 = vmatprep.subr.mxu0 0.0
    %1057 = vmatpush1.xpose.msra.mxu0 0.0
    %1058 = vmatprep.subr.mxu0 0.0
    %1059 = vmatpush1.xpose.msra.mxu0 0.0
    %1060 = vmatprep.subr.mxu0 0.0
    %1061 = vmatpush1.xpose.msra.mxu0 0.0
    %1062 = vmatprep.subr.mxu0 0.0
    %1063 = vmatpush1.xpose.msra.mxu0 0.0
    %1064 = vmatprep.subr.mxu0 0.0
    %1065 = vmatpush1.xpose.msra.mxu0 0.0
    %1066 = vmatprep.subr.mxu0 0.0
    %1067 = vmatpush1.xpose.msra.mxu0 0.0
    %1068 = vmatprep.subr.mxu0 0.0
    %1069 = vmatpush1.xpose.msra.mxu0 0.0
    %1070 = vmatprep.subr.mxu0 0.0
    %1071 = vmatpush1.xpose.msra.mxu0 0.0
    %1072 = vmatprep.subr.mxu0 0.0
    %1073 = vmatpush1.xpose.msra.mxu0 0.0
    %1074 = vmatprep.subr.mxu0 0.0
    %1075 = vmatpush1.xpose.msra.mxu0 0.0
    %1076 = vmatprep.subr.mxu0 0.0
    %1077 = vmatpush1.xpose.msra.mxu0 0.0
    %1078 = vmatprep.subr.mxu0 0.0
    %1079 = vmatpush1.xpose.msra.mxu0 0.0
    %1080 = vmatprep.subr.mxu0 0.0
    %1081 = vmatpush1.xpose.msra.mxu0 0.0
    %1082 = vmatprep.subr.mxu0 0.0
    %1083 = vmatpush1.xpose.msra.mxu0 0.0
    %1084 = vmatprep.subr.mxu0 0.0
    %1085 = vmatpush1.xpose.msra.mxu0 0.0
    %1086 = vmatprep.subr.mxu0 0.0
    %1087 = vmatpush1.xpose.msra.mxu0 0.0
    %1088 = vmatprep.subr.mxu0 0.0
    %1089 = vmatpush1.xpose.msra.mxu0 0.0
    %1090 = vmatprep.subr.mxu0 0.0
    %1091 = vmatpush1.xpose.msra.mxu0 0.0
    %1092 = vmatprep.subr.mxu0 0.0
    %1093 = vmatpush1.xpose.msra.mxu0 0.0
    %1094 = vmatprep.subr.mxu0 0.0
    %1095 = vmatpush1.xpose.msra.mxu0 0.0
    %1096 = vmatprep.subr.mxu0 0.0
    %1097 = vmatpush1.xpose.msra.mxu0 0.0
    %1098 = vmatprep.subr.mxu0 0.0
    %1099 = vmatpush1.xpose.msra.mxu0 0.0
    %1100 = vmatprep.subr.mxu0 0.0
    %1101 = vmatpush1.xpose.msra.mxu0 0.0
    %1102 = vmatprep.subr.mxu0 0.0
    %1103 = vmatpush1.xpose.msra.mxu0 0.0
    %1104 = vmatprep.subr.mxu0 0.0
    %1105 = vmatpush1.xpose.msra.mxu0 0.0
    %1106 = vmatprep.subr.mxu0 0.0
    %1107 = vmatpush1.xpose.msra.mxu0 0.0
    %1108 = vmatprep.subr.mxu0 0.0
    %1109 = vmatpush1.xpose.msra.mxu0 0.0
    %1110 = vmatprep.mubr.f32.mxu0 0.0
    %1111 = vmatmul.mubr.f32.gmra.mrb[0].mxu0 %v1042
    %v1112 = vpop.f32.mrb[0].mxu0
    %v1113 = vadd.f32 0.0, %v1112
    %v1114 = vpop.f32.mrb[0].mxu0
    %1115 = vdwg.mxu0
    %v1116 = vsel %vm195, %v1113, -inf
    %1117 = vmax.xlane.f32.xlu0 %v1116
    %v1118 = vpop.xlane.xlu0 %1117
    %v1119 = vsub.f32 %v1113, %v1118
    %v1120 = vmul.f32 %v1119, 1.442695
    %v1121 = vpow.pop %v1120
    %v1122 = vsel %vm195, %v1121, 0.0
    %1123 = vadd.xlane.f32.xlu0 %v1122
    %v1124 = vpop.xlane.xlu0 %1123
    %v1125 = vrcp.pop %v1124
    %v1126 = vmul.f32 %v1121, %v1125
    %1127 = vrot.lane.b32.xlu0 %v187, 56
    %v1128 = vpop.permute.xlu0 %1127
    %v1131 = vsel %vm195, %v1126, 0
    %1133 = vmatprep.subr.mxu0 0.0
    %1134 = vmatpush1.msra.mxu0 %v1128
    %1135 = vmatprep.subr.mxu0 0.0
    %1136 = vmatpush1.msra.mxu0 0.0
    %1137 = vmatprep.subr.mxu0 0.0
    %1138 = vmatpush1.msra.mxu0 0.0
    %1139 = vmatprep.subr.mxu0 0.0
    %1140 = vmatpush1.msra.mxu0 0.0
    %1141 = vmatprep.subr.mxu0 0.0
    %1142 = vmatpush1.msra.mxu0 0.0
    %1143 = vmatprep.subr.mxu0 0.0
    %1144 = vmatpush1.msra.mxu0 0.0
    %1145 = vmatprep.subr.mxu0 0.0
    %1146 = vmatpush1.msra.mxu0 0.0
    %1147 = vmatprep.subr.mxu0 0.0
    %1148 = vmatpush1.msra.mxu0 0.0
    %1149 = vmatprep.subr.mxu0 0.0
    %1150 = vmatpush1.msra.mxu0 0.0
    %1151 = vmatprep.subr.mxu0 0.0
    %1152 = vmatpush1.msra.mxu0 0.0
    %1153 = vmatprep.subr.mxu0 0.0
    %1154 = vmatpush1.msra.mxu0 0.0
    %1155 = vmatprep.subr.mxu0 0.0
    %1156 = vmatpush1.msra.mxu0 0.0
    %1157 = vmatprep.subr.mxu0 0.0
    %1158 = vmatpush1.msra.mxu0 0.0
    %1159 = vmatprep.subr.mxu0 0.0
    %1160 = vmatpush1.msra.mxu0 0.0
    %1161 = vmatprep.subr.mxu0 0.0
    %1162 = vmatpush1.msra.mxu0 0.0
    %1163 = vmatprep.subr.mxu0 0.0
    %1164 = vmatpush1.msra.mxu0 0.0
    %1165 = vmatprep.subr.mxu0 0.0
    %1166 = vmatpush1.msra.mxu0 0.0
    %1167 = vmatprep.subr.mxu0 0.0
    %1168 = vmatpush1.msra.mxu0 0.0
    %1169 = vmatprep.subr.mxu0 0.0
    %1170 = vmatpush1.msra.mxu0 0.0
    %1171 = vmatprep.subr.mxu0 0.0
    %1172 = vmatpush1.msra.mxu0 0.0
    %1173 = vmatprep.subr.mxu0 0.0
    %1174 = vmatpush1.msra.mxu0 0.0
    %1175 = vmatprep.subr.mxu0 0.0
    %1176 = vmatpush1.msra.mxu0 0.0
    %1177 = vmatprep.subr.mxu0 0.0
    %1178 = vmatpush1.msra.mxu0 0.0
    %1179 = vmatprep.subr.mxu0 0.0
    %1180 = vmatpush1.msra.mxu0 0.0
    %1181 = vmatprep.subr.mxu0 0.0
    %1182 = vmatpush1.msra.mxu0 0.0
    %1183 = vmatprep.subr.mxu0 0.0
    %1184 = vmatpush1.msra.mxu0 0.0
    %1185 = vmatprep.subr.mxu0 0.0
    %1186 = vmatpush1.msra.mxu0 0.0
    %1187 = vmatprep.subr.mxu0 0.0
    %1188 = vmatpush1.msra.mxu0 0.0
    %1189 = vmatprep.subr.mxu0 0.0
    %1190 = vmatpush1.msra.mxu0 0.0
    %1191 = vmatprep.subr.mxu0 0.0
    %1192 = vmatpush1.msra.mxu0 0.0
    %1193 = vmatprep.subr.mxu0 0.0
    %1194 = vmatpush1.msra.mxu0 0.0
    %1195 = vmatprep.subr.mxu0 0.0
    %1196 = vmatpush1.msra.mxu0 0.0
    %1197 = vmatprep.mubr.f32.mxu0 0.0
    %1198 = vmatmul.mubr.f32.gmra.mrb[0].mxu0 %v1131
    %v1199 = vpop.f32.mrb[0].mxu0
    %v1200 = vadd.f32 0.0, %v1199
    %v1201 = vpop.f32.mrb[0].mxu0
    %1202 = vdwg.mxu0
    %1204 = vrot.lane.b32.xlu0 %v1200, 8
    %v1205 = vpop.permute.xlu0 %1204
    %1207 = vst.msk [vmem:[#allocation2 + $0x8] sm:$0xff] %vm528, %v1205
    %1208 = vrot.lane.b32.xlu0 %v191, 112
    %v1209 = vpop.permute.xlu0 %1208
    %1210 = vrot.lane.b32.xlu0 %v187, 80
    %v1211 = vpop.permute.xlu0 %1210
    %v1212 = vsel %vm195, %v1209, 0
    %v1214 = vsel %vm195, %v1211, 0
    %1216 = vmatprep.subr.mxu0 0.0
    %1217 = vmatpush1.xpose.msra.mxu0 %v1214
    %1218 = vmatprep.subr.mxu0 0.0
    %1219 = vmatpush1.xpose.msra.mxu0 0.0
    %1220 = vmatprep.subr.mxu0 0.0
    %1221 = vmatpush1.xpose.msra.mxu0 0.0
    %1222 = vmatprep.subr.mxu0 0.0
    %1223 = vmatpush1.xpose.msra.mxu0 0.0
    %1224 = vmatprep.subr.mxu0 0.0
    %1225 = vmatpush1.xpose.msra.mxu0 0.0
    %1226 = vmatprep.subr.mxu0 0.0
    %1227 = vmatpush1.xpose.msra.mxu0 0.0
    %1228 = vmatprep.subr.mxu0 0.0
    %1229 = vmatpush1.xpose.msra.mxu0 0.0
    %1230 = vmatprep.subr.mxu0 0.0
    %1231 = vmatpush1.xpose.msra.mxu0 0.0
    %1232 = vmatprep.subr.mxu0 0.0
    %1233 = vmatpush1.xpose.msra.mxu0 0.0
    %1234 = vmatprep.subr.mxu0 0.0
    %1235 = vmatpush1.xpose.msra.mxu0 0.0
    %1236 = vmatprep.subr.mxu0 0.0
    %1237 = vmatpush1.xpose.msra.mxu0 0.0
    %1238 = vmatprep.subr.mxu0 0.0
    %1239 = vmatpush1.xpose.msra.mxu0 0.0
    %1240 = vmatprep.subr.mxu0 0.0
    %1241 = vmatpush1.xpose.msra.mxu0 0.0
    %1242 = vmatprep.subr.mxu0 0.0
    %1243 = vmatpush1.xpose.msra.mxu0 0.0
    %1244 = vmatprep.subr.mxu0 0.0
    %1245 = vmatpush1.xpose.msra.mxu0 0.0
    %1246 = vmatprep.subr.mxu0 0.0
    %1247 = vmatpush1.xpose.msra.mxu0 0.0
    %1248 = vmatprep.subr.mxu0 0.0
    %1249 = vmatpush1.xpose.msra.mxu0 0.0
    %1250 = vmatprep.subr.mxu0 0.0
    %1251 = vmatpush1.xpose.msra.mxu0 0.0
    %1252 = vmatprep.subr.mxu0 0.0
    %1253 = vmatpush1.xpose.msra.mxu0 0.0
    %1254 = vmatprep.subr.mxu0 0.0
    %1255 = vmatpush1.xpose.msra.mxu0 0.0
    %1256 = vmatprep.subr.mxu0 0.0
    %1257 = vmatpush1.xpose.msra.mxu0 0.0
    %1258 = vmatprep.subr.mxu0 0.0
    %1259 = vmatpush1.xpose.msra.mxu0 0.0
    %1260 = vmatprep.subr.mxu0 0.0
    %1261 = vmatpush1.xpose.msra.mxu0 0.0
    %1262 = vmatprep.subr.mxu0 0.0
    %1263 = vmatpush1.xpose.msra.mxu0 0.0
    %1264 = vmatprep.subr.mxu0 0.0
    %1265 = vmatpush1.xpose.msra.mxu0 0.0
    %1266 = vmatprep.subr.mxu0 0.0
    %1267 = vmatpush1.xpose.msra.mxu0 0.0
    %1268 = vmatprep.subr.mxu0 0.0
    %1269 = vmatpush1.xpose.msra.mxu0 0.0
    %1270 = vmatprep.subr.mxu0 0.0
    %1271 = vmatpush1.xpose.msra.mxu0 0.0
    %1272 = vmatprep.subr.mxu0 0.0
    %1273 = vmatpush1.xpose.msra.mxu0 0.0
    %1274 = vmatprep.subr.mxu0 0.0
    %1275 = vmatpush1.xpose.msra.mxu0 0.0
    %1276 = vmatprep.subr.mxu0 0.0
    %1277 = vmatpush1.xpose.msra.mxu0 0.0
    %1278 = vmatprep.subr.mxu0 0.0
    %1279 = vmatpush1.xpose.msra.mxu0 0.0
    %1280 = vmatprep.mubr.f32.mxu0 0.0
    %1281 = vmatmul.mubr.f32.gmra.mrb[0].mxu0 %v1212
    %v1282 = vpop.f32.mrb[0].mxu0
    %v1283 = vadd.f32 0.0, %v1282
    %v1284 = vpop.f32.mrb[0].mxu0
    %1285 = vdwg.mxu0
    %v1286 = vsel %vm195, %v1283, -inf
    %1287 = vmax.xlane.f32.xlu0 %v1286
    %v1288 = vpop.xlane.xlu0 %1287
    %v1289 = vsub.f32 %v1283, %v1288
    %v1290 = vmul.f32 %v1289, 1.442695
    %v1291 = vpow.pop %v1290
    %v1292 = vsel %vm195, %v1291, 0.0
    %1293 = vadd.xlane.f32.xlu0 %v1292
    %v1294 = vpop.xlane.xlu0 %1293
    %v1295 = vrcp.pop %v1294
    %v1296 = vmul.f32 %v1291, %v1295
    %1297 = vrot.lane.b32.xlu0 %v187, 48
    %v1298 = vpop.permute.xlu0 %1297
    %v1301 = vsel %vm195, %v1296, 0
    %1303 = vmatprep.subr.mxu0 0.0
    %1304 = vmatpush1.msra.mxu0 %v1298
    %1305 = vmatprep.subr.mxu0 0.0
    %1306 = vmatpush1.msra.mxu0 0.0
    %1307 = vmatprep.subr.mxu0 0.0
    %1308 = vmatpush1.msra.mxu0 0.0
    %1309 = vmatprep.subr.mxu0 0.0
    %1310 = vmatpush1.msra.mxu0 0.0
    %1311 = vmatprep.subr.mxu0 0.0
    %1312 = vmatpush1.msra.mxu0 0.0
    %1313 = vmatprep.subr.mxu0 0.0
    %1314 = vmatpush1.msra.mxu0 0.0
    %1315 = vmatprep.subr.mxu0 0.0
    %1316 = vmatpush1.msra.mxu0 0.0
    %1317 = vmatprep.subr.mxu0 0.0
    %1318 = vmatpush1.msra.mxu0 0.0
    %1319 = vmatprep.subr.mxu0 0.0
    %1320 = vmatpush1.msra.mxu0 0.0
    %1321 = vmatprep.subr.mxu0 0.0
    %1322 = vmatpush1.msra.mxu0 0.0
    %1323 = vmatprep.subr.mxu0 0.0
    %1324 = vmatpush1.msra.mxu0 0.0
    %1325 = vmatprep.subr.mxu0 0.0
    %1326 = vmatpush1.msra.mxu0 0.0
    %1327 = vmatprep.subr.mxu0 0.0
    %1328 = vmatpush1.msra.mxu0 0.0
    %1329 = vmatprep.subr.mxu0 0.0
    %1330 = vmatpush1.msra.mxu0 0.0
    %1331 = vmatprep.subr.mxu0 0.0
    %1332 = vmatpush1.msra.mxu0 0.0
    %1333 = vmatprep.subr.mxu0 0.0
    %1334 = vmatpush1.msra.mxu0 0.0
    %1335 = vmatprep.subr.mxu0 0.0
    %1336 = vmatpush1.msra.mxu0 0.0
    %1337 = vmatprep.subr.mxu0 0.0
    %1338 = vmatpush1.msra.mxu0 0.0
    %1339 = vmatprep.subr.mxu0 0.0
    %1340 = vmatpush1.msra.mxu0 0.0
    %1341 = vmatprep.subr.mxu0 0.0
    %1342 = vmatpush1.msra.mxu0 0.0
    %1343 = vmatprep.subr.mxu0 0.0
    %1344 = vmatpush1.msra.mxu0 0.0
    %1345 = vmatprep.subr.mxu0 0.0
    %1346 = vmatpush1.msra.mxu0 0.0
    %1347 = vmatprep.subr.mxu0 0.0
    %1348 = vmatpush1.msra.mxu0 0.0
    %1349 = vmatprep.subr.mxu0 0.0
    %1350 = vmatpush1.msra.mxu0 0.0
    %1351 = vmatprep.subr.mxu0 0.0
    %1352 = vmatpush1.msra.mxu0 0.0
    %1353 = vmatprep.subr.mxu0 0.0
    %1354 = vmatpush1.msra.mxu0 0.0
    %1355 = vmatprep.subr.mxu0 0.0
    %1356 = vmatpush1.msra.mxu0 0.0
    %1357 = vmatprep.subr.mxu0 0.0
    %1358 = vmatpush1.msra.mxu0 0.0
    %1359 = vmatprep.subr.mxu0 0.0
    %1360 = vmatpush1.msra.mxu0 0.0
    %1361 = vmatprep.subr.mxu0 0.0
    %1362 = vmatpush1.msra.mxu0 0.0
    %1363 = vmatprep.subr.mxu0 0.0
    %1364 = vmatpush1.msra.mxu0 0.0
    %1365 = vmatprep.subr.mxu0 0.0
    %1366 = vmatpush1.msra.mxu0 0.0
    %1367 = vmatprep.mubr.f32.mxu0 0.0
    %1368 = vmatmul.mubr.f32.gmra.mrb[0].mxu0 %v1301
    %v1369 = vpop.f32.mrb[0].mxu0
    %v1370 = vadd.f32 0.0, %v1369
    %v1371 = vpop.f32.mrb[0].mxu0
    %1372 = vdwg.mxu0
    %1374 = vrot.lane.b32.xlu0 %v1370, 16
    %v1375 = vpop.permute.xlu0 %1374
    %1377 = vst.msk [vmem:[#allocation2 + $0x8] sm:$0xff] %vm699, %v1375
    %1378 = vrot.lane.b32.xlu0 %v191, 104
    %v1379 = vpop.permute.xlu0 %1378
    %1380 = vrot.lane.b32.xlu0 %v187, 72
    %v1381 = vpop.permute.xlu0 %1380
    %v1382 = vsel %vm195, %v1379, 0
    %v1384 = vsel %vm195, %v1381, 0
    %1386 = vmatprep.subr.mxu0 0.0
    %1387 = vmatpush1.xpose.msra.mxu0 %v1384
    %1388 = vmatprep.subr.mxu0 0.0
    %1389 = vmatpush1.xpose.msra.mxu0 0.0
    %1390 = vmatprep.subr.mxu0 0.0
    %1391 = vmatpush1.xpose.msra.mxu0 0.0
    %1392 = vmatprep.subr.mxu0 0.0
    %1393 = vmatpush1.xpose.msra.mxu0 0.0
    %1394 = vmatprep.subr.mxu0 0.0
    %1395 = vmatpush1.xpose.msra.mxu0 0.0
    %1396 = vmatprep.subr.mxu0 0.0
    %1397 = vmatpush1.xpose.msra.mxu0 0.0
    %1398 = vmatprep.subr.mxu0 0.0
    %1399 = vmatpush1.xpose.msra.mxu0 0.0
    %1400 = vmatprep.subr.mxu0 0.0
    %1401 = vmatpush1.xpose.msra.mxu0 0.0
    %1402 = vmatprep.subr.mxu0 0.0
    %1403 = vmatpush1.xpose.msra.mxu0 0.0
    %1404 = vmatprep.subr.mxu0 0.0
    %1405 = vmatpush1.xpose.msra.mxu0 0.0
    %1406 = vmatprep.subr.mxu0 0.0
    %1407 = vmatpush1.xpose.msra.mxu0 0.0
    %1408 = vmatprep.subr.mxu0 0.0
    %1409 = vmatpush1.xpose.msra.mxu0 0.0
    %1410 = vmatprep.subr.mxu0 0.0
    %1411 = vmatpush1.xpose.msra.mxu0 0.0
    %1412 = vmatprep.subr.mxu0 0.0
    %1413 = vmatpush1.xpose.msra.mxu0 0.0
    %1414 = vmatprep.subr.mxu0 0.0
    %1415 = vmatpush1.xpose.msra.mxu0 0.0
    %1416 = vmatprep.subr.mxu0 0.0
    %1417 = vmatpush1.xpose.msra.mxu0 0.0
    %1418 = vmatprep.subr.mxu0 0.0
    %1419 = vmatpush1.xpose.msra.mxu0 0.0
    %1420 = vmatprep.subr.mxu0 0.0
    %1421 = vmatpush1.xpose.msra.mxu0 0.0
    %1422 = vmatprep.subr.mxu0 0.0
    %1423 = vmatpush1.xpose.msra.mxu0 0.0
    %1424 = vmatprep.subr.mxu0 0.0
    %1425 = vmatpush1.xpose.msra.mxu0 0.0
    %1426 = vmatprep.subr.mxu0 0.0
    %1427 = vmatpush1.xpose.msra.mxu0 0.0
    %1428 = vmatprep.subr.mxu0 0.0
    %1429 = vmatpush1.xpose.msra.mxu0 0.0
    %1430 = vmatprep.subr.mxu0 0.0
    %1431 = vmatpush1.xpose.msra.mxu0 0.0
    %1432 = vmatprep.subr.mxu0 0.0
    %1433 = vmatpush1.xpose.msra.mxu0 0.0
    %1434 = vmatprep.subr.mxu0 0.0
    %1435 = vmatpush1.xpose.msra.mxu0 0.0
    %1436 = vmatprep.subr.mxu0 0.0
    %1437 = vmatpush1.xpose.msra.mxu0 0.0
    %1438 = vmatprep.subr.mxu0 0.0
    %1439 = vmatpush1.xpose.msra.mxu0 0.0
    %1440 = vmatprep.subr.mxu0 0.0
    %1441 = vmatpush1.xpose.msra.mxu0 0.0
    %1442 = vmatprep.subr.mxu0 0.0
    %1443 = vmatpush1.xpose.msra.mxu0 0.0
    %1444 = vmatprep.subr.mxu0 0.0
    %1445 = vmatpush1.xpose.msra.mxu0 0.0
    %1446 = vmatprep.subr.mxu0 0.0
    %1447 = vmatpush1.xpose.msra.mxu0 0.0
    %1448 = vmatprep.subr.mxu0 0.0
    %1449 = vmatpush1.xpose.msra.mxu0 0.0
    %1450 = vmatprep.mubr.f32.mxu0 0.0
    %1451 = vmatmul.mubr.f32.gmra.mrb[0].mxu0 %v1382
    %v1452 = vpop.f32.mrb[0].mxu0
    %v1453 = vadd.f32 0.0, %v1452
    %v1454 = vpop.f32.mrb[0].mxu0
    %1455 = vdwg.mxu0
    %v1456 = vsel %vm195, %v1453, -inf
    %1457 = vmax.xlane.f32.xlu0 %v1456
    %v1458 = vpop.xlane.xlu0 %1457
    %v1459 = vsub.f32 %v1453, %v1458
    %v1460 = vmul.f32 %v1459, 1.442695
    %v1461 = vpow.pop %v1460
    %v1462 = vsel %vm195, %v1461, 0.0
    %1463 = vadd.xlane.f32.xlu0 %v1462
    %v1464 = vpop.xlane.xlu0 %1463
    %v1465 = vrcp.pop %v1464
    %v1466 = vmul.f32 %v1461, %v1465
    %1467 = vrot.lane.b32.xlu0 %v187, 40
    %v1468 = vpop.permute.xlu0 %1467
    %v1471 = vsel %vm195, %v1466, 0
    %1473 = vmatprep.subr.mxu0 0.0
    %1474 = vmatpush1.msra.mxu0 %v1468
    %1475 = vmatprep.subr.mxu0 0.0
    %1476 = vmatpush1.msra.mxu0 0.0
    %1477 = vmatprep.subr.mxu0 0.0
    %1478 = vmatpush1.msra.mxu0 0.0
    %1479 = vmatprep.subr.mxu0 0.0
    %1480 = vmatpush1.msra.mxu0 0.0
    %1481 = vmatprep.subr.mxu0 0.0
    %1482 = vmatpush1.msra.mxu0 0.0
    %1483 = vmatprep.subr.mxu0 0.0
    %1484 = vmatpush1.msra.mxu0 0.0
    %1485 = vmatprep.subr.mxu0 0.0
    %1486 = vmatpush1.msra.mxu0 0.0
    %1487 = vmatprep.subr.mxu0 0.0
    %1488 = vmatpush1.msra.mxu0 0.0
    %1489 = vmatprep.subr.mxu0 0.0
    %1490 = vmatpush1.msra.mxu0 0.0
    %1491 = vmatprep.subr.mxu0 0.0
    %1492 = vmatpush1.msra.mxu0 0.0
    %1493 = vmatprep.subr.mxu0 0.0
    %1494 = vmatpush1.msra.mxu0 0.0
    %1495 = vmatprep.subr.mxu0 0.0
    %1496 = vmatpush1.msra.mxu0 0.0
    %1497 = vmatprep.subr.mxu0 0.0
    %1498 = vmatpush1.msra.mxu0 0.0
    %1499 = vmatprep.subr.mxu0 0.0
    %1500 = vmatpush1.msra.mxu0 0.0
    %1501 = vmatprep.subr.mxu0 0.0
    %1502 = vmatpush1.msra.mxu0 0.0
    %1503 = vmatprep.subr.mxu0 0.0
    %1504 = vmatpush1.msra.mxu0 0.0
    %1505 = vmatprep.subr.mxu0 0.0
    %1506 = vmatpush1.msra.mxu0 0.0
    %1507 = vmatprep.subr.mxu0 0.0
    %1508 = vmatpush1.msra.mxu0 0.0
    %1509 = vmatprep.subr.mxu0 0.0
    %1510 = vmatpush1.msra.mxu0 0.0
    %1511 = vmatprep.subr.mxu0 0.0
    %1512 = vmatpush1.msra.mxu0 0.0
    %1513 = vmatprep.subr.mxu0 0.0
    %1514 = vmatpush1.msra.mxu0 0.0
    %1515 = vmatprep.subr.mxu0 0.0
    %1516 = vmatpush1.msra.mxu0 0.0
    %1517 = vmatprep.subr.mxu0 0.0
    %1518 = vmatpush1.msra.mxu0 0.0
    %1519 = vmatprep.subr.mxu0 0.0
    %1520 = vmatpush1.msra.mxu0 0.0
    %1521 = vmatprep.subr.mxu0 0.0
    %1522 = vmatpush1.msra.mxu0 0.0
    %1523 = vmatprep.subr.mxu0 0.0
    %1524 = vmatpush1.msra.mxu0 0.0
    %1525 = vmatprep.subr.mxu0 0.0
    %1526 = vmatpush1.msra.mxu0 0.0
    %1527 = vmatprep.subr.mxu0 0.0
    %1528 = vmatpush1.msra.mxu0 0.0
    %1529 = vmatprep.subr.mxu0 0.0
    %1530 = vmatpush1.msra.mxu0 0.0
    %1531 = vmatprep.subr.mxu0 0.0
    %1532 = vmatpush1.msra.mxu0 0.0
    %1533 = vmatprep.subr.mxu0 0.0
    %1534 = vmatpush1.msra.mxu0 0.0
    %1535 = vmatprep.subr.mxu0 0.0
    %1536 = vmatpush1.msra.mxu0 0.0
    %1537 = vmatprep.mubr.f32.mxu0 0.0
    %1538 = vmatmul.mubr.f32.gmra.mrb[0].mxu0 %v1471
    %v1539 = vpop.f32.mrb[0].mxu0
    %v1540 = vadd.f32 0.0, %v1539
    %v1541 = vpop.f32.mrb[0].mxu0
    %1542 = vdwg.mxu0
    %1544 = vrot.lane.b32.xlu0 %v1540, 24
    %v1545 = vpop.permute.xlu0 %1544
    %1547 = vst.msk [vmem:[#allocation2 + $0x8] sm:$0xff] %vm870, %v1545
    %v1548 = vld [vmem:[#allocation2] sm:$0xff]
    %v1549 = vld [vmem:[#allocation2 + $0x8] sm:$0xff]
    %v1550 = vld [vmem:[%s3] sm:$0xff]
    %v1551 = vld [vmem:[%s3 + $0x8] sm:$0xff]
    %v1552 = vld [vmem:[%s3 + $0x10] sm:$0xff]
    %v1553 = vld [vmem:[%s3 + $0x18] sm:$0xff]
    %v1554 = vld [vmem:[%s4] sm:$0x1]
    %v1556 = vlaneseq
    %v1557 = vshrl.u32 %v1556, 7
    %v1558 = vsub.s32 0, %v1557
    %v1559 = vrot.slane %v1554, %v1558
    %v1562 = vsel %vm49, %v1548, 0
    %v1565 = vsel %vm49, %v1549, 0
    %1567 = vmatprep.subr.mxu0 0.0
    %1568 = vmatpush1.msra.mxu0 %v1550
    %1569 = vmatprep.subr.mxu0 0.0
    %1570 = vmatpush1.msra.mxu0 %v1551
    %1571 = vmatprep.subr.mxu0 0.0
    %1572 = vmatpush1.msra.mxu0 %v1552
    %1573 = vmatprep.subr.mxu0 0.0
    %1574 = vmatpush1.msra.mxu0 %v1553
    %1575 = vmatprep.subr.mxu0 0.0
    %1576 = vmatpush1.msra.mxu0 0.0
    %1577 = vmatprep.subr.mxu0 0.0
    %1578 = vmatpush1.msra.mxu0 0.0
    %1579 = vmatprep.subr.mxu0 0.0
    %1580 = vmatpush1.msra.mxu0 0.0
    %1581 = vmatprep.subr.mxu0 0.0
    %1582 = vmatpush1.msra.mxu0 0.0
    %1583 = vmatprep.subr.mxu0 0.0
    %1584 = vmatpush1.msra.mxu0 0.0
    %1585 = vmatprep.subr.mxu0 0.0
    %1586 = vmatpush1.msra.mxu0 0.0
    %1587 = vmatprep.subr.mxu0 0.0
    %1588 = vmatpush1.msra.mxu0 0.0
    %1589 = vmatprep.subr.mxu0 0.0
    %1590 = vmatpush1.msra.mxu0 0.0
    %1591 = vmatprep.subr.mxu0 0.0
    %1592 = vmatpush1.msra.mxu0 0.0
    %1593 = vmatprep.subr.mxu0 0.0
    %1594 = vmatpush1.msra.mxu0 0.0
    %1595 = vmatprep.subr.mxu0 0.0
    %1596 = vmatpush1.msra.mxu0 0.0
    %1597 = vmatprep.subr.mxu0 0.0
    %1598 = vmatpush1.msra.mxu0 0.0
    %1599 = vmatprep.subr.mxu0 0.0
    %1600 = vmatpush1.msra.mxu0 0.0
    %1601 = vmatprep.subr.mxu0 0.0
    %1602 = vmatpush1.msra.mxu0 0.0
    %1603 = vmatprep.subr.mxu0 0.0
    %1604 = vmatpush1.msra.mxu0 0.0
    %1605 = vmatprep.subr.mxu0 0.0
    %1606 = vmatpush1.msra.mxu0 0.0
    %1607 = vmatprep.subr.mxu0 0.0
    %1608 = vmatpush1.msra.mxu0 0.0
    %1609 = vmatprep.subr.mxu0 0.0
    %1610 = vmatpush1.msra.mxu0 0.0
    %1611 = vmatprep.subr.mxu0 0.0
    %1612 = vmatpush1.msra.mxu0 0.0
    %1613 = vmatprep.subr.mxu0 0.0
    %1614 = vmatpush1.msra.mxu0 0.0
    %1615 = vmatprep.subr.mxu0 0.0
    %1616 = vmatpush1.msra.mxu0 0.0
    %1617 = vmatprep.subr.mxu0 0.0
    %1618 = vmatpush1.msra.mxu0 0.0
    %1619 = vmatprep.subr.mxu0 0.0
    %1620 = vmatpush1.msra.mxu0 0.0
    %1621 = vmatprep.subr.mxu0 0.0
    %1622 = vmatpush1.msra.mxu0 0.0
    %1623 = vmatprep.subr.mxu0 0.0
    %1624 = vmatpush1.msra.mxu0 0.0
    %1625 = vmatprep.subr.mxu0 0.0
    %1626 = vmatpush1.msra.mxu0 0.0
    %1627 = vmatprep.subr.mxu0 0.0
    %1628 = vmatpush1.msra.mxu0 0.0
    %1629 = vmatprep.subr.mxu0 0.0
    %1630 = vmatpush1.msra.mxu0 0.0
    %1631 = vmatprep.mubr.f32.mxu0 0.0
    %1632 = vmatmul.mubr.f32.gmra.mrb[0].mxu0 %v1562
    %v1633 = vpop.f32.mrb[0].mxu0
    %v1634 = vadd.f32 %v1559, %v1633
    %v1635 = vpop.f32.mrb[0].mxu0
    %1636 = vmatprep.mubr.f32.mxu0 0.0
    %1637 = vmatmul.mubr.f32.gmra.mrb[0].mxu0 %v1565
    %v1638 = vpop.f32.mrb[0].mxu0
    %v1639 = vadd.f32 %v1559, %v1638
    %v1640 = vpop.f32.mrb[0].mxu0
    %1641 = vdwg.mxu0
    %v1642 = vadd.f32 %v47, %v1634
    %v1643 = vadd.f32 %v48, %v1639
    %v1644 = vsel %vm49, %v1642, 0.0
    %1645 = vadd.xlane.f32.xlu0 %v1644
    %v1646 = vpop.xlane.xlu0 %1645
    %v1647 = vsel %vm49, %v1643, 0.0
    %1648 = vadd.xlane.f32.xlu0 %v1647
    %v1649 = vpop.xlane.xlu0 %1648
    %v1650 = vmul.f32 %v1642, %v1642
    %v1651 = vmul.f32 %v1643, %v1643
    %v1652 = vsel %vm49, %v1650, 0.0
    %1653 = vadd.xlane.f32.xlu0 %v1652
    %v1654 = vpop.xlane.xlu0 %1653
    %v1655 = vsel %vm49, %v1651, 0.0
    %1656 = vadd.xlane.f32.xlu0 %v1655
    %v1657 = vpop.xlane.xlu0 %1656
    %v1658 = vmul.f32 %v1646, 0.03125
    %v1659 = vmul.f32 %v1649, 0.03125
    %v1660 = vmul.f32 %v1658, 32.0
    %v1661 = vmul.f32 %v1659, 32.0
    %v1662 = vmul.f32 %v1660, %v1658
    %v1663 = vmul.f32 %v1661, %v1659
    %v1664 = vsub.f32 %v1654, %v1662
    %v1665 = vsub.f32 %v1657, %v1663
    %v1666 = vmul.f32 %v1664, 0.032258064
    %v1667 = vmul.f32 %v1665, 0.032258064
    %v1668 = vmax.f32 %v1666, 0.0
    %v1669 = vmax.f32 %v1667, 0.0
    %v1670 = vrsqrt.pop %v1668
    %v1671 = vmul.f32 %v1668, %v1670
    %vm1672 = vcmp.eq.f32.partialorder %v1668, inf
    %v1673 = vsel %vm1672, %v1668, %v1671
    %vm1674 = vcmp.eq.f32.partialorder %v1668, 0.0
    %v1675 = vand.u32 %v1668, 2147483648
    %v1676 = vsel %vm1674, %v1675, %v1673
    %v1677 = vrsqrt.pop %v1669
    %v1678 = vmul.f32 %v1669, %v1677
    %vm1679 = vcmp.eq.f32.partialorder %v1669, inf
    %v1680 = vsel %vm1679, %v1669, %v1678
    %vm1681 = vcmp.eq.f32.partialorder %v1669, 0.0
    %v1682 = vand.u32 %v1669, 2147483648
    %v1683 = vsel %vm1681, %v1682, %v1680
    %v1684 = vadd.f32 %v1676, 1e-06
    %v1685 = vadd.f32 %v1683, 1e-06
    %v1686 = vrcp.pop %v1684
    %v1687 = vrcp.pop %v1685
    %v1688 = vsub.f32 %v1642, %v1658
    %v1689 = vsub.f32 %v1643, %v1659
    %v1690 = vmul.f32 %v1688, %v1686
    %v1691 = vmul.f32 %v1689, %v1687
    %v1692 = vld [vmem:[%s5] sm:$0xff]
    %v1693 = vld [vmem:[%s5 + $0x8] sm:$0xff]
    %v1694 = vld [vmem:[%s5 + $0x10] sm:$0xff]
    %v1695 = vld [vmem:[%s5 + $0x18] sm:$0xff]
    %v1696 = vld [vmem:[%s6] sm:$0x1]
    %v1698 = vlaneseq
    %v1699 = vshrl.u32 %v1698, 7
    %v1700 = vsub.s32 0, %v1699
    %v1701 = vrot.slane %v1696, %v1700
    %v1704 = vsel %vm49, %v1690, 0
    %v1707 = vsel %vm49, %v1691, 0
    %1709 = vmatprep.subr.mxu0 0.0
    %1710 = vmatpush1.msra.mxu0 %v1692
    %1711 = vmatprep.subr.mxu0 0.0
    %1712 = vmatpush1.msra.mxu0 %v1693
    %1713 = vmatprep.subr.mxu0 0.0
    %1714 = vmatpush1.msra.mxu0 %v1694
    %1715 = vmatprep.subr.mxu0 0.0
    %1716 = vmatpush1.msra.mxu0 %v1695
    %1717 = vmatprep.subr.mxu0 0.0
    %1718 = vmatpush1.msra.mxu0 0.0
    %1719 = vmatprep.subr.mxu0 0.0
    %1720 = vmatpush1.msra.mxu0 0.0
    %1721 = vmatprep.subr.mxu0 0.0
    %1722 = vmatpush1.msra.mxu0 0.0
    %1723 = vmatprep.subr.mxu0 0.0
    %1724 = vmatpush1.msra.mxu0 0.0
    %1725 = vmatprep.subr.mxu0 0.0
    %1726 = vmatpush1.msra.mxu0 0.0
    %1727 = vmatprep.subr.mxu0 0.0
    %1728 = vmatpush1.msra.mxu0 0.0
    %1729 = vmatprep.subr.mxu0 0.0
    %1730 = vmatpush1.msra.mxu0 0.0
    %1731 = vmatprep.subr.mxu0 0.0
    %1732 = vmatpush1.msra.mxu0 0.0
    %1733 = vmatprep.subr.mxu0 0.0
    %1734 = vmatpush1.msra.mxu0 0.0
    %1735 = vmatprep.subr.mxu0 0.0
    %1736 = vmatpush1.msra.mxu0 0.0
    %1737 = vmatprep.subr.mxu0 0.0
    %1738 = vmatpush1.msra.mxu0 0.0
    %1739 = vmatprep.subr.mxu0 0.0
    %1740 = vmatpush1.msra.mxu0 0.0
    %1741 = vmatprep.subr.mxu0 0.0
    %1742 = vmatpush1.msra.mxu0 0.0
    %1743 = vmatprep.subr.mxu0 0.0
    %1744 = vmatpush1.msra.mxu0 0.0
    %1745 = vmatprep.subr.mxu0 0.0
    %1746 = vmatpush1.msra.mxu0 0.0
    %1747 = vmatprep.subr.mxu0 0.0
    %1748 = vmatpush1.msra.mxu0 0.0
    %1749 = vmatprep.subr.mxu0 0.0
    %1750 = vmatpush1.msra.mxu0 0.0
    %1751 = vmatprep.subr.mxu0 0.0
    %1752 = vmatpush1.msra.mxu0 0.0
    %1753 = vmatprep.subr.mxu0 0.0
    %1754 = vmatpush1.msra.mxu0 0.0
    %1755 = vmatprep.subr.mxu0 0.0
    %1756 = vmatpush1.msra.mxu0 0.0
    %1757 = vmatprep.subr.mxu0 0.0
    %1758 = vmatpush1.msra.mxu0 0.0
    %1759 = vmatprep.subr.mxu0 0.0
    %1760 = vmatpush1.msra.mxu0 0.0
    %1761 = vmatprep.subr.mxu0 0.0
    %1762 = vmatpush1.msra.mxu0 0.0
    %1763 = vmatprep.subr.mxu0 0.0
    %1764 = vmatpush1.msra.mxu0 0.0
    %1765 = vmatprep.subr.mxu0 0.0
    %1766 = vmatpush1.msra.mxu0 0.0
    %1767 = vmatprep.subr.mxu0 0.0
    %1768 = vmatpush1.msra.mxu0 0.0
    %1769 = vmatprep.subr.mxu0 0.0
    %1770 = vmatpush1.msra.mxu0 0.0
    %1771 = vmatprep.subr.mxu0 0.0
    %1772 = vmatpush1.msra.mxu0 0.0
    %1773 = vmatprep.mubr.f32.mxu0 0.0
    %1774 = vmatmul.mubr.f32.gmra.mrb[0].mxu0 %v1704
    %v1775 = vpop.f32.mrb[0].mxu0
    %v1776 = vadd.f32 %v1701, %v1775
    %v1777 = vpop.f32.mrb[0].mxu0
    %1778 = vmatprep.mubr.f32.mxu0 0.0
    %1779 = vmatmul.mubr.f32.gmra.mrb[0].mxu0 %v1707
    %v1780 = vpop.f32.mrb[0].mxu0
    %v1781 = vadd.f32 %v1701, %v1780
    %v1782 = vpop.f32.mrb[0].mxu0
    %1783 = vdwg.mxu0
    %v1784 = vmax.f32 %v1776, 0.0
    %v1785 = vmax.f32 %v1781, 0.0
    %v1786 = vld [vmem:[%s7] sm:$0xff]
    %v1787 = vld [vmem:[%s7 + $0x8] sm:$0xff]
    %v1788 = vld [vmem:[%s7 + $0x10] sm:$0xff]
    %v1789 = vld [vmem:[%s7 + $0x18] sm:$0xff]
    %v1790 = vld [vmem:[%s7 + $0x20] sm:$0xff]
    %v1791 = vld [vmem:[%s7 + $0x28] sm:$0xff]
    %v1792 = vld [vmem:[%s7 + $0x30] sm:$0xff]
    %v1793 = vld [vmem:[%s7 + $0x38] sm:$0xff]
    %vm1794 = vcmask 523264
    %v1796 = vsel %vm1794, %v1784, 0
    %v1799 = vsel %vm1794, %v1785, 0
    %1801 = vmatprep.subr.mxu0 0.0
    %1802 = vmatpush1.msra.mxu0 %v1786
    %1803 = vmatprep.subr.mxu0 0.0
    %1804 = vmatpush1.msra.mxu0 %v1787
    %1805 = vmatprep.subr.mxu0 0.0
    %1806 = vmatpush1.msra.mxu0 %v1788
    %1807 = vmatprep.subr.mxu0 0.0
    %1808 = vmatpush1.msra.mxu0 %v1789
    %1809 = vmatprep.subr.mxu0 0.0
    %1810 = vmatpush1.msra.mxu0 %v1790
    %1811 = vmatprep.subr.mxu0 0.0
    %1812 = vmatpush1.msra.mxu0 %v1791
    %1813 = vmatprep.subr.mxu0 0.0
    %1814 = vmatpush1.msra.mxu0 %v1792
    %1815 = vmatprep.subr.mxu0 0.0
    %1816 = vmatpush1.msra.mxu0 %v1793
    %1817 = vmatprep.subr.mxu0 0.0
    %1818 = vmatpush1.msra.mxu0 0.0
    %1819 = vmatprep.subr.mxu0 0.0
    %1820 = vmatpush1.msra.mxu0 0.0
    %1821 = vmatprep.subr.mxu0 0.0
    %1822 = vmatpush1.msra.mxu0 0.0
    %1823 = vmatprep.subr.mxu0 0.0
    %1824 = vmatpush1.msra.mxu0 0.0
    %1825 = vmatprep.subr.mxu0 0.0
    %1826 = vmatpush1.msra.mxu0 0.0
    %1827 = vmatprep.subr.mxu0 0.0
    %1828 = vmatpush1.msra.mxu0 0.0
    %1829 = vmatprep.subr.mxu0 0.0
    %1830 = vmatpush1.msra.mxu0 0.0
    %1831 = vmatprep.subr.mxu0 0.0
    %1832 = vmatpush1.msra.mxu0 0.0
    %1833 = vmatprep.subr.mxu0 0.0
    %1834 = vmatpush1.msra.mxu0 0.0
    %1835 = vmatprep.subr.mxu0 0.0
    %1836 = vmatpush1.msra.mxu0 0.0
    %1837 = vmatprep.subr.mxu0 0.0
    %1838 = vmatpush1.msra.mxu0 0.0
    %1839 = vmatprep.subr.mxu0 0.0
    %1840 = vmatpush1.msra.mxu0 0.0
    %1841 = vmatprep.subr.mxu0 0.0
    %1842 = vmatpush1.msra.mxu0 0.0
    %1843 = vmatprep.subr.mxu0 0.0
    %1844 = vmatpush1.msra.mxu0 0.0
    %1845 = vmatprep.subr.mxu0 0.0
    %1846 = vmatpush1.msra.mxu0 0.0
    %1847 = vmatprep.subr.mxu0 0.0
    %1848 = vmatpush1.msra.mxu0 0.0
    %1849 = vmatprep.subr.mxu0 0.0
    %1850 = vmatpush1.msra.mxu0 0.0
    %1851 = vmatprep.subr.mxu0 0.0
    %1852 = vmatpush1.msra.mxu0 0.0
    %1853 = vmatprep.subr.mxu0 0.0
    %1854 = vmatpush1.msra.mxu0 0.0
    %1855 = vmatprep.subr.mxu0 0.0
    %1856 = vmatpush1.msra.mxu0 0.0
    %1857 = vmatprep.subr.mxu0 0.0
    %1858 = vmatpush1.msra.mxu0 0.0
    %1859 = vmatprep.subr.mxu0 0.0
    %1860 = vmatpush1.msra.mxu0 0.0
    %1861 = vmatprep.subr.mxu0 0.0
    %1862 = vmatpush1.msra.mxu0 0.0
    %1863 = vmatprep.subr.mxu0 0.0
    %1864 = vmatpush1.msra.mxu0 0.0
    %1865 = vmatprep.mubr.f32.mxu0 0.0
    %1866 = vmatmul.mubr.f32.gmra.mrb[0].mxu0 %v1796
    %v1867 = vpop.f32.mrb[0].mxu0
    %v1868 = vadd.f32 0.0, %v1867
    %v1869 = vpop.f32.mrb[0].mxu0
    %1870 = vmatprep.mubr.f32.mxu0 0.0
    %1871 = vmatmul.mubr.f32.gmra.mrb[0].mxu0 %v1799
    %v1872 = vpop.f32.mrb[0].mxu0
    %v1873 = vadd.f32 0.0, %v1872
    %v1874 = vpop.f32.mrb[0].mxu0
    %1875 = vdwg.mxu0
    %v1876 = vadd.f32 %v1642, %v1868
    %v1877 = vadd.f32 %v1643, %v1873
    %v1878 = vld [vmem:[%s8] sm:$0x1]
    %v1880 = vlaneseq
    %v1881 = vshrl.u32 %v1880, 7
    %v1882 = vsub.s32 0, %v1881
    %v1883 = vrot.slane %v1878, %v1882
    %v1885 = vadd.f32 %v1876, %v1883
    %v1886 = vadd.f32 %v1877, %v1883
    %v1887 = vsel %vm49, %v1885, 0.0
    %1888 = vadd.xlane.f32.xlu0 %v1887
    %v1889 = vpop.xlane.xlu0 %1888
    %v1890 = vsel %vm49, %v1886, 0.0
    %1891 = vadd.xlane.f32.xlu0 %v1890
    %v1892 = vpop.xlane.xlu0 %1891
    %v1893 = vmul.f32 %v1885, %v1885
    %v1894 = vmul.f32 %v1886, %v1886
    %v1895 = vsel %vm49, %v1893, 0.0
    %1896 = vadd.xlane.f32.xlu0 %v1895
    %v1897 = vpop.xlane.xlu0 %1896
    %v1898 = vsel %vm49, %v1894, 0.0
    %1899 = vadd.xlane.f32.xlu0 %v1898
    %v1900 = vpop.xlane.xlu0 %1899
    %v1901 = vmul.f32 %v1889, 0.03125
    %v1902 = vmul.f32 %v1892, 0.03125
    %v1903 = vmul.f32 %v1901, 32.0
    %v1904 = vmul.f32 %v1902, 32.0
    %v1905 = vmul.f32 %v1903, %v1901
    %v1906 = vmul.f32 %v1904, %v1902
    %v1907 = vsub.f32 %v1897, %v1905
    %v1908 = vsub.f32 %v1900, %v1906
    %v1909 = vmul.f32 %v1907, 0.032258064
    %v1910 = vmul.f32 %v1908, 0.032258064
    %v1911 = vmax.f32 %v1909, 0.0
    %v1912 = vmax.f32 %v1910, 0.0
    %v1913 = vrsqrt.pop %v1911
    %v1914 = vmul.f32 %v1911, %v1913
    %vm1915 = vcmp.eq.f32.partialorder %v1911, inf
    %v1916 = vsel %vm1915, %v1911, %v1914
    %vm1917 = vcmp.eq.f32.partialorder %v1911, 0.0
    %v1918 = vand.u32 %v1911, 2147483648
    %v1919 = vsel %vm1917, %v1918, %v1916
    %v1920 = vrsqrt.pop %v1912
    %v1921 = vmul.f32 %v1912, %v1920
    %vm1922 = vcmp.eq.f32.partialorder %v1912, inf
    %v1923 = vsel %vm1922, %v1912, %v1921
    %vm1924 = vcmp.eq.f32.partialorder %v1912, 0.0
    %v1925 = vand.u32 %v1912, 2147483648
    %v1926 = vsel %vm1924, %v1925, %v1923
    %v1927 = vadd.f32 %v1919, 1e-06
    %v1928 = vadd.f32 %v1926, 1e-06
    %v1929 = vrcp.pop %v1927
    %v1930 = vrcp.pop %v1928
    %v1931 = vsub.f32 %v1885, %v1901
    %v1932 = vsub.f32 %v1886, %v1902
    %v1933 = vmul.f32 %v1931, %v1929
    %v1934 = vmul.f32 %v1932, %v1930
    %s1935 = scalar_lea.vmem %s1, 32
    %v1936 = vld [vmem:[%s1935] sm:$0xff]
    %v1937 = vld [vmem:[%s1935 + $0x8] sm:$0xff]
    %v1938 = vld [vmem:[%s1935 + $0x10] sm:$0xff]
    %v1939 = vld [vmem:[%s1935 + $0x18] sm:$0xff]
    %s1940 = scalar_lea.vmem %s2, 1
    %v1941 = vld [vmem:[%s1940] sm:$0x1]
    %v1943 = vlaneseq
    %v1944 = vshrl.u32 %v1943, 7
    %v1945 = vsub.s32 0, %v1944
    %v1946 = vrot.slane %v1941, %v1945
    %v1949 = vsel %vm49, %v1933, 0
    %v1952 = vsel %vm49, %v1934, 0
    %1954 = vmatprep.subr.mxu0 0.0
    %1955 = vmatpush1.msra.mxu0 %v1936
    %1956 = vmatprep.subr.mxu0 0.0
    %1957 = vmatpush1.msra.mxu0 %v1937
    %1958 = vmatprep.subr.mxu0 0.0
    %1959 = vmatpush1.msra.mxu0 %v1938
    %1960 = vmatprep.subr.mxu0 0.0
    %1961 = vmatpush1.msra.mxu0 %v1939
    %1962 = vmatprep.subr.mxu0 0.0
    %1963 = vmatpush1.msra.mxu0 0.0
    %1964 = vmatprep.subr.mxu0 0.0
    %1965 = vmatpush1.msra.mxu0 0.0
    %1966 = vmatprep.subr.mxu0 0.0
    %1967 = vmatpush1.msra.mxu0 0.0
    %1968 = vmatprep.subr.mxu0 0.0
    %1969 = vmatpush1.msra.mxu0 0.0
    %1970 = vmatprep.subr.mxu0 0.0
    %1971 = vmatpush1.msra.mxu0 0.0
    %1972 = vmatprep.subr.mxu0 0.0
    %1973 = vmatpush1.msra.mxu0 0.0
    %1974 = vmatprep.subr.mxu0 0.0
    %1975 = vmatpush1.msra.mxu0 0.0
    %1976 = vmatprep.subr.mxu0 0.0
    %1977 = vmatpush1.msra.mxu0 0.0
    %1978 = vmatprep.subr.mxu0 0.0
    %1979 = vmatpush1.msra.mxu0 0.0
    %1980 = vmatprep.subr.mxu0 0.0
    %1981 = vmatpush1.msra.mxu0 0.0
    %1982 = vmatprep.subr.mxu0 0.0
    %1983 = vmatpush1.msra.mxu0 0.0
    %1984 = vmatprep.subr.mxu0 0.0
    %1985 = vmatpush1.msra.mxu0 0.0
    %1986 = vmatprep.subr.mxu0 0.0
    %1987 = vmatpush1.msra.mxu0 0.0
    %1988 = vmatprep.subr.mxu0 0.0
    %1989 = vmatpush1.msra.mxu0 0.0
    %1990 = vmatprep.subr.mxu0 0.0
    %1991 = vmatpush1.msra.mxu0 0.0
    %1992 = vmatprep.subr.mxu0 0.0
    %1993 = vmatpush1.msra.mxu0 0.0
    %1994 = vmatprep.subr.mxu0 0.0
    %1995 = vmatpush1.msra.mxu0 0.0
    %1996 = vmatprep.subr.mxu0 0.0
    %1997 = vmatpush1.msra.mxu0 0.0
    %1998 = vmatprep.subr.mxu0 0.0
    %1999 = vmatpush1.msra.mxu0 0.0
    %2000 = vmatprep.subr.mxu0 0.0
    %2001 = vmatpush1.msra.mxu0 0.0
    %2002 = vmatprep.subr.mxu0 0.0
    %2003 = vmatpush1.msra.mxu0 0.0
    %2004 = vmatprep.subr.mxu0 0.0
    %2005 = vmatpush1.msra.mxu0 0.0
    %2006 = vmatprep.subr.mxu0 0.0
    %2007 = vmatpush1.msra.mxu0 0.0
    %2008 = vmatprep.subr.mxu0 0.0
    %2009 = vmatpush1.msra.mxu0 0.0
    %2010 = vmatprep.subr.mxu0 0.0
    %2011 = vmatpush1.msra.mxu0 0.0
    %2012 = vmatprep.subr.mxu0 0.0
    %2013 = vmatpush1.msra.mxu0 0.0
    %2014 = vmatprep.subr.mxu0 0.0
    %2015 = vmatpush1.msra.mxu0 0.0
    %2016 = vmatprep.subr.mxu0 0.0
    %2017 = vmatpush1.msra.mxu0 0.0
    %2018 = vmatprep.mubr.f32.mxu0 0.0
    %2019 = vmatmul.mubr.f32.gmra.mrb[0].mxu0 %v1949
    %v2020 = vpop.f32.mrb[0].mxu0
    %v2021 = vadd.f32 %v1946, %v2020
    %v2022 = vpop.f32.mrb[0].mxu0
    %2023 = vmatprep.mubr.f32.mxu0 0.0
    %2024 = vmatmul.mubr.f32.gmra.mrb[0].mxu0 %v1952
    %v2025 = vpop.f32.mrb[0].mxu0
    %v2026 = vadd.f32 %v1946, %v2025
    %v2027 = vpop.f32.mrb[0].mxu0
    %2028 = vdwg.mxu0
    %v2029 = vmul.f32 %v2021, 0.35355338
    %v2030 = vmul.f32 %v2026, 0.35355338
    %2032 = vrot.lane.b32.xlu0 %v2021, 96
    %v2033 = vpop.permute.xlu0 %2032
    %v2035 = vsel %vm195, %v2029, 0
    %v2037 = vsel %vm195, %v2033, 0
    %2039 = vmatprep.subr.mxu0 0.0
    %2040 = vmatpush1.xpose.msra.mxu0 %v2037
    %2041 = vmatprep.subr.mxu0 0.0
    %2042 = vmatpush1.xpose.msra.mxu0 0.0
    %2043 = vmatprep.subr.mxu0 0.0
    %2044 = vmatpush1.xpose.msra.mxu0 0.0
    %2045 = vmatprep.subr.mxu0 0.0
    %2046 = vmatpush1.xpose.msra.mxu0 0.0
    %2047 = vmatprep.subr.mxu0 0.0
    %2048 = vmatpush1.xpose.msra.mxu0 0.0
    %2049 = vmatprep.subr.mxu0 0.0
    %2050 = vmatpush1.xpose.msra.mxu0 0.0
    %2051 = vmatprep.subr.mxu0 0.0
    %2052 = vmatpush1.xpose.msra.mxu0 0.0
    %2053 = vmatprep.subr.mxu0 0.0
    %2054 = vmatpush1.xpose.msra.mxu0 0.0
    %2055 = vmatprep.subr.mxu0 0.0
    %2056 = vmatpush1.xpose.msra.mxu0 0.0
    %2057 = vmatprep.subr.mxu0 0.0
    %2058 = vmatpush1.xpose.msra.mxu0 0.0
    %2059 = vmatprep.subr.mxu0 0.0
    %2060 = vmatpush1.xpose.msra.mxu0 0.0
    %2061 = vmatprep.subr.mxu0 0.0
    %2062 = vmatpush1.xpose.msra.mxu0 0.0
    %2063 = vmatprep.subr.mxu0 0.0
    %2064 = vmatpush1.xpose.msra.mxu0 0.0
    %2065 = vmatprep.subr.mxu0 0.0
    %2066 = vmatpush1.xpose.msra.mxu0 0.0
    %2067 = vmatprep.subr.mxu0 0.0
    %2068 = vmatpush1.xpose.msra.mxu0 0.0
    %2069 = vmatprep.subr.mxu0 0.0
    %2070 = vmatpush1.xpose.msra.mxu0 0.0
    %2071 = vmatprep.subr.mxu0 0.0
    %2072 = vmatpush1.xpose.msra.mxu0 0.0
    %2073 = vmatprep.subr.mxu0 0.0
    %2074 = vmatpush1.xpose.msra.mxu0 0.0
    %2075 = vmatprep.subr.mxu0 0.0
    %2076 = vmatpush1.xpose.msra.mxu0 0.0
    %2077 = vmatprep.subr.mxu0 0.0
    %2078 = vmatpush1.xpose.msra.mxu0 0.0
    %2079 = vmatprep.subr.mxu0 0.0
    %2080 = vmatpush1.xpose.msra.mxu0 0.0
    %2081 = vmatprep.subr.mxu0 0.0
    %2082 = vmatpush1.xpose.msra.mxu0 0.0
    %2083 = vmatprep.subr.mxu0 0.0
    %2084 = vmatpush1.xpose.msra.mxu0 0.0
    %2085 = vmatprep.subr.mxu0 0.0
    %2086 = vmatpush1.xpose.msra.mxu0 0.0
    %2087 = vmatprep.subr.mxu0 0.0
    %2088 = vmatpush1.xpose.msra.mxu0 0.0
    %2089 = vmatprep.subr.mxu0 0.0
    %2090 = vmatpush1.xpose.msra.mxu0 0.0
    %2091 = vmatprep.subr.mxu0 0.0
    %2092 = vmatpush1.xpose.msra.mxu0 0.0
    %2093 = vmatprep.subr.mxu0 0.0
    %2094 = vmatpush1.xpose.msra.mxu0 0.0
    %2095 = vmatprep.subr.mxu0 0.0
    %2096 = vmatpush1.xpose.msra.mxu0 0.0
    %2097 = vmatprep.subr.mxu0 0.0
    %2098 = vmatpush1.xpose.msra.mxu0 0.0
    %2099 = vmatprep.subr.mxu0 0.0
    %2100 = vmatpush1.xpose.msra.mxu0 0.0
    %2101 = vmatprep.subr.mxu0 0.0
    %2102 = vmatpush1.xpose.msra.mxu0 0.0
    %2103 = vmatprep.mubr.f32.mxu0 0.0
    %2104 = vmatmul.mubr.f32.gmra.mrb[0].mxu0 %v2035
    %v2105 = vpop.f32.mrb[0].mxu0
    %v2106 = vadd.f32 0.0, %v2105
    %v2107 = vpop.f32.mrb[0].mxu0
    %2108 = vdwg.mxu0
    %v2109 = vsel %vm195, %v2106, -inf
    %2110 = vmax.xlane.f32.xlu0 %v2109
    %v2111 = vpop.xlane.xlu0 %2110
    %v2112 = vsub.f32 %v2106, %v2111
    %v2113 = vmul.f32 %v2112, 1.442695
    %v2114 = vpow.pop %v2113
    %v2115 = vsel %vm195, %v2114, 0.0
    %2116 = vadd.xlane.f32.xlu0 %v2115
    %v2117 = vpop.xlane.xlu0 %2116
    %v2118 = vrcp.pop %v2117
    %v2119 = vmul.f32 %v2114, %v2118
    %2120 = vrot.lane.b32.xlu0 %v2021, 64
    %v2121 = vpop.permute.xlu0 %2120
    %v2124 = vsel %vm195, %v2119, 0
    %2126 = vmatprep.subr.mxu0 0.0
    %2127 = vmatpush1.msra.mxu0 %v2121
    %2128 = vmatprep.subr.mxu0 0.0
    %2129 = vmatpush1.msra.mxu0 0.0
    %2130 = vmatprep.subr.mxu0 0.0
    %2131 = vmatpush1.msra.mxu0 0.0
    %2132 = vmatprep.subr.mxu0 0.0
    %2133 = vmatpush1.msra.mxu0 0.0
    %2134 = vmatprep.subr.mxu0 0.0
    %2135 = vmatpush1.msra.mxu0 0.0
    %2136 = vmatprep.subr.mxu0 0.0
    %2137 = vmatpush1.msra.mxu0 0.0
    %2138 = vmatprep.subr.mxu0 0.0
    %2139 = vmatpush1.msra.mxu0 0.0
    %2140 = vmatprep.subr.mxu0 0.0
    %2141 = vmatpush1.msra.mxu0 0.0
    %2142 = vmatprep.subr.mxu0 0.0
    %2143 = vmatpush1.msra.mxu0 0.0
    %2144 = vmatprep.subr.mxu0 0.0
    %2145 = vmatpush1.msra.mxu0 0.0
    %2146 = vmatprep.subr.mxu0 0.0
    %2147 = vmatpush1.msra.mxu0 0.0
    %2148 = vmatprep.subr.mxu0 0.0
    %2149 = vmatpush1.msra.mxu0 0.0
    %2150 = vmatprep.subr.mxu0 0.0
    %2151 = vmatpush1.msra.mxu0 0.0
    %2152 = vmatprep.subr.mxu0 0.0
    %2153 = vmatpush1.msra.mxu0 0.0
    %2154 = vmatprep.subr.mxu0 0.0
    %2155 = vmatpush1.msra.mxu0 0.0
    %2156 = vmatprep.subr.mxu0 0.0
    %2157 = vmatpush1.msra.mxu0 0.0
    %2158 = vmatprep.subr.mxu0 0.0
    %2159 = vmatpush1.msra.mxu0 0.0
    %2160 = vmatprep.subr.mxu0 0.0
    %2161 = vmatpush1.msra.mxu0 0.0
    %2162 = vmatprep.subr.mxu0 0.0
    %2163 = vmatpush1.msra.mxu0 0.0
    %2164 = vmatprep.subr.mxu0 0.0
    %2165 = vmatpush1.msra.mxu0 0.0
    %2166 = vmatprep.subr.mxu0 0.0
    %2167 = vmatpush1.msra.mxu0 0.0
    %2168 = vmatprep.subr.mxu0 0.0
    %2169 = vmatpush1.msra.mxu0 0.0
    %2170 = vmatprep.subr.mxu0 0.0
    %2171 = vmatpush1.msra.mxu0 0.0
    %2172 = vmatprep.subr.mxu0 0.0
    %2173 = vmatpush1.msra.mxu0 0.0
    %2174 = vmatprep.subr.mxu0 0.0
    %2175 = vmatpush1.msra.mxu0 0.0
    %2176 = vmatprep.subr.mxu0 0.0
    %2177 = vmatpush1.msra.mxu0 0.0
    %2178 = vmatprep.subr.mxu0 0.0
    %2179 = vmatpush1.msra.mxu0 0.0
    %2180 = vmatprep.subr.mxu0 0.0
    %2181 = vmatpush1.msra.mxu0 0.0
    %2182 = vmatprep.subr.mxu0 0.0
    %2183 = vmatpush1.msra.mxu0 0.0
    %2184 = vmatprep.subr.mxu0 0.0
    %2185 = vmatpush1.msra.mxu0 0.0
    %2186 = vmatprep.subr.mxu0 0.0
    %2187 = vmatpush1.msra.mxu0 0.0
    %2188 = vmatprep.subr.mxu0 0.0
    %2189 = vmatpush1.msra.mxu0 0.0
    %2190 = vmatprep.mubr.f32.mxu0 0.0
    %2191 = vmatmul.mubr.f32.gmra.mrb[0].mxu0 %v2124
    %v2192 = vpop.f32.mrb[0].mxu0
    %v2193 = vadd.f32 0.0, %v2192
    %v2194 = vpop.f32.mrb[0].mxu0
    %2195 = vdwg.mxu0
    %2196 = vst.msk [vmem:[#allocation2] sm:$0xff] %vm195, %v2193
    %2197 = vrot.lane.b32.xlu0 %v2029, 120
    %v2198 = vpop.permute.xlu0 %2197
    %2199 = vrot.lane.b32.xlu0 %v2021, 88
    %v2200 = vpop.permute.xlu0 %2199
    %v2201 = vsel %vm195, %v2198, 0
    %v2203 = vsel %vm195, %v2200, 0
    %2205 = vmatprep.subr.mxu0 0.0
    %2206 = vmatpush1.xpose.msra.mxu0 %v2203
    %2207 = vmatprep.subr.mxu0 0.0
    %2208 = vmatpush1.xpose.msra.mxu0 0.0
    %2209 = vmatprep.subr.mxu0 0.0
    %2210 = vmatpush1.xpose.msra.mxu0 0.0
    %2211 = vmatprep.subr.mxu0 0.0
    %2212 = vmatpush1.xpose.msra.mxu0 0.0
    %2213 = vmatprep.subr.mxu0 0.0
    %2214 = vmatpush1.xpose.msra.mxu0 0.0
    %2215 = vmatprep.subr.mxu0 0.0
    %2216 = vmatpush1.xpose.msra.mxu0 0.0
    %2217 = vmatprep.subr.mxu0 0.0
    %2218 = vmatpush1.xpose.msra.mxu0 0.0
    %2219 = vmatprep.subr.mxu0 0.0
    %2220 = vmatpush1.xpose.msra.mxu0 0.0
    %2221 = vmatprep.subr.mxu0 0.0
    %2222 = vmatpush1.xpose.msra.mxu0 0.0
    %2223 = vmatprep.subr.mxu0 0.0
    %2224 = vmatpush1.xpose.msra.mxu0 0.0
    %2225 = vmatprep.subr.mxu0 0.0
    %2226 = vmatpush1.xpose.msra.mxu0 0.0
    %2227 = vmatprep.subr.mxu0 0.0
    %2228 = vmatpush1.xpose.msra.mxu0 0.0
    %2229 = vmatprep.subr.mxu0 0.0
    %2230 = vmatpush1.xpose.msra.mxu0 0.0
    %2231 = vmatprep.subr.mxu0 0.0
    %2232 = vmatpush1.xpose.msra.mxu0 0.0
    %2233 = vmatprep.subr.mxu0 0.0
    %2234 = vmatpush1.xpose.msra.mxu0 0.0
    %2235 = vmatprep.subr.mxu0 0.0
    %2236 = vmatpush1.xpose.msra.mxu0 0.0
    %2237 = vmatprep.subr.mxu0 0.0
    %2238 = vmatpush1.xpose.msra.mxu0 0.0
    %2239 = vmatprep.subr.mxu0 0.0
    %2240 = vmatpush1.xpose.msra.mxu0 0.0
    %2241 = vmatprep.subr.mxu0 0.0
    %2242 = vmatpush1.xpose.msra.mxu0 0.0
    %2243 = vmatprep.subr.mxu0 0.0
    %2244 = vmatpush1.xpose.msra.mxu0 0.0
    %2245 = vmatprep.subr.mxu0 0.0
    %2246 = vmatpush1.xpose.msra.mxu0 0.0
    %2247 = vmatprep.subr.mxu0 0.0
    %2248 = vmatpush1.xpose.msra.mxu0 0.0
    %2249 = vmatprep.subr.mxu0 0.0
    %2250 = vmatpush1.xpose.msra.mxu0 0.0
    %2251 = vmatprep.subr.mxu0 0.0
    %2252 = vmatpush1.xpose.msra.mxu0 0.0
    %2253 = vmatprep.subr.mxu0 0.0
    %2254 = vmatpush1.xpose.msra.mxu0 0.0
    %2255 = vmatprep.subr.mxu0 0.0
    %2256 = vmatpush1.xpose.msra.mxu0 0.0
    %2257 = vmatprep.subr.mxu0 0.0
    %2258 = vmatpush1.xpose.msra.mxu0 0.0
    %2259 = vmatprep.subr.mxu0 0.0
    %2260 = vmatpush1.xpose.msra.mxu0 0.0
    %2261 = vmatprep.subr.mxu0 0.0
    %2262 = vmatpush1.xpose.msra.mxu0 0.0
    %2263 = vmatprep.subr.mxu0 0.0
    %2264 = vmatpush1.xpose.msra.mxu0 0.0
    %2265 = vmatprep.subr.mxu0 0.0
    %2266 = vmatpush1.xpose.msra.mxu0 0.0
    %2267 = vmatprep.subr.mxu0 0.0
    %2268 = vmatpush1.xpose.msra.mxu0 0.0
    %2269 = vmatprep.mubr.f32.mxu0 0.0
    %2270 = vmatmul.mubr.f32.gmra.mrb[0].mxu0 %v2201
    %v2271 = vpop.f32.mrb[0].mxu0
    %v2272 = vadd.f32 0.0, %v2271
    %v2273 = vpop.f32.mrb[0].mxu0
    %2274 = vdwg.mxu0
    %v2275 = vsel %vm195, %v2272, -inf
    %2276 = vmax.xlane.f32.xlu0 %v2275
    %v2277 = vpop.xlane.xlu0 %2276
    %v2278 = vsub.f32 %v2272, %v2277
    %v2279 = vmul.f32 %v2278, 1.442695
    %v2280 = vpow.pop %v2279
    %v2281 = vsel %vm195, %v2280, 0.0
    %2282 = vadd.xlane.f32.xlu0 %v2281
    %v2283 = vpop.xlane.xlu0 %2282
    %v2284 = vrcp.pop %v2283
    %v2285 = vmul.f32 %v2280, %v2284
    %2286 = vrot.lane.b32.xlu0 %v2021, 56
    %v2287 = vpop.permute.xlu0 %2286
    %v2290 = vsel %vm195, %v2285, 0
    %2292 = vmatprep.subr.mxu0 0.0
    %2293 = vmatpush1.msra.mxu0 %v2287
    %2294 = vmatprep.subr.mxu0 0.0
    %2295 = vmatpush1.msra.mxu0 0.0
    %2296 = vmatprep.subr.mxu0 0.0
    %2297 = vmatpush1.msra.mxu0 0.0
    %2298 = vmatprep.subr.mxu0 0.0
    %2299 = vmatpush1.msra.mxu0 0.0
    %2300 = vmatprep.subr.mxu0 0.0
    %2301 = vmatpush1.msra.mxu0 0.0
    %2302 = vmatprep.subr.mxu0 0.0
    %2303 = vmatpush1.msra.mxu0 0.0
    %2304 = vmatprep.subr.mxu0 0.0
    %2305 = vmatpush1.msra.mxu0 0.0
    %2306 = vmatprep.subr.mxu0 0.0
    %2307 = vmatpush1.msra.mxu0 0.0
    %2308 = vmatprep.subr.mxu0 0.0
    %2309 = vmatpush1.msra.mxu0 0.0
    %2310 = vmatprep.subr.mxu0 0.0
    %2311 = vmatpush1.msra.mxu0 0.0
    %2312 = vmatprep.subr.mxu0 0.0
    %2313 = vmatpush1.msra.mxu0 0.0
    %2314 = vmatprep.subr.mxu0 0.0
    %2315 = vmatpush1.msra.mxu0 0.0
    %2316 = vmatprep.subr.mxu0 0.0
    %2317 = vmatpush1.msra.mxu0 0.0
    %2318 = vmatprep.subr.mxu0 0.0
    %2319 = vmatpush1.msra.mxu0 0.0
    %2320 = vmatprep.subr.mxu0 0.0
    %2321 = vmatpush1.msra.mxu0 0.0
    %2322 = vmatprep.subr.mxu0 0.0
    %2323 = vmatpush1.msra.mxu0 0.0
    %2324 = vmatprep.subr.mxu0 0.0
    %2325 = vmatpush1.msra.mxu0 0.0
    %2326 = vmatprep.subr.mxu0 0.0
    %2327 = vmatpush1.msra.mxu0 0.0
    %2328 = vmatprep.subr.mxu0 0.0
    %2329 = vmatpush1.msra.mxu0 0.0
    %2330 = vmatprep.subr.mxu0 0.0
    %2331 = vmatpush1.msra.mxu0 0.0
    %2332 = vmatprep.subr.mxu0 0.0
    %2333 = vmatpush1.msra.mxu0 0.0
    %2334 = vmatprep.subr.mxu0 0.0
    %2335 = vmatpush1.msra.mxu0 0.0
    %2336 = vmatprep.subr.mxu0 0.0
    %2337 = vmatpush1.msra.mxu0 0.0
    %2338 = vmatprep.subr.mxu0 0.0
    %2339 = vmatpush1.msra.mxu0 0.0
    %2340 = vmatprep.subr.mxu0 0.0
    %2341 = vmatpush1.msra.mxu0 0.0
    %2342 = vmatprep.subr.mxu0 0.0
    %2343 = vmatpush1.msra.mxu0 0.0
    %2344 = vmatprep.subr.mxu0 0.0
    %2345 = vmatpush1.msra.mxu0 0.0
    %2346 = vmatprep.subr.mxu0 0.0
    %2347 = vmatpush1.msra.mxu0 0.0
    %2348 = vmatprep.subr.mxu0 0.0
    %2349 = vmatpush1.msra.mxu0 0.0
    %2350 = vmatprep.subr.mxu0 0.0
    %2351 = vmatpush1.msra.mxu0 0.0
    %2352 = vmatprep.subr.mxu0 0.0
    %2353 = vmatpush1.msra.mxu0 0.0
    %2354 = vmatprep.subr.mxu0 0.0
    %2355 = vmatpush1.msra.mxu0 0.0
    %2356 = vmatprep.mubr.f32.mxu0 0.0
    %2357 = vmatmul.mubr.f32.gmra.mrb[0].mxu0 %v2290
    %v2358 = vpop.f32.mrb[0].mxu0
    %v2359 = vadd.f32 0.0, %v2358
    %v2360 = vpop.f32.mrb[0].mxu0
    %2361 = vdwg.mxu0
    %2363 = vrot.lane.b32.xlu0 %v2359, 8
    %v2364 = vpop.permute.xlu0 %2363
    %2366 = vst.msk [vmem:[#allocation2] sm:$0xff] %vm528, %v2364
    %2367 = vrot.lane.b32.xlu0 %v2029, 112
    %v2368 = vpop.permute.xlu0 %2367
    %2369 = vrot.lane.b32.xlu0 %v2021, 80
    %v2370 = vpop.permute.xlu0 %2369
    %v2371 = vsel %vm195, %v2368, 0
    %v2373 = vsel %vm195, %v2370, 0
    %2375 = vmatprep.subr.mxu0 0.0
    %2376 = vmatpush1.xpose.msra.mxu0 %v2373
    %2377 = vmatprep.subr.mxu0 0.0
    %2378 = vmatpush1.xpose.msra.mxu0 0.0
    %2379 = vmatprep.subr.mxu0 0.0
    %2380 = vmatpush1.xpose.msra.mxu0 0.0
    %2381 = vmatprep.subr.mxu0 0.0
    %2382 = vmatpush1.xpose.msra.mxu0 0.0
    %2383 = vmatprep.subr.mxu0 0.0
    %2384 = vmatpush1.xpose.msra.mxu0 0.0
    %2385 = vmatprep.subr.mxu0 0.0
    %2386 = vmatpush1.xpose.msra.mxu0 0.0
    %2387 = vmatprep.subr.mxu0 0.0
    %2388 = vmatpush1.xpose.msra.mxu0 0.0
    %2389 = vmatprep.subr.mxu0 0.0
    %2390 = vmatpush1.xpose.msra.mxu0 0.0
    %2391 = vmatprep.subr.mxu0 0.0
    %2392 = vmatpush1.xpose.msra.mxu0 0.0
    %2393 = vmatprep.subr.mxu0 0.0
    %2394 = vmatpush1.xpose.msra.mxu0 0.0
    %2395 = vmatprep.subr.mxu0 0.0
    %2396 = vmatpush1.xpose.msra.mxu0 0.0
    %2397 = vmatprep.subr.mxu0 0.0
    %2398 = vmatpush1.xpose.msra.mxu0 0.0
    %2399 = vmatprep.subr.mxu0 0.0
    %2400 = vmatpush1.xpose.msra.mxu0 0.0
    %2401 = vmatprep.subr.mxu0 0.0
    %2402 = vmatpush1.xpose.msra.mxu0 0.0
    %2403 = vmatprep.subr.mxu0 0.0
    %2404 = vmatpush1.xpose.msra.mxu0 0.0
    %2405 = vmatprep.subr.mxu0 0.0
    %2406 = vmatpush1.xpose.msra.mxu0 0.0
    %2407 = vmatprep.subr.mxu0 0.0
    %2408 = vmatpush1.xpose.msra.mxu0 0.0
    %2409 = vmatprep.subr.mxu0 0.0
    %2410 = vmatpush1.xpose.msra.mxu0 0.0
    %2411 = vmatprep.subr.mxu0 0.0
    %2412 = vmatpush1.xpose.msra.mxu0 0.0
    %2413 = vmatprep.subr.mxu0 0.0
    %2414 = vmatpush1.xpose.msra.mxu0 0.0
    %2415 = vmatprep.subr.mxu0 0.0
    %2416 = vmatpush1.xpose.msra.mxu0 0.0
    %2417 = vmatprep.subr.mxu0 0.0
    %2418 = vmatpush1.xpose.msra.mxu0 0.0
    %2419 = vmatprep.subr.mxu0 0.0
    %2420 = vmatpush1.xpose.msra.mxu0 0.0
    %2421 = vmatprep.subr.mxu0 0.0
    %2422 = vmatpush1.xpose.msra.mxu0 0.0
    %2423 = vmatprep.subr.mxu0 0.0
    %2424 = vmatpush1.xpose.msra.mxu0 0.0
    %2425 = vmatprep.subr.mxu0 0.0
    %2426 = vmatpush1.xpose.msra.mxu0 0.0
    %2427 = vmatprep.subr.mxu0 0.0
    %2428 = vmatpush1.xpose.msra.mxu0 0.0
    %2429 = vmatprep.subr.mxu0 0.0
    %2430 = vmatpush1.xpose.msra.mxu0 0.0
    %2431 = vmatprep.subr.mxu0 0.0
    %2432 = vmatpush1.xpose.msra.mxu0 0.0
    %2433 = vmatprep.subr.mxu0 0.0
    %2434 = vmatpush1.xpose.msra.mxu0 0.0
    %2435 = vmatprep.subr.mxu0 0.0
    %2436 = vmatpush1.xpose.msra.mxu0 0.0
    %2437 = vmatprep.subr.mxu0 0.0
    %2438 = vmatpush1.xpose.msra.mxu0 0.0
    %2439 = vmatprep.mubr.f32.mxu0 0.0
    %2440 = vmatmul.mubr.f32.gmra.mrb[0].mxu0 %v2371
    %v2441 = vpop.f32.mrb[0].mxu0
    %v2442 = vadd.f32 0.0, %v2441
    %v2443 = vpop.f32.mrb[0].mxu0
    %2444 = vdwg.mxu0
    %v2445 = vsel %vm195, %v2442, -inf
    %2446 = vmax.xlane.f32.xlu0 %v2445
    %v2447 = vpop.xlane.xlu0 %2446
    %v2448 = vsub.f32 %v2442, %v2447
    %v2449 = vmul.f32 %v2448, 1.442695
    %v2450 = vpow.pop %v2449
    %v2451 = vsel %vm195, %v2450, 0.0
    %2452 = vadd.xlane.f32.xlu0 %v2451
    %v2453 = vpop.xlane.xlu0 %2452
    %v2454 = vrcp.pop %v2453
    %v2455 = vmul.f32 %v2450, %v2454
    %2456 = vrot.lane.b32.xlu0 %v2021, 48
    %v2457 = vpop.permute.xlu0 %2456
    %v2460 = vsel %vm195, %v2455, 0
    %2462 = vmatprep.subr.mxu0 0.0
    %2463 = vmatpush1.msra.mxu0 %v2457
    %2464 = vmatprep.subr.mxu0 0.0
    %2465 = vmatpush1.msra.mxu0 0.0
    %2466 = vmatprep.subr.mxu0 0.0
    %2467 = vmatpush1.msra.mxu0 0.0
    %2468 = vmatprep.subr.mxu0 0.0
    %2469 = vmatpush1.msra.mxu0 0.0
    %2470 = vmatprep.subr.mxu0 0.0
    %2471 = vmatpush1.msra.mxu0 0.0
    %2472 = vmatprep.subr.mxu0 0.0
    %2473 = vmatpush1.msra.mxu0 0.0
    %2474 = vmatprep.subr.mxu0 0.0
    %2475 = vmatpush1.msra.mxu0 0.0
    %2476 = vmatprep.subr.mxu0 0.0
    %2477 = vmatpush1.msra.mxu0 0.0
    %2478 = vmatprep.subr.mxu0 0.0
    %2479 = vmatpush1.msra.mxu0 0.0
    %2480 = vmatprep.subr.mxu0 0.0
    %2481 = vmatpush1.msra.mxu0 0.0
    %2482 = vmatprep.subr.mxu0 0.0
    %2483 = vmatpush1.msra.mxu0 0.0
    %2484 = vmatprep.subr.mxu0 0.0
    %2485 = vmatpush1.msra.mxu0 0.0
    %2486 = vmatprep.subr.mxu0 0.0
    %2487 = vmatpush1.msra.mxu0 0.0
    %2488 = vmatprep.subr.mxu0 0.0
    %2489 = vmatpush1.msra.mxu0 0.0
    %2490 = vmatprep.subr.mxu0 0.0
    %2491 = vmatpush1.msra.mxu0 0.0
    %2492 = vmatprep.subr.mxu0 0.0
    %2493 = vmatpush1.msra.mxu0 0.0
    %2494 = vmatprep.subr.mxu0 0.0
    %2495 = vmatpush1.msra.mxu0 0.0
    %2496 = vmatprep.subr.mxu0 0.0
    %2497 = vmatpush1.msra.mxu0 0.0
    %2498 = vmatprep.subr.mxu0 0.0
    %2499 = vmatpush1.msra.mxu0 0.0
    %2500 = vmatprep.subr.mxu0 0.0
    %2501 = vmatpush1.msra.mxu0 0.0
    %2502 = vmatprep.subr.mxu0 0.0
    %2503 = vmatpush1.msra.mxu0 0.0
    %2504 = vmatprep.subr.mxu0 0.0
    %2505 = vmatpush1.msra.mxu0 0.0
    %2506 = vmatprep.subr.mxu0 0.0
    %2507 = vmatpush1.msra.mxu0 0.0
    %2508 = vmatprep.subr.mxu0 0.0
    %2509 = vmatpush1.msra.mxu0 0.0
    %2510 = vmatprep.subr.mxu0 0.0
    %2511 = vmatpush1.msra.mxu0 0.0
    %2512 = vmatprep.subr.mxu0 0.0
    %2513 = vmatpush1.msra.mxu0 0.0
    %2514 = vmatprep.subr.mxu0 0.0
    %2515 = vmatpush1.msra.mxu0 0.0
    %2516 = vmatprep.subr.mxu0 0.0
    %2517 = vmatpush1.msra.mxu0 0.0
    %2518 = vmatprep.subr.mxu0 0.0
    %2519 = vmatpush1.msra.mxu0 0.0
    %2520 = vmatprep.subr.mxu0 0.0
    %2521 = vmatpush1.msra.mxu0 0.0
    %2522 = vmatprep.subr.mxu0 0.0
    %2523 = vmatpush1.msra.mxu0 0.0
    %2524 = vmatprep.subr.mxu0 0.0
    %2525 = vmatpush1.msra.mxu0 0.0
    %2526 = vmatprep.mubr.f32.mxu0 0.0
    %2527 = vmatmul.mubr.f32.gmra.mrb[0].mxu0 %v2460
    %v2528 = vpop.f32.mrb[0].mxu0
    %v2529 = vadd.f32 0.0, %v2528
    %v2530 = vpop.f32.mrb[0].mxu0
    %2531 = vdwg.mxu0
    %2533 = vrot.lane.b32.xlu0 %v2529, 16
    %v2534 = vpop.permute.xlu0 %2533
    %2536 = vst.msk [vmem:[#allocation2] sm:$0xff] %vm699, %v2534
    %2537 = vrot.lane.b32.xlu0 %v2029, 104
    %v2538 = vpop.permute.xlu0 %2537
    %2539 = vrot.lane.b32.xlu0 %v2021, 72
    %v2540 = vpop.permute.xlu0 %2539
    %v2541 = vsel %vm195, %v2538, 0
    %v2543 = vsel %vm195, %v2540, 0
    %2545 = vmatprep.subr.mxu0 0.0
    %2546 = vmatpush1.xpose.msra.mxu0 %v2543
    %2547 = vmatprep.subr.mxu0 0.0
    %2548 = vmatpush1.xpose.msra.mxu0 0.0
    %2549 = vmatprep.subr.mxu0 0.0
    %2550 = vmatpush1.xpose.msra.mxu0 0.0
    %2551 = vmatprep.subr.mxu0 0.0
    %2552 = vmatpush1.xpose.msra.mxu0 0.0
    %2553 = vmatprep.subr.mxu0 0.0
    %2554 = vmatpush1.xpose.msra.mxu0 0.0
    %2555 = vmatprep.subr.mxu0 0.0
    %2556 = vmatpush1.xpose.msra.mxu0 0.0
    %2557 = vmatprep.subr.mxu0 0.0
    %2558 = vmatpush1.xpose.msra.mxu0 0.0
    %2559 = vmatprep.subr.mxu0 0.0
    %2560 = vmatpush1.xpose.msra.mxu0 0.0
    %2561 = vmatprep.subr.mxu0 0.0
    %2562 = vmatpush1.xpose.msra.mxu0 0.0
    %2563 = vmatprep.subr.mxu0 0.0
    %2564 = vmatpush1.xpose.msra.mxu0 0.0
    %2565 = vmatprep.subr.mxu0 0.0
    %2566 = vmatpush1.xpose.msra.mxu0 0.0
    %2567 = vmatprep.subr.mxu0 0.0
    %2568 = vmatpush1.xpose.msra.mxu0 0.0
    %2569 = vmatprep.subr.mxu0 0.0
    %2570 = vmatpush1.xpose.msra.mxu0 0.0
    %2571 = vmatprep.subr.mxu0 0.0
    %2572 = vmatpush1.xpose.msra.mxu0 0.0
    %2573 = vmatprep.subr.mxu0 0.0
    %2574 = vmatpush1.xpose.msra.mxu0 0.0
    %2575 = vmatprep.subr.mxu0 0.0
    %2576 = vmatpush1.xpose.msra.mxu0 0.0
    %2577 = vmatprep.subr.mxu0 0.0
    %2578 = vmatpush1.xpose.msra.mxu0 0.0
    %2579 = vmatprep.subr.mxu0 0.0
    %2580 = vmatpush1.xpose.msra.mxu0 0.0
    %2581 = vmatprep.subr.mxu0 0.0
    %2582 = vmatpush1.xpose.msra.mxu0 0.0
    %2583 = vmatprep.subr.mxu0 0.0
    %2584 = vmatpush1.xpose.msra.mxu0 0.0
    %2585 = vmatprep.subr.mxu0 0.0
    %2586 = vmatpush1.xpose.msra.mxu0 0.0
    %2587 = vmatprep.subr.mxu0 0.0
    %2588 = vmatpush1.xpose.msra.mxu0 0.0
    %2589 = vmatprep.subr.mxu0 0.0
    %2590 = vmatpush1.xpose.msra.mxu0 0.0
    %2591 = vmatprep.subr.mxu0 0.0
    %2592 = vmatpush1.xpose.msra.mxu0 0.0
    %2593 = vmatprep.subr.mxu0 0.0
    %2594 = vmatpush1.xpose.msra.mxu0 0.0
    %2595 = vmatprep.subr.mxu0 0.0
    %2596 = vmatpush1.xpose.msra.mxu0 0.0
    %2597 = vmatprep.subr.mxu0 0.0
    %2598 = vmatpush1.xpose.msra.mxu0 0.0
    %2599 = vmatprep.subr.mxu0 0.0
    %2600 = vmatpush1.xpose.msra.mxu0 0.0
    %2601 = vmatprep.subr.mxu0 0.0
    %2602 = vmatpush1.xpose.msra.mxu0 0.0
    %2603 = vmatprep.subr.mxu0 0.0
    %2604 = vmatpush1.xpose.msra.mxu0 0.0
    %2605 = vmatprep.subr.mxu0 0.0
    %2606 = vmatpush1.xpose.msra.mxu0 0.0
    %2607 = vmatprep.subr.mxu0 0.0
    %2608 = vmatpush1.xpose.msra.mxu0 0.0
    %2609 = vmatprep.mubr.f32.mxu0 0.0
    %2610 = vmatmul.mubr.f32.gmra.mrb[0].mxu0 %v2541
    %v2611 = vpop.f32.mrb[0].mxu0
    %v2612 = vadd.f32 0.0, %v2611
    %v2613 = vpop.f32.mrb[0].mxu0
    %2614 = vdwg.mxu0
    %v2615 = vsel %vm195, %v2612, -inf
    %2616 = vmax.xlane.f32.xlu0 %v2615
    %v2617 = vpop.xlane.xlu0 %2616
    %v2618 = vsub.f32 %v2612, %v2617
    %v2619 = vmul.f32 %v2618, 1.442695
    %v2620 = vpow.pop %v2619
    %v2621 = vsel %vm195, %v2620, 0.0
    %2622 = vadd.xlane.f32.xlu0 %v2621
    %v2623 = vpop.xlane.xlu0 %2622
    %v2624 = vrcp.pop %v2623
    %v2625 = vmul.f32 %v2620, %v2624
    %2626 = vrot.lane.b32.xlu0 %v2021, 40
    %v2627 = vpop.permute.xlu0 %2626
    %v2630 = vsel %vm195, %v2625, 0
    %2632 = vmatprep.subr.mxu0 0.0
    %2633 = vmatpush1.msra.mxu0 %v2627
    %2634 = vmatprep.subr.mxu0 0.0
    %2635 = vmatpush1.msra.mxu0 0.0
    %2636 = vmatprep.subr.mxu0 0.0
    %2637 = vmatpush1.msra.mxu0 0.0
    %2638 = vmatprep.subr.mxu0 0.0
    %2639 = vmatpush1.msra.mxu0 0.0
    %2640 = vmatprep.subr.mxu0 0.0
    %2641 = vmatpush1.msra.mxu0 0.0
    %2642 = vmatprep.subr.mxu0 0.0
    %2643 = vmatpush1.msra.mxu0 0.0
    %2644 = vmatprep.subr.mxu0 0.0
    %2645 = vmatpush1.msra.mxu0 0.0
    %2646 = vmatprep.subr.mxu0 0.0
    %2647 = vmatpush1.msra.mxu0 0.0
    %2648 = vmatprep.subr.mxu0 0.0
    %2649 = vmatpush1.msra.mxu0 0.0
    %2650 = vmatprep.subr.mxu0 0.0
    %2651 = vmatpush1.msra.mxu0 0.0
    %2652 = vmatprep.subr.mxu0 0.0
    %2653 = vmatpush1.msra.mxu0 0.0
    %2654 = vmatprep.subr.mxu0 0.0
    %2655 = vmatpush1.msra.mxu0 0.0
    %2656 = vmatprep.subr.mxu0 0.0
    %2657 = vmatpush1.msra.mxu0 0.0
    %2658 = vmatprep.subr.mxu0 0.0
    %2659 = vmatpush1.msra.mxu0 0.0
    %2660 = vmatprep.subr.mxu0 0.0
    %2661 = vmatpush1.msra.mxu0 0.0
    %2662 = vmatprep.subr.mxu0 0.0
    %2663 = vmatpush1.msra.mxu0 0.0
    %2664 = vmatprep.subr.mxu0 0.0
    %2665 = vmatpush1.msra.mxu0 0.0
    %2666 = vmatprep.subr.mxu0 0.0
    %2667 = vmatpush1.msra.mxu0 0.0
    %2668 = vmatprep.subr.mxu0 0.0
    %2669 = vmatpush1.msra.mxu0 0.0
    %2670 = vmatprep.subr.mxu0 0.0
    %2671 = vmatpush1.msra.mxu0 0.0
    %2672 = vmatprep.subr.mxu0 0.0
    %2673 = vmatpush1.msra.mxu0 0.0
    %2674 = vmatprep.subr.mxu0 0.0
    %2675 = vmatpush1.msra.mxu0 0.0
    %2676 = vmatprep.subr.mxu0 0.0
    %2677 = vmatpush1.msra.mxu0 0.0
    %2678 = vmatprep.subr.mxu0 0.0
    %2679 = vmatpush1.msra.mxu0 0.0
    %2680 = vmatprep.subr.mxu0 0.0
    %2681 = vmatpush1.msra.mxu0 0.0
    %2682 = vmatprep.subr.mxu0 0.0
    %2683 = vmatpush1.msra.mxu0 0.0
    %2684 = vmatprep.subr.mxu0 0.0
    %2685 = vmatpush1.msra.mxu0 0.0
    %2686 = vmatprep.subr.mxu0 0.0
    %2687 = vmatpush1.msra.mxu0 0.0
    %2688 = vmatprep.subr.mxu0 0.0
    %2689 = vmatpush1.msra.mxu0 0.0
    %2690 = vmatprep.subr.mxu0 0.0
    %2691 = vmatpush1.msra.mxu0 0.0
    %2692 = vmatprep.subr.mxu0 0.0
    %2693 = vmatpush1.msra.mxu0 0.0
    %2694 = vmatprep.subr.mxu0 0.0
    %2695 = vmatpush1.msra.mxu0 0.0
    %2696 = vmatprep.mubr.f32.mxu0 0.0
    %2697 = vmatmul.mubr.f32.gmra.mrb[0].mxu0 %v2630
    %v2698 = vpop.f32.mrb[0].mxu0
    %v2699 = vadd.f32 0.0, %v2698
    %v2700 = vpop.f32.mrb[0].mxu0
    %2701 = vdwg.mxu0
    %2703 = vrot.lane.b32.xlu0 %v2699, 24
    %v2704 = vpop.permute.xlu0 %2703
    %2706 = vst.msk [vmem:[#allocation2] sm:$0xff] %vm870, %v2704
    %2708 = vrot.lane.b32.xlu0 %v2026, 96
    %v2709 = vpop.permute.xlu0 %2708
    %v2711 = vsel %vm195, %v2030, 0
    %v2713 = vsel %vm195, %v2709, 0
    %2715 = vmatprep.subr.mxu0 0.0
    %2716 = vmatpush1.xpose.msra.mxu0 %v2713
    %2717 = vmatprep.subr.mxu0 0.0
    %2718 = vmatpush1.xpose.msra.mxu0 0.0
    %2719 = vmatprep.subr.mxu0 0.0
    %2720 = vmatpush1.xpose.msra.mxu0 0.0
    %2721 = vmatprep.subr.mxu0 0.0
    %2722 = vmatpush1.xpose.msra.mxu0 0.0
    %2723 = vmatprep.subr.mxu0 0.0
    %2724 = vmatpush1.xpose.msra.mxu0 0.0
    %2725 = vmatprep.subr.mxu0 0.0
    %2726 = vmatpush1.xpose.msra.mxu0 0.0
    %2727 = vmatprep.subr.mxu0 0.0
    %2728 = vmatpush1.xpose.msra.mxu0 0.0
    %2729 = vmatprep.subr.mxu0 0.0
    %2730 = vmatpush1.xpose.msra.mxu0 0.0
    %2731 = vmatprep.subr.mxu0 0.0
    %2732 = vmatpush1.xpose.msra.mxu0 0.0
    %2733 = vmatprep.subr.mxu0 0.0
    %2734 = vmatpush1.xpose.msra.mxu0 0.0
    %2735 = vmatprep.subr.mxu0 0.0
    %2736 = vmatpush1.xpose.msra.mxu0 0.0
    %2737 = vmatprep.subr.mxu0 0.0
    %2738 = vmatpush1.xpose.msra.mxu0 0.0
    %2739 = vmatprep.subr.mxu0 0.0
    %2740 = vmatpush1.xpose.msra.mxu0 0.0
    %2741 = vmatprep.subr.mxu0 0.0
    %2742 = vmatpush1.xpose.msra.mxu0 0.0
    %2743 = vmatprep.subr.mxu0 0.0
    %2744 = vmatpush1.xpose.msra.mxu0 0.0
    %2745 = vmatprep.subr.mxu0 0.0
    %2746 = vmatpush1.xpose.msra.mxu0 0.0
    %2747 = vmatprep.subr.mxu0 0.0
    %2748 = vmatpush1.xpose.msra.mxu0 0.0
    %2749 = vmatprep.subr.mxu0 0.0
    %2750 = vmatpush1.xpose.msra.mxu0 0.0
    %2751 = vmatprep.subr.mxu0 0.0
    %2752 = vmatpush1.xpose.msra.mxu0 0.0
    %2753 = vmatprep.subr.mxu0 0.0
    %2754 = vmatpush1.xpose.msra.mxu0 0.0
    %2755 = vmatprep.subr.mxu0 0.0
    %2756 = vmatpush1.xpose.msra.mxu0 0.0
    %2757 = vmatprep.subr.mxu0 0.0
    %2758 = vmatpush1.xpose.msra.mxu0 0.0
    %2759 = vmatprep.subr.mxu0 0.0
    %2760 = vmatpush1.xpose.msra.mxu0 0.0
    %2761 = vmatprep.subr.mxu0 0.0
    %2762 = vmatpush1.xpose.msra.mxu0 0.0
    %2763 = vmatprep.subr.mxu0 0.0
    %2764 = vmatpush1.xpose.msra.mxu0 0.0
    %2765 = vmatprep.subr.mxu0 0.0
    %2766 = vmatpush1.xpose.msra.mxu0 0.0
    %2767 = vmatprep.subr.mxu0 0.0
    %2768 = vmatpush1.xpose.msra.mxu0 0.0
    %2769 = vmatprep.subr.mxu0 0.0
    %2770 = vmatpush1.xpose.msra.mxu0 0.0
    %2771 = vmatprep.subr.mxu0 0.0
    %2772 = vmatpush1.xpose.msra.mxu0 0.0
    %2773 = vmatprep.subr.mxu0 0.0
    %2774 = vmatpush1.xpose.msra.mxu0 0.0
    %2775 = vmatprep.subr.mxu0 0.0
    %2776 = vmatpush1.xpose.msra.mxu0 0.0
    %2777 = vmatprep.subr.mxu0 0.0
    %2778 = vmatpush1.xpose.msra.mxu0 0.0
    %2779 = vmatprep.mubr.f32.mxu0 0.0
    %2780 = vmatmul.mubr.f32.gmra.mrb[0].mxu0 %v2711
    %v2781 = vpop.f32.mrb[0].mxu0
    %v2782 = vadd.f32 0.0, %v2781
    %v2783 = vpop.f32.mrb[0].mxu0
    %2784 = vdwg.mxu0
    %v2785 = vsel %vm195, %v2782, -inf
    %2786 = vmax.xlane.f32.xlu0 %v2785
    %v2787 = vpop.xlane.xlu0 %2786
    %v2788 = vsub.f32 %v2782, %v2787
    %v2789 = vmul.f32 %v2788, 1.442695
    %v2790 = vpow.pop %v2789
    %v2791 = vsel %vm195, %v2790, 0.0
    %2792 = vadd.xlane.f32.xlu0 %v2791
    %v2793 = vpop.xlane.xlu0 %2792
    %v2794 = vrcp.pop %v2793
    %v2795 = vmul.f32 %v2790, %v2794
    %2796 = vrot.lane.b32.xlu0 %v2026, 64
    %v2797 = vpop.permute.xlu0 %2796
    %v2800 = vsel %vm195, %v2795, 0
    %2802 = vmatprep.subr.mxu0 0.0
    %2803 = vmatpush1.msra.mxu0 %v2797
    %2804 = vmatprep.subr.mxu0 0.0
    %2805 = vmatpush1.msra.mxu0 0.0
    %2806 = vmatprep.subr.mxu0 0.0
    %2807 = vmatpush1.msra.mxu0 0.0
    %2808 = vmatprep.subr.mxu0 0.0
    %2809 = vmatpush1.msra.mxu0 0.0
    %2810 = vmatprep.subr.mxu0 0.0
    %2811 = vmatpush1.msra.mxu0 0.0
    %2812 = vmatprep.subr.mxu0 0.0
    %2813 = vmatpush1.msra.mxu0 0.0
    %2814 = vmatprep.subr.mxu0 0.0
    %2815 = vmatpush1.msra.mxu0 0.0
    %2816 = vmatprep.subr.mxu0 0.0
    %2817 = vmatpush1.msra.mxu0 0.0
    %2818 = vmatprep.subr.mxu0 0.0
    %2819 = vmatpush1.msra.mxu0 0.0
    %2820 = vmatprep.subr.mxu0 0.0
    %2821 = vmatpush1.msra.mxu0 0.0
    %2822 = vmatprep.subr.mxu0 0.0
    %2823 = vmatpush1.msra.mxu0 0.0
    %2824 = vmatprep.subr.mxu0 0.0
    %2825 = vmatpush1.msra.mxu0 0.0
    %2826 = vmatprep.subr.mxu0 0.0
    %2827 = vmatpush1.msra.mxu0 0.0
    %2828 = vmatprep.subr.mxu0 0.0
    %2829 = vmatpush1.msra.mxu0 0.0
    %2830 = vmatprep.subr.mxu0 0.0
    %2831 = vmatpush1.msra.mxu0 0.0
    %2832 = vmatprep.subr.mxu0 0.0
    %2833 = vmatpush1.msra.mxu0 0.0
    %2834 = vmatprep.subr.mxu0 0.0
    %2835 = vmatpush1.msra.mxu0 0.0
    %2836 = vmatprep.subr.mxu0 0.0
    %2837 = vmatpush1.msra.mxu0 0.0
    %2838 = vmatprep.subr.mxu0 0.0
    %2839 = vmatpush1.msra.mxu0 0.0
    %2840 = vmatprep.subr.mxu0 0.0
    %2841 = vmatpush1.msra.mxu0 0.0
    %2842 = vmatprep.subr.mxu0 0.0
    %2843 = vmatpush1.msra.mxu0 0.0
    %2844 = vmatprep.subr.mxu0 0.0
    %2845 = vmatpush1.msra.mxu0 0.0
    %2846 = vmatprep.subr.mxu0 0.0
    %2847 = vmatpush1.msra.mxu0 0.0
    %2848 = vmatprep.subr.mxu0 0.0
    %2849 = vmatpush1.msra.mxu0 0.0
    %2850 = vmatprep.subr.mxu0 0.0
    %2851 = vmatpush1.msra.mxu0 0.0
    %2852 = vmatprep.subr.mxu0 0.0
    %2853 = vmatpush1.msra.mxu0 0.0
    %2854 = vmatprep.subr.mxu0 0.0
    %2855 = vmatpush1.msra.mxu0 0.0
    %2856 = vmatprep.subr.mxu0 0.0
    %2857 = vmatpush1.msra.mxu0 0.0
    %2858 = vmatprep.subr.mxu0 0.0
    %2859 = vmatpush1.msra.mxu0 0.0
    %2860 = vmatprep.subr.mxu0 0.0
    %2861 = vmatpush1.msra.mxu0 0.0
    %2862 = vmatprep.subr.mxu0 0.0
    %2863 = vmatpush1.msra.mxu0 0.0
    %2864 = vmatprep.subr.mxu0 0.0
    %2865 = vmatpush1.msra.mxu0 0.0
    %2866 = vmatprep.mubr.f32.mxu0 0.0
    %2867 = vmatmul.mubr.f32.gmra.mrb[0].mxu0 %v2800
    %v2868 = vpop.f32.mrb[0].mxu0
    %v2869 = vadd.f32 0.0, %v2868
    %v2870 = vpop.f32.mrb[0].mxu0
    %2871 = vdwg.mxu0
    %2872 = vst.msk [vmem:[#allocation2 + $0x8] sm:$0xff] %vm195, %v2869
    %2873 = vrot.lane.b32.xlu0 %v2030, 120
    %v2874 = vpop.permute.xlu0 %2873
    %2875 = vrot.lane.b32.xlu0 %v2026, 88
    %v2876 = vpop.permute.xlu0 %2875
    %v2877 = vsel %vm195, %v2874, 0
    %v2879 = vsel %vm195, %v2876, 0
    %2881 = vmatprep.subr.mxu0 0.0
    %2882 = vmatpush1.xpose.msra.mxu0 %v2879
    %2883 = vmatprep.subr.mxu0 0.0
    %2884 = vmatpush1.xpose.msra.mxu0 0.0
    %2885 = vmatprep.subr.mxu0 0.0
    %2886 = vmatpush1.xpose.msra.mxu0 0.0
    %2887 = vmatprep.subr.mxu0 0.0
    %2888 = vmatpush1.xpose.msra.mxu0 0.0
    %2889 = vmatprep.subr.mxu0 0.0
    %2890 = vmatpush1.xpose.msra.mxu0 0.0
    %2891 = vmatprep.subr.mxu0 0.0
    %2892 = vmatpush1.xpose.msra.mxu0 0.0
    %2893 = vmatprep.subr.mxu0 0.0
    %2894 = vmatpush1.xpose.msra.mxu0 0.0
    %2895 = vmatprep.subr.mxu0 0.0
    %2896 = vmatpush1.xpose.msra.mxu0 0.0
    %2897 = vmatprep.subr.mxu0 0.0
    %2898 = vmatpush1.xpose.msra.mxu0 0.0
    %2899 = vmatprep.subr.mxu0 0.0
    %2900 = vmatpush1.xpose.msra.mxu0 0.0
    %2901 = vmatprep.subr.mxu0 0.0
    %2902 = vmatpush1.xpose.msra.mxu0 0.0
    %2903 = vmatprep.subr.mxu0 0.0
    %2904 = vmatpush1.xpose.msra.mxu0 0.0
    %2905 = vmatprep.subr.mxu0 0.0
    %2906 = vmatpush1.xpose.msra.mxu0 0.0
    %2907 = vmatprep.subr.mxu0 0.0
    %2908 = vmatpush1.xpose.msra.mxu0 0.0
    %2909 = vmatprep.subr.mxu0 0.0
    %2910 = vmatpush1.xpose.msra.mxu0 0.0
    %2911 = vmatprep.subr.mxu0 0.0
    %2912 = vmatpush1.xpose.msra.mxu0 0.0
    %2913 = vmatprep.subr.mxu0 0.0
    %2914 = vmatpush1.xpose.msra.mxu0 0.0
    %2915 = vmatprep.subr.mxu0 0.0
    %2916 = vmatpush1.xpose.msra.mxu0 0.0
    %2917 = vmatprep.subr.mxu0 0.0
    %2918 = vmatpush1.xpose.msra.mxu0 0.0
    %2919 = vmatprep.subr.mxu0 0.0
    %2920 = vmatpush1.xpose.msra.mxu0 0.0
    %2921 = vmatprep.subr.mxu0 0.0
    %2922 = vmatpush1.xpose.msra.mxu0 0.0
    %2923 = vmatprep.subr.mxu0 0.0
    %2924 = vmatpush1.xpose.msra.mxu0 0.0
    %2925 = vmatprep.subr.mxu0 0.0
    %2926 = vmatpush1.xpose.msra.mxu0 0.0
    %2927 = vmatprep.subr.mxu0 0.0
    %2928 = vmatpush1.xpose.msra.mxu0 0.0
    %2929 = vmatprep.subr.mxu0 0.0
    %2930 = vmatpush1.xpose.msra.mxu0 0.0
    %2931 = vmatprep.subr.mxu0 0.0
    %2932 = vmatpush1.xpose.msra.mxu0 0.0
    %2933 = vmatprep.subr.mxu0 0.0
    %2934 = vmatpush1.xpose.msra.mxu0 0.0
    %2935 = vmatprep.subr.mxu0 0.0
    %2936 = vmatpush1.xpose.msra.mxu0 0.0
    %2937 = vmatprep.subr.mxu0 0.0
    %2938 = vmatpush1.xpose.msra.mxu0 0.0
    %2939 = vmatprep.subr.mxu0 0.0
    %2940 = vmatpush1.xpose.msra.mxu0 0.0
    %2941 = vmatprep.subr.mxu0 0.0
    %2942 = vmatpush1.xpose.msra.mxu0 0.0
    %2943 = vmatprep.subr.mxu0 0.0
    %2944 = vmatpush1.xpose.msra.mxu0 0.0
    %2945 = vmatprep.mubr.f32.mxu0 0.0
    %2946 = vmatmul.mubr.f32.gmra.mrb[0].mxu0 %v2877
    %v2947 = vpop.f32.mrb[0].mxu0
    %v2948 = vadd.f32 0.0, %v2947
    %v2949 = vpop.f32.mrb[0].mxu0
    %2950 = vdwg.mxu0
    %v2951 = vsel %vm195, %v2948, -inf
    %2952 = vmax.xlane.f32.xlu0 %v2951
    %v2953 = vpop.xlane.xlu0 %2952
    %v2954 = vsub.f32 %v2948, %v2953
    %v2955 = vmul.f32 %v2954, 1.442695
    %v2956 = vpow.pop %v2955
    %v2957 = vsel %vm195, %v2956, 0.0
    %2958 = vadd.xlane.f32.xlu0 %v2957
    %v2959 = vpop.xlane.xlu0 %2958
    %v2960 = vrcp.pop %v2959
    %v2961 = vmul.f32 %v2956, %v2960
    %2962 = vrot.lane.b32.xlu0 %v2026, 56
    %v2963 = vpop.permute.xlu0 %2962
    %v2966 = vsel %vm195, %v2961, 0
    %2968 = vmatprep.subr.mxu0 0.0
    %2969 = vmatpush1.msra.mxu0 %v2963
    %2970 = vmatprep.subr.mxu0 0.0
    %2971 = vmatpush1.msra.mxu0 0.0
    %2972 = vmatprep.subr.mxu0 0.0
    %2973 = vmatpush1.msra.mxu0 0.0
    %2974 = vmatprep.subr.mxu0 0.0
    %2975 = vmatpush1.msra.mxu0 0.0
    %2976 = vmatprep.subr.mxu0 0.0
    %2977 = vmatpush1.msra.mxu0 0.0
    %2978 = vmatprep.subr.mxu0 0.0
    %2979 = vmatpush1.msra.mxu0 0.0
    %2980 = vmatprep.subr.mxu0 0.0
    %2981 = vmatpush1.msra.mxu0 0.0
    %2982 = vmatprep.subr.mxu0 0.0
    %2983 = vmatpush1.msra.mxu0 0.0
    %2984 = vmatprep.subr.mxu0 0.0
    %2985 = vmatpush1.msra.mxu0 0.0
    %2986 = vmatprep.subr.mxu0 0.0
    %2987 = vmatpush1.msra.mxu0 0.0
    %2988 = vmatprep.subr.mxu0 0.0
    %2989 = vmatpush1.msra.mxu0 0.0
    %2990 = vmatprep.subr.mxu0 0.0
    %2991 = vmatpush1.msra.mxu0 0.0
    %2992 = vmatprep.subr.mxu0 0.0
    %2993 = vmatpush1.msra.mxu0 0.0
    %2994 = vmatprep.subr.mxu0 0.0
    %2995 = vmatpush1.msra.mxu0 0.0
    %2996 = vmatprep.subr.mxu0 0.0
    %2997 = vmatpush1.msra.mxu0 0.0
    %2998 = vmatprep.subr.mxu0 0.0
    %2999 = vmatpush1.msra.mxu0 0.0
    %3000 = vmatprep.subr.mxu0 0.0
    %3001 = vmatpush1.msra.mxu0 0.0
    %3002 = vmatprep.subr.mxu0 0.0
    %3003 = vmatpush1.msra.mxu0 0.0
    %3004 = vmatprep.subr.mxu0 0.0
    %3005 = vmatpush1.msra.mxu0 0.0
    %3006 = vmatprep.subr.mxu0 0.0
    %3007 = vmatpush1.msra.mxu0 0.0
    %3008 = vmatprep.subr.mxu0 0.0
    %3009 = vmatpush1.msra.mxu0 0.0
    %3010 = vmatprep.subr.mxu0 0.0
    %3011 = vmatpush1.msra.mxu0 0.0
    %3012 = vmatprep.subr.mxu0 0.0
    %3013 = vmatpush1.msra.mxu0 0.0
    %3014 = vmatprep.subr.mxu0 0.0
    %3015 = vmatpush1.msra.mxu0 0.0
    %3016 = vmatprep.subr.mxu0 0.0
    %3017 = vmatpush1.msra.mxu0 0.0
    %3018 = vmatprep.subr.mxu0 0.0
    %3019 = vmatpush1.msra.mxu0 0.0
    %3020 = vmatprep.subr.mxu0 0.0
    %3021 = vmatpush1.msra.mxu0 0.0
    %3022 = vmatprep.subr.mxu0 0.0
    %3023 = vmatpush1.msra.mxu0 0.0
    %3024 = vmatprep.subr.mxu0 0.0
    %3025 = vmatpush1.msra.mxu0 0.0
    %3026 = vmatprep.subr.mxu0 0.0
    %3027 = vmatpush1.msra.mxu0 0.0
    %3028 = vmatprep.subr.mxu0 0.0
    %3029 = vmatpush1.msra.mxu0 0.0
    %3030 = vmatprep.subr.mxu0 0.0
    %3031 = vmatpush1.msra.mxu0 0.0
    %3032 = vmatprep.mubr.f32.mxu0 0.0
    %3033 = vmatmul.mubr.f32.gmra.mrb[0].mxu0 %v2966
    %v3034 = vpop.f32.mrb[0].mxu0
    %v3035 = vadd.f32 0.0, %v3034
    %v3036 = vpop.f32.mrb[0].mxu0
    %3037 = vdwg.mxu0
    %3039 = vrot.lane.b32.xlu0 %v3035, 8
    %v3040 = vpop.permute.xlu0 %3039
    %3042 = vst.msk [vmem:[#allocation2 + $0x8] sm:$0xff] %vm528, %v3040
    %3043 = vrot.lane.b32.xlu0 %v2030, 112
    %v3044 = vpop.permute.xlu0 %3043
    %3045 = vrot.lane.b32.xlu0 %v2026, 80
    %v3046 = vpop.permute.xlu0 %3045
    %v3047 = vsel %vm195, %v3044, 0
    %v3049 = vsel %vm195, %v3046, 0
    %3051 = vmatprep.subr.mxu0 0.0
    %3052 = vmatpush1.xpose.msra.mxu0 %v3049
    %3053 = vmatprep.subr.mxu0 0.0
    %3054 = vmatpush1.xpose.msra.mxu0 0.0
    %3055 = vmatprep.subr.mxu0 0.0
    %3056 = vmatpush1.xpose.msra.mxu0 0.0
    %3057 = vmatprep.subr.mxu0 0.0
    %3058 = vmatpush1.xpose.msra.mxu0 0.0
    %3059 = vmatprep.subr.mxu0 0.0
    %3060 = vmatpush1.xpose.msra.mxu0 0.0
    %3061 = vmatprep.subr.mxu0 0.0
    %3062 = vmatpush1.xpose.msra.mxu0 0.0
    %3063 = vmatprep.subr.mxu0 0.0
    %3064 = vmatpush1.xpose.msra.mxu0 0.0
    %3065 = vmatprep.subr.mxu0 0.0
    %3066 = vmatpush1.xpose.msra.mxu0 0.0
    %3067 = vmatprep.subr.mxu0 0.0
    %3068 = vmatpush1.xpose.msra.mxu0 0.0
    %3069 = vmatprep.subr.mxu0 0.0
    %3070 = vmatpush1.xpose.msra.mxu0 0.0
    %3071 = vmatprep.subr.mxu0 0.0
    %3072 = vmatpush1.xpose.msra.mxu0 0.0
    %3073 = vmatprep.subr.mxu0 0.0
    %3074 = vmatpush1.xpose.msra.mxu0 0.0
    %3075 = vmatprep.subr.mxu0 0.0
    %3076 = vmatpush1.xpose.msra.mxu0 0.0
    %3077 = vmatprep.subr.mxu0 0.0
    %3078 = vmatpush1.xpose.msra.mxu0 0.0
    %3079 = vmatprep.subr.mxu0 0.0
    %3080 = vmatpush1.xpose.msra.mxu0 0.0
    %3081 = vmatprep.subr.mxu0 0.0
    %3082 = vmatpush1.xpose.msra.mxu0 0.0
    %3083 = vmatprep.subr.mxu0 0.0
    %3084 = vmatpush1.xpose.msra.mxu0 0.0
    %3085 = vmatprep.subr.mxu0 0.0
    %3086 = vmatpush1.xpose.msra.mxu0 0.0
    %3087 = vmatprep.subr.mxu0 0.0
    %3088 = vmatpush1.xpose.msra.mxu0 0.0
    %3089 = vmatprep.subr.mxu0 0.0
    %3090 = vmatpush1.xpose.msra.mxu0 0.0
    %3091 = vmatprep.subr.mxu0 0.0
    %3092 = vmatpush1.xpose.msra.mxu0 0.0
    %3093 = vmatprep.subr.mxu0 0.0
    %3094 = vmatpush1.xpose.msra.mxu0 0.0
    %3095 = vmatprep.subr.mxu0 0.0
    %3096 = vmatpush1.xpose.msra.mxu0 0.0
    %3097 = vmatprep.subr.mxu0 0.0
    %3098 = vmatpush1.xpose.msra.mxu0 0.0
    %3099 = vmatprep.subr.mxu0 0.0
    %3100 = vmatpush1.xpose.msra.mxu0 0.0
    %3101 = vmatprep.subr.mxu0 0.0
    %3102 = vmatpush1.xpose.msra.mxu0 0.0
    %3103 = vmatprep.subr.mxu0 0.0
    %3104 = vmatpush1.xpose.msra.mxu0 0.0
    %3105 = vmatprep.subr.mxu0 0.0
    %3106 = vmatpush1.xpose.msra.mxu0 0.0
    %3107 = vmatprep.subr.mxu0 0.0
    %3108 = vmatpush1.xpose.msra.mxu0 0.0
    %3109 = vmatprep.subr.mxu0 0.0
    %3110 = vmatpush1.xpose.msra.mxu0 0.0
    %3111 = vmatprep.subr.mxu0 0.0
    %3112 = vmatpush1.xpose.msra.mxu0 0.0
    %3113 = vmatprep.subr.mxu0 0.0
    %3114 = vmatpush1.xpose.msra.mxu0 0.0
    %3115 = vmatprep.mubr.f32.mxu0 0.0
    %3116 = vmatmul.mubr.f32.gmra.mrb[0].mxu0 %v3047
    %v3117 = vpop.f32.mrb[0].mxu0
    %v3118 = vadd.f32 0.0, %v3117
    %v3119 = vpop.f32.mrb[0].mxu0
    %3120 = vdwg.mxu0
    %v3121 = vsel %vm195, %v3118, -inf
    %3122 = vmax.xlane.f32.xlu0 %v3121
    %v3123 = vpop.xlane.xlu0 %3122
    %v3124 = vsub.f32 %v3118, %v3123
    %v3125 = vmul.f32 %v3124, 1.442695
    %v3126 = vpow.pop %v3125
    %v3127 = vsel %vm195, %v3126, 0.0
    %3128 = vadd.xlane.f32.xlu0 %v3127
    %v3129 = vpop.xlane.xlu0 %3128
    %v3130 = vrcp.pop %v3129
    %v3131 = vmul.f32 %v3126, %v3130
    %3132 = vrot.lane.b32.xlu0 %v2026, 48
    %v3133 = vpop.permute.xlu0 %3132
    %v3136 = vsel %vm195, %v3131, 0
    %3138 = vmatprep.subr.mxu0 0.0
    %3139 = vmatpush1.msra.mxu0 %v3133
    %3140 = vmatprep.subr.mxu0 0.0
    %3141 = vmatpush1.msra.mxu0 0.0
    %3142 = vmatprep.subr.mxu0 0.0
    %3143 = vmatpush1.msra.mxu0 0.0
    %3144 = vmatprep.subr.mxu0 0.0
    %3145 = vmatpush1.msra.mxu0 0.0
    %3146 = vmatprep.subr.mxu0 0.0
    %3147 = vmatpush1.msra.mxu0 0.0
    %3148 = vmatprep.subr.mxu0 0.0
    %3149 = vmatpush1.msra.mxu0 0.0
    %3150 = vmatprep.subr.mxu0 0.0
    %3151 = vmatpush1.msra.mxu0 0.0
    %3152 = vmatprep.subr.mxu0 0.0
    %3153 = vmatpush1.msra.mxu0 0.0
    %3154 = vmatprep.subr.mxu0 0.0
    %3155 = vmatpush1.msra.mxu0 0.0
    %3156 = vmatprep.subr.mxu0 0.0
    %3157 = vmatpush1.msra.mxu0 0.0
    %3158 = vmatprep.subr.mxu0 0.0
    %3159 = vmatpush1.msra.mxu0 0.0
    %3160 = vmatprep.subr.mxu0 0.0
    %3161 = vmatpush1.msra.mxu0 0.0
    %3162 = vmatprep.subr.mxu0 0.0
    %3163 = vmatpush1.msra.mxu0 0.0
    %3164 = vmatprep.subr.mxu0 0.0
    %3165 = vmatpush1.msra.mxu0 0.0
    %3166 = vmatprep.subr.mxu0 0.0
    %3167 = vmatpush1.msra.mxu0 0.0
    %3168 = vmatprep.subr.mxu0 0.0
    %3169 = vmatpush1.msra.mxu0 0.0
    %3170 = vmatprep.subr.mxu0 0.0
    %3171 = vmatpush1.msra.mxu0 0.0
    %3172 = vmatprep.subr.mxu0 0.0
    %3173 = vmatpush1.msra.mxu0 0.0
    %3174 = vmatprep.subr.mxu0 0.0
    %3175 = vmatpush1.msra.mxu0 0.0
    %3176 = vmatprep.subr.mxu0 0.0
    %3177 = vmatpush1.msra.mxu0 0.0
    %3178 = vmatprep.subr.mxu0 0.0
    %3179 = vmatpush1.msra.mxu0 0.0
    %3180 = vmatprep.subr.mxu0 0.0
    %3181 = vmatpush1.msra.mxu0 0.0
    %3182 = vmatprep.subr.mxu0 0.0
    %3183 = vmatpush1.msra.mxu0 0.0
    %3184 = vmatprep.subr.mxu0 0.0
    %3185 = vmatpush1.msra.mxu0 0.0
    %3186 = vmatprep.subr.mxu0 0.0
    %3187 = vmatpush1.msra.mxu0 0.0
    %3188 = vmatprep.subr.mxu0 0.0
    %3189 = vmatpush1.msra.mxu0 0.0
    %3190 = vmatprep.subr.mxu0 0.0
    %3191 = vmatpush1.msra.mxu0 0.0
    %3192 = vmatprep.subr.mxu0 0.0
    %3193 = vmatpush1.msra.mxu0 0.0
    %3194 = vmatprep.subr.mxu0 0.0
    %3195 = vmatpush1.msra.mxu0 0.0
    %3196 = vmatprep.subr.mxu0 0.0
    %3197 = vmatpush1.msra.mxu0 0.0
    %3198 = vmatprep.subr.mxu0 0.0
    %3199 = vmatpush1.msra.mxu0 0.0
    %3200 = vmatprep.subr.mxu0 0.0
    %3201 = vmatpush1.msra.mxu0 0.0
    %3202 = vmatprep.mubr.f32.mxu0 0.0
    %3203 = vmatmul.mubr.f32.gmra.mrb[0].mxu0 %v3136
    %v3204 = vpop.f32.mrb[0].mxu0
    %v3205 = vadd.f32 0.0, %v3204
    %v3206 = vpop.f32.mrb[0].mxu0
    %3207 = vdwg.mxu0
    %3209 = vrot.lane.b32.xlu0 %v3205, 16
    %v3210 = vpop.permute.xlu0 %3209
    %3212 = vst.msk [vmem:[#allocation2 + $0x8] sm:$0xff] %vm699, %v3210
    %3213 = vrot.lane.b32.xlu0 %v2030, 104
    %v3214 = vpop.permute.xlu0 %3213
    %3215 = vrot.lane.b32.xlu0 %v2026, 72
    %v3216 = vpop.permute.xlu0 %3215
    %v3217 = vsel %vm195, %v3214, 0
    %v3219 = vsel %vm195, %v3216, 0
    %3221 = vmatprep.subr.mxu0 0.0
    %3222 = vmatpush1.xpose.msra.mxu0 %v3219
    %3223 = vmatprep.subr.mxu0 0.0
    %3224 = vmatpush1.xpose.msra.mxu0 0.0
    %3225 = vmatprep.subr.mxu0 0.0
    %3226 = vmatpush1.xpose.msra.mxu0 0.0
    %3227 = vmatprep.subr.mxu0 0.0
    %3228 = vmatpush1.xpose.msra.mxu0 0.0
    %3229 = vmatprep.subr.mxu0 0.0
    %3230 = vmatpush1.xpose.msra.mxu0 0.0
    %3231 = vmatprep.subr.mxu0 0.0
    %3232 = vmatpush1.xpose.msra.mxu0 0.0
    %3233 = vmatprep.subr.mxu0 0.0
    %3234 = vmatpush1.xpose.msra.mxu0 0.0
    %3235 = vmatprep.subr.mxu0 0.0
    %3236 = vmatpush1.xpose.msra.mxu0 0.0
    %3237 = vmatprep.subr.mxu0 0.0
    %3238 = vmatpush1.xpose.msra.mxu0 0.0
    %3239 = vmatprep.subr.mxu0 0.0
    %3240 = vmatpush1.xpose.msra.mxu0 0.0
    %3241 = vmatprep.subr.mxu0 0.0
    %3242 = vmatpush1.xpose.msra.mxu0 0.0
    %3243 = vmatprep.subr.mxu0 0.0
    %3244 = vmatpush1.xpose.msra.mxu0 0.0
    %3245 = vmatprep.subr.mxu0 0.0
    %3246 = vmatpush1.xpose.msra.mxu0 0.0
    %3247 = vmatprep.subr.mxu0 0.0
    %3248 = vmatpush1.xpose.msra.mxu0 0.0
    %3249 = vmatprep.subr.mxu0 0.0
    %3250 = vmatpush1.xpose.msra.mxu0 0.0
    %3251 = vmatprep.subr.mxu0 0.0
    %3252 = vmatpush1.xpose.msra.mxu0 0.0
    %3253 = vmatprep.subr.mxu0 0.0
    %3254 = vmatpush1.xpose.msra.mxu0 0.0
    %3255 = vmatprep.subr.mxu0 0.0
    %3256 = vmatpush1.xpose.msra.mxu0 0.0
    %3257 = vmatprep.subr.mxu0 0.0
    %3258 = vmatpush1.xpose.msra.mxu0 0.0
    %3259 = vmatprep.subr.mxu0 0.0
    %3260 = vmatpush1.xpose.msra.mxu0 0.0
    %3261 = vmatprep.subr.mxu0 0.0
    %3262 = vmatpush1.xpose.msra.mxu0 0.0
    %3263 = vmatprep.subr.mxu0 0.0
    %3264 = vmatpush1.xpose.msra.mxu0 0.0
    %3265 = vmatprep.subr.mxu0 0.0
    %3266 = vmatpush1.xpose.msra.mxu0 0.0
    %3267 = vmatprep.subr.mxu0 0.0
    %3268 = vmatpush1.xpose.msra.mxu0 0.0
    %3269 = vmatprep.subr.mxu0 0.0
    %3270 = vmatpush1.xpose.msra.mxu0 0.0
    %3271 = vmatprep.subr.mxu0 0.0
    %3272 = vmatpush1.xpose.msra.mxu0 0.0
    %3273 = vmatprep.subr.mxu0 0.0
    %3274 = vmatpush1.xpose.msra.mxu0 0.0
    %3275 = vmatprep.subr.mxu0 0.0
    %3276 = vmatpush1.xpose.msra.mxu0 0.0
    %3277 = vmatprep.subr.mxu0 0.0
    %3278 = vmatpush1.xpose.msra.mxu0 0.0
    %3279 = vmatprep.subr.mxu0 0.0
    %3280 = vmatpush1.xpose.msra.mxu0 0.0
    %3281 = vmatprep.subr.mxu0 0.0
    %3282 = vmatpush1.xpose.msra.mxu0 0.0
    %3283 = vmatprep.subr.mxu0 0.0
    %3284 = vmatpush1.xpose.msra.mxu0 0.0
    %3285 = vmatprep.mubr.f32.mxu0 0.0
    %3286 = vmatmul.mubr.f32.gmra.mrb[0].mxu0 %v3217
    %v3287 = vpop.f32.mrb[0].mxu0
    %v3288 = vadd.f32 0.0, %v3287
    %v3289 = vpop.f32.mrb[0].mxu0
    %3290 = vdwg.mxu0
    %v3291 = vsel %vm195, %v3288, -inf
    %3292 = vmax.xlane.f32.xlu0 %v3291
    %v3293 = vpop.xlane.xlu0 %3292
    %v3294 = vsub.f32 %v3288, %v3293
    %v3295 = vmul.f32 %v3294, 1.442695
    %v3296 = vpow.pop %v3295
    %v3297 = vsel %vm195, %v3296, 0.0
    %3298 = vadd.xlane.f32.xlu0 %v3297
    %v3299 = vpop.xlane.xlu0 %3298
    %v3300 = vrcp.pop %v3299
    %v3301 = vmul.f32 %v3296, %v3300
    %3302 = vrot.lane.b32.xlu0 %v2026, 40
    %v3303 = vpop.permute.xlu0 %3302
    %v3306 = vsel %vm195, %v3301, 0
    %3308 = vmatprep.subr.mxu0 0.0
    %3309 = vmatpush1.msra.mxu0 %v3303
    %3310 = vmatprep.subr.mxu0 0.0
    %3311 = vmatpush1.msra.mxu0 0.0
    %3312 = vmatprep.subr.mxu0 0.0
    %3313 = vmatpush1.msra.mxu0 0.0
    %3314 = vmatprep.subr.mxu0 0.0
    %3315 = vmatpush1.msra.mxu0 0.0
    %3316 = vmatprep.subr.mxu0 0.0
    %3317 = vmatpush1.msra.mxu0 0.0
    %3318 = vmatprep.subr.mxu0 0.0
    %3319 = vmatpush1.msra.mxu0 0.0
    %3320 = vmatprep.subr.mxu0 0.0
    %3321 = vmatpush1.msra.mxu0 0.0
    %3322 = vmatprep.subr.mxu0 0.0
    %3323 = vmatpush1.msra.mxu0 0.0
    %3324 = vmatprep.subr.mxu0 0.0
    %3325 = vmatpush1.msra.mxu0 0.0
    %3326 = vmatprep.subr.mxu0 0.0
    %3327 = vmatpush1.msra.mxu0 0.0
    %3328 = vmatprep.subr.mxu0 0.0
    %3329 = vmatpush1.msra.mxu0 0.0
    %3330 = vmatprep.subr.mxu0 0.0
    %3331 = vmatpush1.msra.mxu0 0.0
    %3332 = vmatprep.subr.mxu0 0.0
    %3333 = vmatpush1.msra.mxu0 0.0
    %3334 = vmatprep.subr.mxu0 0.0
    %3335 = vmatpush1.msra.mxu0 0.0
    %3336 = vmatprep.subr.mxu0 0.0
    %3337 = vmatpush1.msra.mxu0 0.0
    %3338 = vmatprep.subr.mxu0 0.0
    %3339 = vmatpush1.msra.mxu0 0.0
    %3340 = vmatprep.subr.mxu0 0.0
    %3341 = vmatpush1.msra.mxu0 0.0
    %3342 = vmatprep.subr.mxu0 0.0
    %3343 = vmatpush1.msra.mxu0 0.0
    %3344 = vmatprep.subr.mxu0 0.0
    %3345 = vmatpush1.msra.mxu0 0.0
    %3346 = vmatprep.subr.mxu0 0.0
    %3347 = vmatpush1.msra.mxu0 0.0
    %3348 = vmatprep.subr.mxu0 0.0
    %3349 = vmatpush1.msra.mxu0 0.0
    %3350 = vmatprep.subr.mxu0 0.0
    %3351 = vmatpush1.msra.mxu0 0.0
    %3352 = vmatprep.subr.mxu0 0.0
    %3353 = vmatpush1.msra.mxu0 0.0
    %3354 = vmatprep.subr.mxu0 0.0
    %3355 = vmatpush1.msra.mxu0 0.0
    %3356 = vmatprep.subr.mxu0 0.0
    %3357 = vmatpush1.msra.mxu0 0.0
    %3358 = vmatprep.subr.mxu0 0.0
    %3359 = vmatpush1.msra.mxu0 0.0
    %3360 = vmatprep.subr.mxu0 0.0
    %3361 = vmatpush1.msra.mxu0 0.0
    %3362 = vmatprep.subr.mxu0 0.0
    %3363 = vmatpush1.msra.mxu0 0.0
    %3364 = vmatprep.subr.mxu0 0.0
    %3365 = vmatpush1.msra.mxu0 0.0
    %3366 = vmatprep.subr.mxu0 0.0
    %3367 = vmatpush1.msra.mxu0 0.0
    %3368 = vmatprep.subr.mxu0 0.0
    %3369 = vmatpush1.msra.mxu0 0.0
    %3370 = vmatprep.subr.mxu0 0.0
    %3371 = vmatpush1.msra.mxu0 0.0
    %3372 = vmatprep.mubr.f32.mxu0 0.0
    %3373 = vmatmul.mubr.f32.gmra.mrb[0].mxu0 %v3306
    %v3374 = vpop.f32.mrb[0].mxu0
    %v3375 = vadd.f32 0.0, %v3374
    %v3376 = vpop.f32.mrb[0].mxu0
    %3377 = vdwg.mxu0
    %3379 = vrot.lane.b32.xlu0 %v3375, 24
    %v3380 = vpop.permute.xlu0 %3379
    %3382 = vst.msk [vmem:[#allocation2 + $0x8] sm:$0xff] %vm870, %v3380
    %v3383 = vld [vmem:[#allocation2] sm:$0xff]
    %v3384 = vld [vmem:[#allocation2 + $0x8] sm:$0xff]
    %s3385 = scalar_lea.vmem %s3, 32
    %v3386 = vld [vmem:[%s3385] sm:$0xff]
    %v3387 = vld [vmem:[%s3385 + $0x8] sm:$0xff]
    %v3388 = vld [vmem:[%s3385 + $0x10] sm:$0xff]
    %v3389 = vld [vmem:[%s3385 + $0x18] sm:$0xff]
    %s3390 = scalar_lea.vmem %s4, 1
    %v3391 = vld [vmem:[%s3390] sm:$0x1]
    %v3393 = vlaneseq
    %v3394 = vshrl.u32 %v3393, 7
    %v3395 = vsub.s32 0, %v3394
    %v3396 = vrot.slane %v3391, %v3395
    %v3399 = vsel %vm49, %v3383, 0
    %v3402 = vsel %vm49, %v3384, 0
    %3404 = vmatprep.subr.mxu0 0.0
    %3405 = vmatpush1.msra.mxu0 %v3386
    %3406 = vmatprep.subr.mxu0 0.0
    %3407 = vmatpush1.msra.mxu0 %v3387
    %3408 = vmatprep.subr.mxu0 0.0
    %3409 = vmatpush1.msra.mxu0 %v3388
    %3410 = vmatprep.subr.mxu0 0.0
    %3411 = vmatpush1.msra.mxu0 %v3389
    %3412 = vmatprep.subr.mxu0 0.0
    %3413 = vmatpush1.msra.mxu0 0.0
    %3414 = vmatprep.subr.mxu0 0.0
    %3415 = vmatpush1.msra.mxu0 0.0
    %3416 = vmatprep.subr.mxu0 0.0
    %3417 = vmatpush1.msra.mxu0 0.0
    %3418 = vmatprep.subr.mxu0 0.0
    %3419 = vmatpush1.msra.mxu0 0.0
    %3420 = vmatprep.subr.mxu0 0.0
    %3421 = vmatpush1.msra.mxu0 0.0
    %3422 = vmatprep.subr.mxu0 0.0
    %3423 = vmatpush1.msra.mxu0 0.0
    %3424 = vmatprep.subr.mxu0 0.0
    %3425 = vmatpush1.msra.mxu0 0.0
    %3426 = vmatprep.subr.mxu0 0.0
    %3427 = vmatpush1.msra.mxu0 0.0
    %3428 = vmatprep.subr.mxu0 0.0
    %3429 = vmatpush1.msra.mxu0 0.0
    %3430 = vmatprep.subr.mxu0 0.0
    %3431 = vmatpush1.msra.mxu0 0.0
    %3432 = vmatprep.subr.mxu0 0.0
    %3433 = vmatpush1.msra.mxu0 0.0
    %3434 = vmatprep.subr.mxu0 0.0
    %3435 = vmatpush1.msra.mxu0 0.0
    %3436 = vmatprep.subr.mxu0 0.0
    %3437 = vmatpush1.msra.mxu0 0.0
    %3438 = vmatprep.subr.mxu0 0.0
    %3439 = vmatpush1.msra.mxu0 0.0
    %3440 = vmatprep.subr.mxu0 0.0
    %3441 = vmatpush1.msra.mxu0 0.0
    %3442 = vmatprep.subr.mxu0 0.0
    %3443 = vmatpush1.msra.mxu0 0.0
    %3444 = vmatprep.subr.mxu0 0.0
    %3445 = vmatpush1.msra.mxu0 0.0
    %3446 = vmatprep.subr.mxu0 0.0
    %3447 = vmatpush1.msra.mxu0 0.0
    %3448 = vmatprep.subr.mxu0 0.0
    %3449 = vmatpush1.msra.mxu0 0.0
    %3450 = vmatprep.subr.mxu0 0.0
    %3451 = vmatpush1.msra.mxu0 0.0
    %3452 = vmatprep.subr.mxu0 0.0
    %3453 = vmatpush1.msra.mxu0 0.0
    %3454 = vmatprep.subr.mxu0 0.0
    %3455 = vmatpush1.msra.mxu0 0.0
    %3456 = vmatprep.subr.mxu0 0.0
    %3457 = vmatpush1.msra.mxu0 0.0
    %3458 = vmatprep.subr.mxu0 0.0
    %3459 = vmatpush1.msra.mxu0 0.0
    %3460 = vmatprep.subr.mxu0 0.0
    %3461 = vmatpush1.msra.mxu0 0.0
    %3462 = vmatprep.subr.mxu0 0.0
    %3463 = vmatpush1.msra.mxu0 0.0
    %3464 = vmatprep.subr.mxu0 0.0
    %3465 = vmatpush1.msra.mxu0 0.0
    %3466 = vmatprep.subr.mxu0 0.0
    %3467 = vmatpush1.msra.mxu0 0.0
    %3468 = vmatprep.mubr.f32.mxu0 0.0
    %3469 = vmatmul.mubr.f32.gmra.mrb[0].mxu0 %v3399
    %v3470 = vpop.f32.mrb[0].mxu0
    %v3471 = vadd.f32 %v3396, %v3470
    %v3472 = vpop.f32.mrb[0].mxu0
    %3473 = vmatprep.mubr.f32.mxu0 0.0
    %3474 = vmatmul.mubr.f32.gmra.mrb[0].mxu0 %v3402
    %v3475 = vpop.f32.mrb[0].mxu0
    %v3476 = vadd.f32 %v3396, %v3475
    %v3477 = vpop.f32.mrb[0].mxu0
    %3478 = vdwg.mxu0
    %v3479 = vadd.f32 %v1885, %v3471
    %v3480 = vadd.f32 %v1886, %v3476
    %v3481 = vsel %vm49, %v3479, 0.0
    %3482 = vadd.xlane.f32.xlu0 %v3481
    %v3483 = vpop.xlane.xlu0 %3482
    %v3484 = vsel %vm49, %v3480, 0.0
    %3485 = vadd.xlane.f32.xlu0 %v3484
    %v3486 = vpop.xlane.xlu0 %3485
    %v3487 = vmul.f32 %v3479, %v3479
    %v3488 = vmul.f32 %v3480, %v3480
    %v3489 = vsel %vm49, %v3487, 0.0
    %3490 = vadd.xlane.f32.xlu0 %v3489
    %v3491 = vpop.xlane.xlu0 %3490
    %v3492 = vsel %vm49, %v3488, 0.0
    %3493 = vadd.xlane.f32.xlu0 %v3492
    %v3494 = vpop.xlane.xlu0 %3493
    %v3495 = vmul.f32 %v3483, 0.03125
    %v3496 = vmul.f32 %v3486, 0.03125
    %v3497 = vmul.f32 %v3495, 32.0
    %v3498 = vmul.f32 %v3496, 32.0
    %v3499 = vmul.f32 %v3497, %v3495
    %v3500 = vmul.f32 %v3498, %v3496
    %v3501 = vsub.f32 %v3491, %v3499
    %v3502 = vsub.f32 %v3494, %v3500
    %v3503 = vmul.f32 %v3501, 0.032258064
    %v3504 = vmul.f32 %v3502, 0.032258064
    %v3505 = vmax.f32 %v3503, 0.0
    %v3506 = vmax.f32 %v3504, 0.0
    %v3507 = vrsqrt.pop %v3505
    %v3508 = vmul.f32 %v3505, %v3507
    %vm3509 = vcmp.eq.f32.partialorder %v3505, inf
    %v3510 = vsel %vm3509, %v3505, %v3508
    %vm3511 = vcmp.eq.f32.partialorder %v3505, 0.0
    %v3512 = vand.u32 %v3505, 2147483648
    %v3513 = vsel %vm3511, %v3512, %v3510
    %v3514 = vrsqrt.pop %v3506
    %v3515 = vmul.f32 %v3506, %v3514
    %vm3516 = vcmp.eq.f32.partialorder %v3506, inf
    %v3517 = vsel %vm3516, %v3506, %v3515
    %vm3518 = vcmp.eq.f32.partialorder %v3506, 0.0
    %v3519 = vand.u32 %v3506, 2147483648
    %v3520 = vsel %vm3518, %v3519, %v3517
    %v3521 = vadd.f32 %v3513, 1e-06
    %v3522 = vadd.f32 %v3520, 1e-06
    %v3523 = vrcp.pop %v3521
    %v3524 = vrcp.pop %v3522
    %v3525 = vsub.f32 %v3479, %v3495
    %v3526 = vsub.f32 %v3480, %v3496
    %v3527 = vmul.f32 %v3525, %v3523
    %v3528 = vmul.f32 %v3526, %v3524
    %s3529 = scalar_lea.vmem %s5, 32
    %v3530 = vld [vmem:[%s3529] sm:$0xff]
    %v3531 = vld [vmem:[%s3529 + $0x8] sm:$0xff]
    %v3532 = vld [vmem:[%s3529 + $0x10] sm:$0xff]
    %v3533 = vld [vmem:[%s3529 + $0x18] sm:$0xff]
    %s3534 = scalar_lea.vmem %s6, 1
    %v3535 = vld [vmem:[%s3534] sm:$0x1]
    %v3537 = vlaneseq
    %v3538 = vshrl.u32 %v3537, 7
    %v3539 = vsub.s32 0, %v3538
    %v3540 = vrot.slane %v3535, %v3539
    %v3543 = vsel %vm49, %v3527, 0
    %v3546 = vsel %vm49, %v3528, 0
    %3548 = vmatprep.subr.mxu0 0.0
    %3549 = vmatpush1.msra.mxu0 %v3530
    %3550 = vmatprep.subr.mxu0 0.0
    %3551 = vmatpush1.msra.mxu0 %v3531
    %3552 = vmatprep.subr.mxu0 0.0
    %3553 = vmatpush1.msra.mxu0 %v3532
    %3554 = vmatprep.subr.mxu0 0.0
    %3555 = vmatpush1.msra.mxu0 %v3533
    %3556 = vmatprep.subr.mxu0 0.0
    %3557 = vmatpush1.msra.mxu0 0.0
    %3558 = vmatprep.subr.mxu0 0.0
    %3559 = vmatpush1.msra.mxu0 0.0
    %3560 = vmatprep.subr.mxu0 0.0
    %3561 = vmatpush1.msra.mxu0 0.0
    %3562 = vmatprep.subr.mxu0 0.0
    %3563 = vmatpush1.msra.mxu0 0.0
    %3564 = vmatprep.subr.mxu0 0.0
    %3565 = vmatpush1.msra.mxu0 0.0
    %3566 = vmatprep.subr.mxu0 0.0
    %3567 = vmatpush1.msra.mxu0 0.0
    %3568 = vmatprep.subr.mxu0 0.0
    %3569 = vmatpush1.msra.mxu0 0.0
    %3570 = vmatprep.subr.mxu0 0.0
    %3571 = vmatpush1.msra.mxu0 0.0
    %3572 = vmatprep.subr.mxu0 0.0
    %3573 = vmatpush1.msra.mxu0 0.0
    %3574 = vmatprep.subr.mxu0 0.0
    %3575 = vmatpush1.msra.mxu0 0.0
    %3576 = vmatprep.subr.mxu0 0.0
    %3577 = vmatpush1.msra.mxu0 0.0
    %3578 = vmatprep.subr.mxu0 0.0
    %3579 = vmatpush1.msra.mxu0 0.0
    %3580 = vmatprep.subr.mxu0 0.0
    %3581 = vmatpush1.msra.mxu0 0.0
    %3582 = vmatprep.subr.mxu0 0.0
    %3583 = vmatpush1.msra.mxu0 0.0
    %3584 = vmatprep.subr.mxu0 0.0
    %3585 = vmatpush1.msra.mxu0 0.0
    %3586 = vmatprep.subr.mxu0 0.0
    %3587 = vmatpush1.msra.mxu0 0.0
    %3588 = vmatprep.subr.mxu0 0.0
    %3589 = vmatpush1.msra.mxu0 0.0
    %3590 = vmatprep.subr.mxu0 0.0
    %3591 = vmatpush1.msra.mxu0 0.0
    %3592 = vmatprep.subr.mxu0 0.0
    %3593 = vmatpush1.msra.mxu0 0.0
    %3594 = vmatprep.subr.mxu0 0.0
    %3595 = vmatpush1.msra.mxu0 0.0
    %3596 = vmatprep.subr.mxu0 0.0
    %3597 = vmatpush1.msra.mxu0 0.0
    %3598 = vmatprep.subr.mxu0 0.0
    %3599 = vmatpush1.msra.mxu0 0.0
    %3600 = vmatprep.subr.mxu0 0.0
    %3601 = vmatpush1.msra.mxu0 0.0
    %3602 = vmatprep.subr.mxu0 0.0
    %3603 = vmatpush1.msra.mxu0 0.0
    %3604 = vmatprep.subr.mxu0 0.0
    %3605 = vmatpush1.msra.mxu0 0.0
    %3606 = vmatprep.subr.mxu0 0.0
    %3607 = vmatpush1.msra.mxu0 0.0
    %3608 = vmatprep.subr.mxu0 0.0
    %3609 = vmatpush1.msra.mxu0 0.0
    %3610 = vmatprep.subr.mxu0 0.0
    %3611 = vmatpush1.msra.mxu0 0.0
    %3612 = vmatprep.mubr.f32.mxu0 0.0
    %3613 = vmatmul.mubr.f32.gmra.mrb[0].mxu0 %v3543
    %v3614 = vpop.f32.mrb[0].mxu0
    %v3615 = vadd.f32 %v3540, %v3614
    %v3616 = vpop.f32.mrb[0].mxu0
    %3617 = vmatprep.mubr.f32.mxu0 0.0
    %3618 = vmatmul.mubr.f32.gmra.mrb[0].mxu0 %v3546
    %v3619 = vpop.f32.mrb[0].mxu0
    %v3620 = vadd.f32 %v3540, %v3619
    %v3621 = vpop.f32.mrb[0].mxu0
    %3622 = vdwg.mxu0
    %v3623 = vmax.f32 %v3615, 0.0
    %v3624 = vmax.f32 %v3620, 0.0
    %s3625 = scalar_lea.vmem %s7, 64
    %v3626 = vld [vmem:[%s3625] sm:$0xff]
    %v3627 = vld [vmem:[%s3625 + $0x8] sm:$0xff]
    %v3628 = vld [vmem:[%s3625 + $0x10] sm:$0xff]
    %v3629 = vld [vmem:[%s3625 + $0x18] sm:$0xff]
    %v3630 = vld [vmem:[%s3625 + $0x20] sm:$0xff]
    %v3631 = vld [vmem:[%s3625 + $0x28] sm:$0xff]
    %v3632 = vld [vmem:[%s3625 + $0x30] sm:$0xff]
    %v3633 = vld [vmem:[%s3625 + $0x38] sm:$0xff]
    %v3635 = vsel %vm1794, %v3623, 0
    %v3638 = vsel %vm1794, %v3624, 0
    %3640 = vmatprep.subr.mxu0 0.0
    %3641 = vmatpush1.msra.mxu0 %v3626
    %3642 = vmatprep.subr.mxu0 0.0
    %3643 = vmatpush1.msra.mxu0 %v3627
    %3644 = vmatprep.subr.mxu0 0.0
    %3645 = vmatpush1.msra.mxu0 %v3628
    %3646 = vmatprep.subr.mxu0 0.0
    %3647 = vmatpush1.msra.mxu0 %v3629
    %3648 = vmatprep.subr.mxu0 0.0
    %3649 = vmatpush1.msra.mxu0 %v3630
    %3650 = vmatprep.subr.mxu0 0.0
    %3651 = vmatpush1.msra.mxu0 %v3631
    %3652 = vmatprep.subr.mxu0 0.0
    %3653 = vmatpush1.msra.mxu0 %v3632
    %3654 = vmatprep.subr.mxu0 0.0
    %3655 = vmatpush1.msra.mxu0 %v3633
    %3656 = vmatprep.subr.mxu0 0.0
    %3657 = vmatpush1.msra.mxu0 0.0
    %3658 = vmatprep.subr.mxu0 0.0
    %3659 = vmatpush1.msra.mxu0 0.0
    %3660 = vmatprep.subr.mxu0 0.0
    %3661 = vmatpush1.msra.mxu0 0.0
    %3662 = vmatprep.subr.mxu0 0.0
    %3663 = vmatpush1.msra.mxu0 0.0
    %3664 = vmatprep.subr.mxu0 0.0
    %3665 = vmatpush1.msra.mxu0 0.0
    %3666 = vmatprep.subr.mxu0 0.0
    %3667 = vmatpush1.msra.mxu0 0.0
    %3668 = vmatprep.subr.mxu0 0.0
    %3669 = vmatpush1.msra.mxu0 0.0
    %3670 = vmatprep.subr.mxu0 0.0
    %3671 = vmatpush1.msra.mxu0 0.0
    %3672 = vmatprep.subr.mxu0 0.0
    %3673 = vmatpush1.msra.mxu0 0.0
    %3674 = vmatprep.subr.mxu0 0.0
    %3675 = vmatpush1.msra.mxu0 0.0
    %3676 = vmatprep.subr.mxu0 0.0
    %3677 = vmatpush1.msra.mxu0 0.0
    %3678 = vmatprep.subr.mxu0 0.0
    %3679 = vmatpush1.msra.mxu0 0.0
    %3680 = vmatprep.subr.mxu0 0.0
    %3681 = vmatpush1.msra.mxu0 0.0
    %3682 = vmatprep.subr.mxu0 0.0
    %3683 = vmatpush1.msra.mxu0 0.0
    %3684 = vmatprep.subr.mxu0 0.0
    %3685 = vmatpush1.msra.mxu0 0.0
    %3686 = vmatprep.subr.mxu0 0.0
    %3687 = vmatpush1.msra.mxu0 0.0
    %3688 = vmatprep.subr.mxu0 0.0
    %3689 = vmatpush1.msra.mxu0 0.0
    %3690 = vmatprep.subr.mxu0 0.0
    %3691 = vmatpush1.msra.mxu0 0.0
    %3692 = vmatprep.subr.mxu0 0.0
    %3693 = vmatpush1.msra.mxu0 0.0
    %3694 = vmatprep.subr.mxu0 0.0
    %3695 = vmatpush1.msra.mxu0 0.0
    %3696 = vmatprep.subr.mxu0 0.0
    %3697 = vmatpush1.msra.mxu0 0.0
    %3698 = vmatprep.subr.mxu0 0.0
    %3699 = vmatpush1.msra.mxu0 0.0
    %3700 = vmatprep.subr.mxu0 0.0
    %3701 = vmatpush1.msra.mxu0 0.0
    %3702 = vmatprep.subr.mxu0 0.0
    %3703 = vmatpush1.msra.mxu0 0.0
    %3704 = vmatprep.mubr.f32.mxu0 0.0
    %3705 = vmatmul.mubr.f32.gmra.mrb[0].mxu0 %v3635
    %v3706 = vpop.f32.mrb[0].mxu0
    %v3707 = vadd.f32 0.0, %v3706
    %v3708 = vpop.f32.mrb[0].mxu0
    %3709 = vmatprep.mubr.f32.mxu0 0.0
    %3710 = vmatmul.mubr.f32.gmra.mrb[0].mxu0 %v3638
    %v3711 = vpop.f32.mrb[0].mxu0
    %v3712 = vadd.f32 0.0, %v3711
    %v3713 = vpop.f32.mrb[0].mxu0
    %3714 = vdwg.mxu0
    %v3715 = vadd.f32 %v3479, %v3707
    %v3716 = vadd.f32 %v3480, %v3712
    %s3717 = scalar_lea.vmem %s8, 1
    %v3718 = vld [vmem:[%s3717] sm:$0x1]
    %v3720 = vlaneseq
    %v3721 = vshrl.u32 %v3720, 7
    %v3722 = vsub.s32 0, %v3721
    %v3723 = vrot.slane %v3718, %v3722
    %v3725 = vadd.f32 %v3715, %v3723
    %v3726 = vadd.f32 %v3716, %v3723
    %v3727 = vsel %vm49, %v3725, 0.0
    %3728 = vadd.xlane.f32.xlu0 %v3727
    %v3729 = vpop.xlane.xlu0 %3728
    %v3730 = vsel %vm49, %v3726, 0.0
    %3731 = vadd.xlane.f32.xlu0 %v3730
    %v3732 = vpop.xlane.xlu0 %3731
    %v3733 = vmul.f32 %v3725, %v3725
    %v3734 = vmul.f32 %v3726, %v3726
    %v3735 = vsel %vm49, %v3733, 0.0
    %3736 = vadd.xlane.f32.xlu0 %v3735
    %v3737 = vpop.xlane.xlu0 %3736
    %v3738 = vsel %vm49, %v3734, 0.0
    %3739 = vadd.xlane.f32.xlu0 %v3738
    %v3740 = vpop.xlane.xlu0 %3739
    %v3741 = vmul.f32 %v3729, 0.03125
    %v3742 = vmul.f32 %v3732, 0.03125
    %v3743 = vmul.f32 %v3741, 32.0
    %v3744 = vmul.f32 %v3742, 32.0
    %v3745 = vmul.f32 %v3743, %v3741
    %v3746 = vmul.f32 %v3744, %v3742
    %v3747 = vsub.f32 %v3737, %v3745
    %v3748 = vsub.f32 %v3740, %v3746
    %v3749 = vmul.f32 %v3747, 0.032258064
    %v3750 = vmul.f32 %v3748, 0.032258064
    %v3751 = vmax.f32 %v3749, 0.0
    %v3752 = vmax.f32 %v3750, 0.0
    %v3753 = vrsqrt.pop %v3751
    %v3754 = vmul.f32 %v3751, %v3753
    %vm3755 = vcmp.eq.f32.partialorder %v3751, inf
    %v3756 = vsel %vm3755, %v3751, %v3754
    %vm3757 = vcmp.eq.f32.partialorder %v3751, 0.0
    %v3758 = vand.u32 %v3751, 2147483648
    %v3759 = vsel %vm3757, %v3758, %v3756
    %v3760 = vrsqrt.pop %v3752
    %v3761 = vmul.f32 %v3752, %v3760
    %vm3762 = vcmp.eq.f32.partialorder %v3752, inf
    %v3763 = vsel %vm3762, %v3752, %v3761
    %vm3764 = vcmp.eq.f32.partialorder %v3752, 0.0
    %v3765 = vand.u32 %v3752, 2147483648
    %v3766 = vsel %vm3764, %v3765, %v3763
    %v3767 = vadd.f32 %v3759, 1e-06
    %v3768 = vadd.f32 %v3766, 1e-06
    %v3769 = vrcp.pop %v3767
    %v3770 = vrcp.pop %v3768
    %v3771 = vsub.f32 %v3725, %v3741
    %v3772 = vsub.f32 %v3726, %v3742
    %v3773 = vmul.f32 %v3771, %v3769
    %v3774 = vmul.f32 %v3772, %v3770
    %3775 = vst.msk [vmem:[#allocation6] sm:$0xff] %vm49, %v3773
    %3776 = vst.msk [vmem:[#allocation6 + $0x8] sm:$0xff] %vm49, %v3774
    // Predicated region
    $region42: #{decoder_forward.1} parent=1 // pred_check
      _
    $region43: #{decoder_forward.1} parent=1 // pred_check_branch
      %3778 = sbr.rel (0) target = $region45
    $region44: #{decoder_forward.1} parent=1 // pred_region
      %s3780 = ssub.s32 256, 256
      %3781 = vsyncadd [#allocation5], %s3780
      %s3782 = sshll.u32 [#allocation6], 4
      %s3783 = int_to_ptr.vmem [resolvable:$true] %s3782
      %3788 = dma.vmem_to_hbm [thread:$0]  %s3783, 256, %s9, [#allocation5], 128, 128, 8
    $region45: #{decoder_forward.1} parent=1 // pred_fallthru
      _
    // Predicated region
    $region46: #{decoder_forward.1} parent=1 // pred_check
      _
    $region47: #{decoder_forward.1} parent=1 // pred_check_branch
      %3790 = sbr.rel (0) target = $region49
    $region48: #{decoder_forward.1} parent=1 // pred_region
      %3791 = dma.done [#allocation5], 256
    $region49: #{decoder_forward.1} parent=1 // pred_fallthru
      _
    %3792 = vsyncpa [#allocation4], 1
    %3793 = vsyncpa [#allocation5], 1

</llo_original>
